<compile_context>
chip_gen: v6e
topology: v6e:2x2x1
jax: 0.10.0
libtpu: 0.0.40
codegen_flags: <defaults>
</compile_context>

<pallas_src>
import jax
import jax.numpy as jnp
from jax.experimental import pallas as pl
from jax.experimental.pallas import tpu as pltpu


def encoder_gru_kernel(tok_ref,    # scalar-prefetch: (T,) int32 token ids (SMEM)
                       emb_ref,    # (V, H)  f32 embedding table (VMEM resident)
                       h0_ref,     # (1, H)  f32 initial hidden
                       wih_ref,    # (H, 3H) bf16 W_ih^T (resident)
                       whh_ref,    # (H, 3H) bf16 W_hh^T (resident)
                       bgi_ref,    # (1, 3H) f32 folded input-proj bias
                       bhn_ref,    # (1, H)  f32 b_hh for the n gate
                       out_ref):   # (T, H)  f32 output rows (resident, 1 writeback)
    T, H = out_ref.shape

    # ---- Phase 1: embedding gather + time-batched input projection -----------
    # Whole table is resident in VMEM; token ids come from SMEM, so each row is a
    # dynamic-index VMEM load (no per-step HBM DMA).
    rows = [emb_ref[pl.ds(tok_ref[t], 1), :] for t in range(T)]
    x_all = jnp.concatenate(rows, axis=0)                       # (T, H) f32
    gi_all = jnp.dot(x_all.astype(jnp.bfloat16), wih_ref[...],
                     preferred_element_type=jnp.float32) + bgi_ref[...]  # (T, 3H) f32

    # ---- Phase 2: serial GRU recurrence (weights + state stay in VMEM) -------
    # T is a static Python int, so this loop is straight-line code (full unroll);
    # for long sequences switch to lax.fori_loop over a VMEM-scratch-held gi_all.
    b_hn = bhn_ref[...]                                          # (1, H) f32
    h = h0_ref[...]                                              # (1, H) f32
    for t in range(T):
        gi = gi_all[t:t + 1, :]                                  # (1, 3H) static slice
        gh = jnp.dot(h.astype(jnp.bfloat16), whh_ref[...],
                     preferred_element_type=jnp.float32)         # (1, 3H) f32
        rz = jax.nn.sigmoid(gi[:, :2 * H] + gh[:, :2 * H])
        r = rz[:, :H]
        z = rz[:, H:]
        n = jnp.tanh(gi[:, 2 * H:] + r * (gh[:, 2 * H:] + b_hn))
        h = (1.0 - z) * n + z * h                                # f32 gate math
        out_ref[t:t + 1, :] = h.astype(out_ref.dtype)            # row of resident block


def encoder_rnn_sequence(token_ids, hidden0, params):
    """Run the encoder GRU over a whole token sequence in ONE pallas_call.

    token_ids: int32 (T,);  hidden0: (1, 1, H) f32.
    Returns (output, hidden_new): output (T, 1, H), hidden_new (1, 1, H).
    Calling with T == 1 reproduces EncoderRNN.forward(input, hidden) exactly.

    Note: variable T retraces/recompiles; for production, pad T to a small set of
    bucket lengths, and prefer this whole-sequence API over per-token calls
    (each pallas_call re-DMAs the weights).
    """
    emb, wih_t, whh_t, bih, bhh = params
    V, H = emb.shape
    T = int(token_ids.shape[0])
    h2d = hidden0.reshape(1, H).astype(jnp.float32)

    # Fold biases once outside the kernel:
    #   r/z gates:  b_ih + b_hh both add directly to gi + gh  -> fold both into gi bias
    #   n gate:     b_in folds into gi; b_hn must stay separate (r * (gh_n + b_hn)).
    b_gi = jnp.concatenate([bih[:, :2 * H] + bhh[:, :2 * H], bih[:, 2 * H:]], axis=1)
    b_hn = bhh[:, 2 * H:]

    # bf16 weights: halves HBM->VMEM bytes / VMEM residency, MXU-native inputs.
    wih_bf = wih_t.astype(jnp.bfloat16)
    whh_bf = whh_t.astype(jnp.bfloat16)

    outputs = pl.pallas_call(
        encoder_gru_kernel,
        out_shape=jax.ShapeDtypeStruct((T, H), jnp.float32),
        grid_spec=pltpu.PrefetchScalarGridSpec(
            num_scalar_prefetch=1,
            grid=(1,),                               # single invocation: loop in-body
            in_specs=[
                pl.BlockSpec((V, H), lambda i, tok: (0, 0)),        # emb table (once)
                pl.BlockSpec((1, H), lambda i, tok: (0, 0)),        # h0
                pl.BlockSpec((H, 3 * H), lambda i, tok: (0, 0)),    # W_ih^T bf16
                pl.BlockSpec((H, 3 * H), lambda i, tok: (0, 0)),    # W_hh^T bf16
                pl.BlockSpec((1, 3 * H), lambda i, tok: (0, 0)),    # folded gi bias
                pl.BlockSpec((1, H), lambda i, tok: (0, 0)),        # b_hn
            ],
            out_specs=pl.BlockSpec((T, H), lambda i, tok: (0, 0)),  # resident output
        ),
        compiler_params=pltpu.CompilerParams(
            dimension_semantics=("arbitrary",),
            vmem_limit_bytes=32 * 1024 * 1024),
    )(token_ids.astype(jnp.int32), emb, h2d, wih_bf, whh_bf, b_gi, b_hn)

    output_seq = outputs.reshape(T, 1, H)
    hidden_new = outputs[T - 1:].reshape(1, 1, H)   # final hidden == last output row
    return output_seq, hidden_new


def encoder_rnn_forward(token_id, hidden, params):
    """Single-step API matching EncoderRNN.forward(input, hidden) with one token.
    Prefer encoder_rnn_sequence for whole sequences: per-token calls pay full
    kernel-entry + weight-DMA cost per step."""
    out_seq, h_new = encoder_rnn_sequence(token_id.reshape(-1), hidden, params)
    return out_seq[:1], h_new


def make_params(key, vocab_size, hidden_size):
    """Synthetic parameters with the same shapes as nn.Embedding(V,H) + nn.GRU(H,H)."""
    k = jax.random.split(key, 5)
    bound = 1.0 / jnp.sqrt(hidden_size)
    emb = jax.random.normal(k[0], (vocab_size, hidden_size), jnp.float32)
    # PyTorch stores weight_ih_l0 as (3H, H); we keep the transposed (H, 3H).
    wih_t = jax.random.uniform(k[1], (hidden_size, 3 * hidden_size),
                               jnp.float32, -bound, bound)
    whh_t = jax.random.uniform(k[2], (hidden_size, 3 * hidden_size),
                               jnp.float32, -bound, bound)
    bih = jax.random.uniform(k[3], (1, 3 * hidden_size), jnp.float32, -bound, bound)
    bhh = jax.random.uniform(k[4], (1, 3 * hidden_size), jnp.float32, -bound, bound)
    return emb, wih_t, whh_t, bih, bhh


def reference_sequence(token_ids, hidden0, params):
    """Pure-JAX f32 reference matching PyTorch nn.GRU run one token at a time."""
    emb, wih_t, whh_t, bih, bhh = params
    H = hidden0.shape[-1]
    h = hidden0.reshape(1, H)
    outs = []
    for t in range(token_ids.shape[0]):
        x = emb[token_ids[t]].reshape(1, H)
        gi = x @ wih_t + bih
        gh = h @ whh_t + bhh
        r = jax.nn.sigmoid(gi[:, :H] + gh[:, :H])
        z = jax.nn.sigmoid(gi[:, H:2 * H] + gh[:, H:2 * H])
        n = jnp.tanh(gi[:, 2 * H:] + r * gh[:, 2 * H:])
        h = (1.0 - z) * n + z * h
        outs.append(h)
    return jnp.stack(outs, axis=0), h.reshape(1, 1, H)


if __name__ == "__main__":
    vocab_size = 16       # small synthetic vocabulary (input_size)
    hidden_size = 256     # matches the PyTorch spec; lane-aligned (2 x 128)
    seq_len = 8

    key = jax.random.PRNGKey(0)
    pkey, tkey = jax.random.split(key)
    params = make_params(pkey, vocab_size, hidden_size)

    token_ids = jax.random.randint(tkey, (seq_len,), 0, vocab_size, dtype=jnp.int32)
    hidden0 = jnp.zeros((1, 1, hidden_size), jnp.float32)    # initHidden()

    # Whole-sequence kernel (weights resident, time loop + recurrence in-kernel).
    out_seq, h_final = encoder_rnn_sequence(token_ids, hidden0, params)
    out_seq = jax.block_until_ready(out_seq)
    h_final = jax.block_until_ready(h_final)

    ref_seq, ref_h = reference_sequence(token_ids, hidden0, params)
    assert out_seq.shape == (seq_len, 1, hidden_size)
    assert h_final.shape == (1, 1, hidden_size)
    # bf16 weights / matmul inputs (f32 accumulation) vs f32 reference: relaxed tol.
    assert jnp.allclose(out_seq, ref_seq, atol=5e-2, rtol=5e-2)
    assert jnp.allclose(h_final, ref_h, atol=5e-2, rtol=5e-2)

    # Single-step API (module-faithful: seq=1, batch=1 per call).
    out1, h1 = encoder_rnn_forward(token_ids[:1], hidden0, params)
    out1 = jax.block_until_ready(out1)
    assert out1.shape == (1, 1, hidden_size) and h1.shape == (1, 1, hidden_size)
    assert jnp.allclose(out1, ref_seq[:1], atol=5e-2, rtol=5e-2)

    print("KERNEL_OK")
</pallas_src>

<mosaic_0001>
module attributes {stable_mosaic.version = 11 : i64} {
  func.func @encoder_gru_kernel(%arg0: i32, %arg1: memref<8xi32, #tpu.memory_space<smem>>, %arg2: memref<16x256xf32, #tpu.memory_space<vmem>>, %arg3: memref<1x256xf32, #tpu.memory_space<vmem>>, %arg4: memref<256x768xbf16, #tpu.memory_space<vmem>>, %arg5: memref<256x768xbf16, #tpu.memory_space<vmem>>, %arg6: memref<1x768xf32, #tpu.memory_space<vmem>>, %arg7: memref<1x256xf32, #tpu.memory_space<vmem>>, %arg8: memref<8x256xf32, #tpu.memory_space<vmem>>) attributes {dimension_semantics = [#tpu.dimension_semantics<arbitrary>], iteration_bounds = array<i64: 1>, scalar_prefetch = 1 : i64, scratch_operands = 0 : i64, tpu.core_type = #tpu.core_type<tc>, window_params = [{pipeline_mode = #tpu.pipeline_mode<synchronous>, transform_indices = @transform_0, window_bounds = array<i64: 16, 256>}, {pipeline_mode = #tpu.pipeline_mode<synchronous>, transform_indices = @transform_1, window_bounds = array<i64: 1, 256>}, {pipeline_mode = #tpu.pipeline_mode<synchronous>, transform_indices = @transform_2, window_bounds = array<i64: 256, 768>}, {pipeline_mode = #tpu.pipeline_mode<synchronous>, transform_indices = @transform_3, window_bounds = array<i64: 256, 768>}, {pipeline_mode = #tpu.pipeline_mode<synchronous>, transform_indices = @transform_4, window_bounds = array<i64: 1, 768>}, {pipeline_mode = #tpu.pipeline_mode<synchronous>, transform_indices = @transform_5, window_bounds = array<i64: 1, 256>}, {pipeline_mode = #tpu.pipeline_mode<synchronous>, transform_indices = @transform_6, window_bounds = array<i64: 8, 256>}]} {
    %c0 = arith.constant 0 : index
    %0 = memref.load %arg1[%c0] : memref<8xi32, #tpu.memory_space<smem>>
    %1 = arith.index_cast %0 : i32 to index
    %c0_0 = arith.constant 0 : index
    %2 = vector.load %arg2[%1, %c0_0] : memref<16x256xf32, #tpu.memory_space<vmem>>, vector<1x256xf32>
    %c1 = arith.constant 1 : index
    %3 = memref.load %arg1[%c1] : memref<8xi32, #tpu.memory_space<smem>>
    %4 = arith.index_cast %3 : i32 to index
    %c0_1 = arith.constant 0 : index
    %5 = vector.load %arg2[%4, %c0_1] : memref<16x256xf32, #tpu.memory_space<vmem>>, vector<1x256xf32>
    %c2 = arith.constant 2 : index
    %6 = memref.load %arg1[%c2] : memref<8xi32, #tpu.memory_space<smem>>
    %7 = arith.index_cast %6 : i32 to index
    %c0_2 = arith.constant 0 : index
    %8 = vector.load %arg2[%7, %c0_2] : memref<16x256xf32, #tpu.memory_space<vmem>>, vector<1x256xf32>
    %c3 = arith.constant 3 : index
    %9 = memref.load %arg1[%c3] : memref<8xi32, #tpu.memory_space<smem>>
    %10 = arith.index_cast %9 : i32 to index
    %c0_3 = arith.constant 0 : index
    %11 = vector.load %arg2[%10, %c0_3] : memref<16x256xf32, #tpu.memory_space<vmem>>, vector<1x256xf32>
    %c4 = arith.constant 4 : index
    %12 = memref.load %arg1[%c4] : memref<8xi32, #tpu.memory_space<smem>>
    %13 = arith.index_cast %12 : i32 to index
    %c0_4 = arith.constant 0 : index
    %14 = vector.load %arg2[%13, %c0_4] : memref<16x256xf32, #tpu.memory_space<vmem>>, vector<1x256xf32>
    %c5 = arith.constant 5 : index
    %15 = memref.load %arg1[%c5] : memref<8xi32, #tpu.memory_space<smem>>
    %16 = arith.index_cast %15 : i32 to index
    %c0_5 = arith.constant 0 : index
    %17 = vector.load %arg2[%16, %c0_5] : memref<16x256xf32, #tpu.memory_space<vmem>>, vector<1x256xf32>
    %c6 = arith.constant 6 : index
    %18 = memref.load %arg1[%c6] : memref<8xi32, #tpu.memory_space<smem>>
    %19 = arith.index_cast %18 : i32 to index
    %c0_6 = arith.constant 0 : index
    %20 = vector.load %arg2[%19, %c0_6] : memref<16x256xf32, #tpu.memory_space<vmem>>, vector<1x256xf32>
    %c7 = arith.constant 7 : index
    %21 = memref.load %arg1[%c7] : memref<8xi32, #tpu.memory_space<smem>>
    %22 = arith.index_cast %21 : i32 to index
    %c0_7 = arith.constant 0 : index
    %23 = vector.load %arg2[%22, %c0_7] : memref<16x256xf32, #tpu.memory_space<vmem>>, vector<1x256xf32>
    %24 = tpu.concatenate %2, %5, %8, %11, %14, %17, %20, %23 in 0 : vector<1x256xf32>, vector<1x256xf32>, vector<1x256xf32>, vector<1x256xf32>, vector<1x256xf32>, vector<1x256xf32>, vector<1x256xf32>, vector<1x256xf32> -> vector<8x256xf32>
    %25 = arith.truncf %24 : vector<8x256xf32> to vector<8x256xbf16>
    %c0_8 = arith.constant 0 : index
    %c0_9 = arith.constant 0 : index
    %26 = vector.load %arg4[%c0_8, %c0_9] : memref<256x768xbf16, #tpu.memory_space<vmem>>, vector<256x768xbf16>
    %cst = arith.constant dense<0.000000e+00> : vector<8x768xf32>
    %27 = tpu.matmul %25, %26, %cst {dimension_numbers = #tpu.dot_dimension_numbers<[1], [0], [0], [1], [0, 0, 1, 1], [], []>} : vector<8x256xbf16>, vector<256x768xbf16>, vector<8x768xf32> -> vector<8x768xf32>
    %c0_10 = arith.constant 0 : index
    %c0_11 = arith.constant 0 : index
    %28 = vector.load %arg6[%c0_10, %c0_11] : memref<1x768xf32, #tpu.memory_space<vmem>>, vector<1x768xf32>
    %29 = vector.broadcast %28 : vector<1x768xf32> to vector<8x768xf32>
    %30 = arith.addf %27, %29 : vector<8x768xf32>
    %c0_12 = arith.constant 0 : index
    %c0_13 = arith.constant 0 : index
    %31 = vector.load %arg7[%c0_12, %c0_13] : memref<1x256xf32, #tpu.memory_space<vmem>>, vector<1x256xf32>
    %c0_14 = arith.constant 0 : index
    %c0_15 = arith.constant 0 : index
    %32 = vector.load %arg3[%c0_14, %c0_15] : memref<1x256xf32, #tpu.memory_space<vmem>>, vector<1x256xf32>
    %33 = vector.extract_strided_slice %30 {offsets = [0, 0], sizes = [1, 768], strides = [1, 1]} : vector<8x768xf32> to vector<1x768xf32>
    %34 = arith.truncf %32 : vector<1x256xf32> to vector<1x256xbf16>
    %c0_16 = arith.constant 0 : index
    %c0_17 = arith.constant 0 : index
    %35 = vector.load %arg5[%c0_16, %c0_17] : memref<256x768xbf16, #tpu.memory_space<vmem>>, vector<256x768xbf16>
    %cst_18 = arith.constant dense<0.000000e+00> : vector<1x768xf32>
    %36 = tpu.matmul %34, %35, %cst_18 {dimension_numbers = #tpu.dot_dimension_numbers<[1], [0], [0], [1], [0, 0, 1, 1], [], []>} : vector<1x256xbf16>, vector<256x768xbf16>, vector<1x768xf32> -> vector<1x768xf32>
    %37 = vector.extract_strided_slice %33 {offsets = [0, 0], sizes = [1, 512], strides = [1, 1]} : vector<1x768xf32> to vector<1x512xf32>
    %38 = vector.extract_strided_slice %36 {offsets = [0, 0], sizes = [1, 512], strides = [1, 1]} : vector<1x768xf32> to vector<1x512xf32>
    %39 = arith.addf %37, %38 : vector<1x512xf32>
    %40 = arith.negf %39 : vector<1x512xf32>
    %41 = math.exp %40 : vector<1x512xf32>
    %cst_19 = arith.constant 1.000000e+00 : f32
    %42 = vector.broadcast %cst_19 : f32 to vector<1x512xf32>
    %43 = arith.addf %42, %41 : vector<1x512xf32>
    %44 = arith.divf %42, %43 : vector<1x512xf32>
    %45 = vector.extract_strided_slice %44 {offsets = [0, 0], sizes = [1, 256], strides = [1, 1]} : vector<1x512xf32> to vector<1x256xf32>
    %46 = vector.extract_strided_slice %44 {offsets = [0, 256], sizes = [1, 256], strides = [1, 1]} : vector<1x512xf32> to vector<1x256xf32>
    %47 = vector.extract_strided_slice %33 {offsets = [0, 512], sizes = [1, 256], strides = [1, 1]} : vector<1x768xf32> to vector<1x256xf32>
    %48 = vector.extract_strided_slice %36 {offsets = [0, 512], sizes = [1, 256], strides = [1, 1]} : vector<1x768xf32> to vector<1x256xf32>
    %49 = arith.addf %48, %31 : vector<1x256xf32>
    %50 = arith.mulf %45, %49 : vector<1x256xf32>
    %51 = arith.addf %47, %50 : vector<1x256xf32>
    %52 = math.tanh %51 : vector<1x256xf32>
    %cst_20 = arith.constant 1.000000e+00 : f32
    %53 = vector.broadcast %cst_20 : f32 to vector<1x256xf32>
    %54 = arith.subf %53, %46 : vector<1x256xf32>
    %55 = arith.mulf %54, %52 : vector<1x256xf32>
    %56 = arith.mulf %46, %32 : vector<1x256xf32>
    %57 = arith.addf %55, %56 : vector<1x256xf32>
    %c0_21 = arith.constant 0 : index
    %c0_22 = arith.constant 0 : index
    %58 = vector.load %arg8[%c0_21, %c0_22] : memref<8x256xf32, #tpu.memory_space<vmem>>, vector<1x256xf32>
    tpu.vector_store %arg8[%c0_21, %c0_22], %57 {strides = array<i32>} : memref<8x256xf32, #tpu.memory_space<vmem>>, vector<1x256xf32>,
    %59 = vector.extract_strided_slice %30 {offsets = [1, 0], sizes = [1, 768], strides = [1, 1]} : vector<8x768xf32> to vector<1x768xf32>
    %60 = arith.truncf %57 : vector<1x256xf32> to vector<1x256xbf16>
    %c0_23 = arith.constant 0 : index
    %c0_24 = arith.constant 0 : index
    %61 = vector.load %arg5[%c0_23, %c0_24] : memref<256x768xbf16, #tpu.memory_space<vmem>>, vector<256x768xbf16>
    %cst_25 = arith.constant dense<0.000000e+00> : vector<1x768xf32>
    %62 = tpu.matmul %60, %61, %cst_25 {dimension_numbers = #tpu.dot_dimension_numbers<[1], [0], [0], [1], [0, 0, 1, 1], [], []>} : vector<1x256xbf16>, vector<256x768xbf16>, vector<1x768xf32> -> vector<1x768xf32>
    %63 = vector.extract_strided_slice %59 {offsets = [0, 0], sizes = [1, 512], strides = [1, 1]} : vector<1x768xf32> to vector<1x512xf32>
    %64 = vector.extract_strided_slice %62 {offsets = [0, 0], sizes = [1, 512], strides = [1, 1]} : vector<1x768xf32> to vector<1x512xf32>
    %65 = arith.addf %63, %64 : vector<1x512xf32>
    %66 = arith.negf %65 : vector<1x512xf32>
    %67 = math.exp %66 : vector<1x512xf32>
    %cst_26 = arith.constant 1.000000e+00 : f32
    %68 = vector.broadcast %cst_26 : f32 to vector<1x512xf32>
    %69 = arith.addf %68, %67 : vector<1x512xf32>
    %70 = arith.divf %68, %69 : vector<1x512xf32>
    %71 = vector.extract_strided_slice %70 {offsets = [0, 0], sizes = [1, 256], strides = [1, 1]} : vector<1x512xf32> to vector<1x256xf32>
    %72 = vector.extract_strided_slice %70 {offsets = [0, 256], sizes = [1, 256], strides = [1, 1]} : vector<1x512xf32> to vector<1x256xf32>
    %73 = vector.extract_strided_slice %59 {offsets = [0, 512], sizes = [1, 256], strides = [1, 1]} : vector<1x768xf32> to vector<1x256xf32>
    %74 = vector.extract_strided_slice %62 {offsets = [0, 512], sizes = [1, 256], strides = [1, 1]} : vector<1x768xf32> to vector<1x256xf32>
    %75 = arith.addf %74, %31 : vector<1x256xf32>
    %76 = arith.mulf %71, %75 : vector<1x256xf32>
    %77 = arith.addf %73, %76 : vector<1x256xf32>
    %78 = math.tanh %77 : vector<1x256xf32>
    %cst_27 = arith.constant 1.000000e+00 : f32
    %79 = vector.broadcast %cst_27 : f32 to vector<1x256xf32>
    %80 = arith.subf %79, %72 : vector<1x256xf32>
    %81 = arith.mulf %80, %78 : vector<1x256xf32>
    %82 = arith.mulf %72, %57 : vector<1x256xf32>
    %83 = arith.addf %81, %82 : vector<1x256xf32>
    %c1_28 = arith.constant 1 : index
    %c0_29 = arith.constant 0 : index
    %84 = vector.load %arg8[%c1_28, %c0_29] : memref<8x256xf32, #tpu.memory_space<vmem>>, vector<1x256xf32>
    tpu.vector_store %arg8[%c1_28, %c0_29], %83 {strides = array<i32>} : memref<8x256xf32, #tpu.memory_space<vmem>>, vector<1x256xf32>,
    %85 = vector.extract_strided_slice %30 {offsets = [2, 0], sizes = [1, 768], strides = [1, 1]} : vector<8x768xf32> to vector<1x768xf32>
    %86 = arith.truncf %83 : vector<1x256xf32> to vector<1x256xbf16>
    %c0_30 = arith.constant 0 : index
    %c0_31 = arith.constant 0 : index
    %87 = vector.load %arg5[%c0_30, %c0_31] : memref<256x768xbf16, #tpu.memory_space<vmem>>, vector<256x768xbf16>
    %cst_32 = arith.constant dense<0.000000e+00> : vector<1x768xf32>
    %88 = tpu.matmul %86, %87, %cst_32 {dimension_numbers = #tpu.dot_dimension_numbers<[1], [0], [0], [1], [0, 0, 1, 1], [], []>} : vector<1x256xbf16>, vector<256x768xbf16>, vector<1x768xf32> -> vector<1x768xf32>
    %89 = vector.extract_strided_slice %85 {offsets = [0, 0], sizes = [1, 512], strides = [1, 1]} : vector<1x768xf32> to vector<1x512xf32>
    %90 = vector.extract_strided_slice %88 {offsets = [0, 0], sizes = [1, 512], strides = [1, 1]} : vector<1x768xf32> to vector<1x512xf32>
    %91 = arith.addf %89, %90 : vector<1x512xf32>
    %92 = arith.negf %91 : vector<1x512xf32>
    %93 = math.exp %92 : vector<1x512xf32>
    %cst_33 = arith.constant 1.000000e+00 : f32
    %94 = vector.broadcast %cst_33 : f32 to vector<1x512xf32>
    %95 = arith.addf %94, %93 : vector<1x512xf32>
    %96 = arith.divf %94, %95 : vector<1x512xf32>
    %97 = vector.extract_strided_slice %96 {offsets = [0, 0], sizes = [1, 256], strides = [1, 1]} : vector<1x512xf32> to vector<1x256xf32>
    %98 = vector.extract_strided_slice %96 {offsets = [0, 256], sizes = [1, 256], strides = [1, 1]} : vector<1x512xf32> to vector<1x256xf32>
    %99 = vector.extract_strided_slice %85 {offsets = [0, 512], sizes = [1, 256], strides = [1, 1]} : vector<1x768xf32> to vector<1x256xf32>
    %100 = vector.extract_strided_slice %88 {offsets = [0, 512], sizes = [1, 256], strides = [1, 1]} : vector<1x768xf32> to vector<1x256xf32>
    %101 = arith.addf %100, %31 : vector<1x256xf32>
    %102 = arith.mulf %97, %101 : vector<1x256xf32>
    %103 = arith.addf %99, %102 : vector<1x256xf32>
    %104 = math.tanh %103 : vector<1x256xf32>
    %cst_34 = arith.constant 1.000000e+00 : f32
    %105 = vector.broadcast %cst_34 : f32 to vector<1x256xf32>
    %106 = arith.subf %105, %98 : vector<1x256xf32>
    %107 = arith.mulf %106, %104 : vector<1x256xf32>
    %108 = arith.mulf %98, %83 : vector<1x256xf32>
    %109 = arith.addf %107, %108 : vector<1x256xf32>
    %c2_35 = arith.constant 2 : index
    %c0_36 = arith.constant 0 : index
    %110 = vector.load %arg8[%c2_35, %c0_36] : memref<8x256xf32, #tpu.memory_space<vmem>>, vector<1x256xf32>
    tpu.vector_store %arg8[%c2_35, %c0_36], %109 {strides = array<i32>} : memref<8x256xf32, #tpu.memory_space<vmem>>, vector<1x256xf32>,
    %111 = vector.extract_strided_slice %30 {offsets = [3, 0], sizes = [1, 768], strides = [1, 1]} : vector<8x768xf32> to vector<1x768xf32>
    %112 = arith.truncf %109 : vector<1x256xf32> to vector<1x256xbf16>
    %c0_37 = arith.constant 0 : index
    %c0_38 = arith.constant 0 : index
    %113 = vector.load %arg5[%c0_37, %c0_38] : memref<256x768xbf16, #tpu.memory_space<vmem>>, vector<256x768xbf16>
    %cst_39 = arith.constant dense<0.000000e+00> : vector<1x768xf32>
    %114 = tpu.matmul %112, %113, %cst_39 {dimension_numbers = #tpu.dot_dimension_numbers<[1], [0], [0], [1], [0, 0, 1, 1], [], []>} : vector<1x256xbf16>, vector<256x768xbf16>, vector<1x768xf32> -> vector<1x768xf32>
    %115 = vector.extract_strided_slice %111 {offsets = [0, 0], sizes = [1, 512], strides = [1, 1]} : vector<1x768xf32> to vector<1x512xf32>
    %116 = vector.extract_strided_slice %114 {offsets = [0, 0], sizes = [1, 512], strides = [1, 1]} : vector<1x768xf32> to vector<1x512xf32>
    %117 = arith.addf %115, %116 : vector<1x512xf32>
    %118 = arith.negf %117 : vector<1x512xf32>
    %119 = math.exp %118 : vector<1x512xf32>
    %cst_40 = arith.constant 1.000000e+00 : f32
    %120 = vector.broadcast %cst_40 : f32 to vector<1x512xf32>
    %121 = arith.addf %120, %119 : vector<1x512xf32>
    %122 = arith.divf %120, %121 : vector<1x512xf32>
    %123 = vector.extract_strided_slice %122 {offsets = [0, 0], sizes = [1, 256], strides = [1, 1]} : vector<1x512xf32> to vector<1x256xf32>
    %124 = vector.extract_strided_slice %122 {offsets = [0, 256], sizes = [1, 256], strides = [1, 1]} : vector<1x512xf32> to vector<1x256xf32>
    %125 = vector.extract_strided_slice %111 {offsets = [0, 512], sizes = [1, 256], strides = [1, 1]} : vector<1x768xf32> to vector<1x256xf32>
    %126 = vector.extract_strided_slice %114 {offsets = [0, 512], sizes = [1, 256], strides = [1, 1]} : vector<1x768xf32> to vector<1x256xf32>
    %127 = arith.addf %126, %31 : vector<1x256xf32>
    %128 = arith.mulf %123, %127 : vector<1x256xf32>
    %129 = arith.addf %125, %128 : vector<1x256xf32>
    %130 = math.tanh %129 : vector<1x256xf32>
    %cst_41 = arith.constant 1.000000e+00 : f32
    %131 = vector.broadcast %cst_41 : f32 to vector<1x256xf32>
    %132 = arith.subf %131, %124 : vector<1x256xf32>
    %133 = arith.mulf %132, %130 : vector<1x256xf32>
    %134 = arith.mulf %124, %109 : vector<1x256xf32>
    %135 = arith.addf %133, %134 : vector<1x256xf32>
    %c3_42 = arith.constant 3 : index
    %c0_43 = arith.constant 0 : index
    %136 = vector.load %arg8[%c3_42, %c0_43] : memref<8x256xf32, #tpu.memory_space<vmem>>, vector<1x256xf32>
    tpu.vector_store %arg8[%c3_42, %c0_43], %135 {strides = array<i32>} : memref<8x256xf32, #tpu.memory_space<vmem>>, vector<1x256xf32>,
    %137 = vector.extract_strided_slice %30 {offsets = [4, 0], sizes = [1, 768], strides = [1, 1]} : vector<8x768xf32> to vector<1x768xf32>
    %138 = arith.truncf %135 : vector<1x256xf32> to vector<1x256xbf16>
    %c0_44 = arith.constant 0 : index
    %c0_45 = arith.constant 0 : index
    %139 = vector.load %arg5[%c0_44, %c0_45] : memref<256x768xbf16, #tpu.memory_space<vmem>>, vector<256x768xbf16>
    %cst_46 = arith.constant dense<0.000000e+00> : vector<1x768xf32>
    %140 = tpu.matmul %138, %139, %cst_46 {dimension_numbers = #tpu.dot_dimension_numbers<[1], [0], [0], [1], [0, 0, 1, 1], [], []>} : vector<1x256xbf16>, vector<256x768xbf16>, vector<1x768xf32> -> vector<1x768xf32>
    %141 = vector.extract_strided_slice %137 {offsets = [0, 0], sizes = [1, 512], strides = [1, 1]} : vector<1x768xf32> to vector<1x512xf32>
    %142 = vector.extract_strided_slice %140 {offsets = [0, 0], sizes = [1, 512], strides = [1, 1]} : vector<1x768xf32> to vector<1x512xf32>
    %143 = arith.addf %141, %142 : vector<1x512xf32>
    %144 = arith.negf %143 : vector<1x512xf32>
    %145 = math.exp %144 : vector<1x512xf32>
    %cst_47 = arith.constant 1.000000e+00 : f32
    %146 = vector.broadcast %cst_47 : f32 to vector<1x512xf32>
    %147 = arith.addf %146, %145 : vector<1x512xf32>
    %148 = arith.divf %146, %147 : vector<1x512xf32>
    %149 = vector.extract_strided_slice %148 {offsets = [0, 0], sizes = [1, 256], strides = [1, 1]} : vector<1x512xf32> to vector<1x256xf32>
    %150 = vector.extract_strided_slice %148 {offsets = [0, 256], sizes = [1, 256], strides = [1, 1]} : vector<1x512xf32> to vector<1x256xf32>
    %151 = vector.extract_strided_slice %137 {offsets = [0, 512], sizes = [1, 256], strides = [1, 1]} : vector<1x768xf32> to vector<1x256xf32>
    %152 = vector.extract_strided_slice %140 {offsets = [0, 512], sizes = [1, 256], strides = [1, 1]} : vector<1x768xf32> to vector<1x256xf32>
    %153 = arith.addf %152, %31 : vector<1x256xf32>
    %154 = arith.mulf %149, %153 : vector<1x256xf32>
    %155 = arith.addf %151, %154 : vector<1x256xf32>
    %156 = math.tanh %155 : vector<1x256xf32>
    %cst_48 = arith.constant 1.000000e+00 : f32
    %157 = vector.broadcast %cst_48 : f32 to vector<1x256xf32>
    %158 = arith.subf %157, %150 : vector<1x256xf32>
    %159 = arith.mulf %158, %156 : vector<1x256xf32>
    %160 = arith.mulf %150, %135 : vector<1x256xf32>
    %161 = arith.addf %159, %160 : vector<1x256xf32>
    %c4_49 = arith.constant 4 : index
    %c0_50 = arith.constant 0 : index
    %162 = vector.load %arg8[%c4_49, %c0_50] : memref<8x256xf32, #tpu.memory_space<vmem>>, vector<1x256xf32>
    tpu.vector_store %arg8[%c4_49, %c0_50], %161 {strides = array<i32>} : memref<8x256xf32, #tpu.memory_space<vmem>>, vector<1x256xf32>,
    %163 = vector.extract_strided_slice %30 {offsets = [5, 0], sizes = [1, 768], strides = [1, 1]} : vector<8x768xf32> to vector<1x768xf32>
    %164 = arith.truncf %161 : vector<1x256xf32> to vector<1x256xbf16>
    %c0_51 = arith.constant 0 : index
    %c0_52 = arith.constant 0 : index
    %165 = vector.load %arg5[%c0_51, %c0_52] : memref<256x768xbf16, #tpu.memory_space<vmem>>, vector<256x768xbf16>
    %cst_53 = arith.constant dense<0.000000e+00> : vector<1x768xf32>
    %166 = tpu.matmul %164, %165, %cst_53 {dimension_numbers = #tpu.dot_dimension_numbers<[1], [0], [0], [1], [0, 0, 1, 1], [], []>} : vector<1x256xbf16>, vector<256x768xbf16>, vector<1x768xf32> -> vector<1x768xf32>
    %167 = vector.extract_strided_slice %163 {offsets = [0, 0], sizes = [1, 512], strides = [1, 1]} : vector<1x768xf32> to vector<1x512xf32>
    %168 = vector.extract_strided_slice %166 {offsets = [0, 0], sizes = [1, 512], strides = [1, 1]} : vector<1x768xf32> to vector<1x512xf32>
    %169 = arith.addf %167, %168 : vector<1x512xf32>
    %170 = arith.negf %169 : vector<1x512xf32>
    %171 = math.exp %170 : vector<1x512xf32>
    %cst_54 = arith.constant 1.000000e+00 : f32
    %172 = vector.broadcast %cst_54 : f32 to vector<1x512xf32>
    %173 = arith.addf %172, %171 : vector<1x512xf32>
    %174 = arith.divf %172, %173 : vector<1x512xf32>
    %175 = vector.extract_strided_slice %174 {offsets = [0, 0], sizes = [1, 256], strides = [1, 1]} : vector<1x512xf32> to vector<1x256xf32>
    %176 = vector.extract_strided_slice %174 {offsets = [0, 256], sizes = [1, 256], strides = [1, 1]} : vector<1x512xf32> to vector<1x256xf32>
    %177 = vector.extract_strided_slice %163 {offsets = [0, 512], sizes = [1, 256], strides = [1, 1]} : vector<1x768xf32> to vector<1x256xf32>
    %178 = vector.extract_strided_slice %166 {offsets = [0, 512], sizes = [1, 256], strides = [1, 1]} : vector<1x768xf32> to vector<1x256xf32>
    %179 = arith.addf %178, %31 : vector<1x256xf32>
    %180 = arith.mulf %175, %179 : vector<1x256xf32>
    %181 = arith.addf %177, %180 : vector<1x256xf32>
    %182 = math.tanh %181 : vector<1x256xf32>
    %cst_55 = arith.constant 1.000000e+00 : f32
    %183 = vector.broadcast %cst_55 : f32 to vector<1x256xf32>
    %184 = arith.subf %183, %176 : vector<1x256xf32>
    %185 = arith.mulf %184, %182 : vector<1x256xf32>
    %186 = arith.mulf %176, %161 : vector<1x256xf32>
    %187 = arith.addf %185, %186 : vector<1x256xf32>
    %c5_56 = arith.constant 5 : index
    %c0_57 = arith.constant 0 : index
    %188 = vector.load %arg8[%c5_56, %c0_57] : memref<8x256xf32, #tpu.memory_space<vmem>>, vector<1x256xf32>
    tpu.vector_store %arg8[%c5_56, %c0_57], %187 {strides = array<i32>} : memref<8x256xf32, #tpu.memory_space<vmem>>, vector<1x256xf32>,
    %189 = vector.extract_strided_slice %30 {offsets = [6, 0], sizes = [1, 768], strides = [1, 1]} : vector<8x768xf32> to vector<1x768xf32>
    %190 = arith.truncf %187 : vector<1x256xf32> to vector<1x256xbf16>
    %c0_58 = arith.constant 0 : index
    %c0_59 = arith.constant 0 : index
    %191 = vector.load %arg5[%c0_58, %c0_59] : memref<256x768xbf16, #tpu.memory_space<vmem>>, vector<256x768xbf16>
    %cst_60 = arith.constant dense<0.000000e+00> : vector<1x768xf32>
    %192 = tpu.matmul %190, %191, %cst_60 {dimension_numbers = #tpu.dot_dimension_numbers<[1], [0], [0], [1], [0, 0, 1, 1], [], []>} : vector<1x256xbf16>, vector<256x768xbf16>, vector<1x768xf32> -> vector<1x768xf32>
    %193 = vector.extract_strided_slice %189 {offsets = [0, 0], sizes = [1, 512], strides = [1, 1]} : vector<1x768xf32> to vector<1x512xf32>
    %194 = vector.extract_strided_slice %192 {offsets = [0, 0], sizes = [1, 512], strides = [1, 1]} : vector<1x768xf32> to vector<1x512xf32>
    %195 = arith.addf %193, %194 : vector<1x512xf32>
    %196 = arith.negf %195 : vector<1x512xf32>
    %197 = math.exp %196 : vector<1x512xf32>
    %cst_61 = arith.constant 1.000000e+00 : f32
    %198 = vector.broadcast %cst_61 : f32 to vector<1x512xf32>
    %199 = arith.addf %198, %197 : vector<1x512xf32>
    %200 = arith.divf %198, %199 : vector<1x512xf32>
    %201 = vector.extract_strided_slice %200 {offsets = [0, 0], sizes = [1, 256], strides = [1, 1]} : vector<1x512xf32> to vector<1x256xf32>
    %202 = vector.extract_strided_slice %200 {offsets = [0, 256], sizes = [1, 256], strides = [1, 1]} : vector<1x512xf32> to vector<1x256xf32>
    %203 = vector.extract_strided_slice %189 {offsets = [0, 512], sizes = [1, 256], strides = [1, 1]} : vector<1x768xf32> to vector<1x256xf32>
    %204 = vector.extract_strided_slice %192 {offsets = [0, 512], sizes = [1, 256], strides = [1, 1]} : vector<1x768xf32> to vector<1x256xf32>
    %205 = arith.addf %204, %31 : vector<1x256xf32>
    %206 = arith.mulf %201, %205 : vector<1x256xf32>
    %207 = arith.addf %203, %206 : vector<1x256xf32>
    %208 = math.tanh %207 : vector<1x256xf32>
    %cst_62 = arith.constant 1.000000e+00 : f32
    %209 = vector.broadcast %cst_62 : f32 to vector<1x256xf32>
    %210 = arith.subf %209, %202 : vector<1x256xf32>
    %211 = arith.mulf %210, %208 : vector<1x256xf32>
    %212 = arith.mulf %202, %187 : vector<1x256xf32>
    %213 = arith.addf %211, %212 : vector<1x256xf32>
    %c6_63 = arith.constant 6 : index
    %c0_64 = arith.constant 0 : index
    %214 = vector.load %arg8[%c6_63, %c0_64] : memref<8x256xf32, #tpu.memory_space<vmem>>, vector<1x256xf32>
    tpu.vector_store %arg8[%c6_63, %c0_64], %213 {strides = array<i32>} : memref<8x256xf32, #tpu.memory_space<vmem>>, vector<1x256xf32>,
    %215 = vector.extract_strided_slice %30 {offsets = [7, 0], sizes = [1, 768], strides = [1, 1]} : vector<8x768xf32> to vector<1x768xf32>
    %216 = arith.truncf %213 : vector<1x256xf32> to vector<1x256xbf16>
    %c0_65 = arith.constant 0 : index
    %c0_66 = arith.constant 0 : index
    %217 = vector.load %arg5[%c0_65, %c0_66] : memref<256x768xbf16, #tpu.memory_space<vmem>>, vector<256x768xbf16>
    %cst_67 = arith.constant dense<0.000000e+00> : vector<1x768xf32>
    %218 = tpu.matmul %216, %217, %cst_67 {dimension_numbers = #tpu.dot_dimension_numbers<[1], [0], [0], [1], [0, 0, 1, 1], [], []>} : vector<1x256xbf16>, vector<256x768xbf16>, vector<1x768xf32> -> vector<1x768xf32>
    %219 = vector.extract_strided_slice %215 {offsets = [0, 0], sizes = [1, 512], strides = [1, 1]} : vector<1x768xf32> to vector<1x512xf32>
    %220 = vector.extract_strided_slice %218 {offsets = [0, 0], sizes = [1, 512], strides = [1, 1]} : vector<1x768xf32> to vector<1x512xf32>
    %221 = arith.addf %219, %220 : vector<1x512xf32>
    %222 = arith.negf %221 : vector<1x512xf32>
    %223 = math.exp %222 : vector<1x512xf32>
    %cst_68 = arith.constant 1.000000e+00 : f32
    %224 = vector.broadcast %cst_68 : f32 to vector<1x512xf32>
    %225 = arith.addf %224, %223 : vector<1x512xf32>
    %226 = arith.divf %224, %225 : vector<1x512xf32>
    %227 = vector.extract_strided_slice %226 {offsets = [0, 0], sizes = [1, 256], strides = [1, 1]} : vector<1x512xf32> to vector<1x256xf32>
    %228 = vector.extract_strided_slice %226 {offsets = [0, 256], sizes = [1, 256], strides = [1, 1]} : vector<1x512xf32> to vector<1x256xf32>
    %229 = vector.extract_strided_slice %215 {offsets = [0, 512], sizes = [1, 256], strides = [1, 1]} : vector<1x768xf32> to vector<1x256xf32>
    %230 = vector.extract_strided_slice %218 {offsets = [0, 512], sizes = [1, 256], strides = [1, 1]} : vector<1x768xf32> to vector<1x256xf32>
    %231 = arith.addf %230, %31 : vector<1x256xf32>
    %232 = arith.mulf %227, %231 : vector<1x256xf32>
    %233 = arith.addf %229, %232 : vector<1x256xf32>
    %234 = math.tanh %233 : vector<1x256xf32>
    %cst_69 = arith.constant 1.000000e+00 : f32
    %235 = vector.broadcast %cst_69 : f32 to vector<1x256xf32>
    %236 = arith.subf %235, %228 : vector<1x256xf32>
    %237 = arith.mulf %236, %234 : vector<1x256xf32>
    %238 = arith.mulf %228, %213 : vector<1x256xf32>
    %239 = arith.addf %237, %238 : vector<1x256xf32>
    %c7_70 = arith.constant 7 : index
    %c0_71 = arith.constant 0 : index
    %240 = vector.load %arg8[%c7_70, %c0_71] : memref<8x256xf32, #tpu.memory_space<vmem>>, vector<1x256xf32>
    tpu.vector_store %arg8[%c7_70, %c0_71], %239 {strides = array<i32>} : memref<8x256xf32, #tpu.memory_space<vmem>>, vector<1x256xf32>,
    return
  }
  func.func @transform_0(%arg0: i32, %arg1: memref<8xi32, #tpu.memory_space<smem>>) -> (i32, i32) {
    %c0_i32 = arith.constant 0 : i32
    %c0_i32_0 = arith.constant 0 : i32
    %c0_i32_1 = arith.constant 0 : i32
    return %c0_i32, %c0_i32_0 : i32, i32
  }
  func.func @transform_1(%arg0: i32, %arg1: memref<8xi32, #tpu.memory_space<smem>>) -> (i32, i32) {
    %c0_i32 = arith.constant 0 : i32
    %c0_i32_0 = arith.constant 0 : i32
    %c0_i32_1 = arith.constant 0 : i32
    return %c0_i32, %c0_i32_0 : i32, i32
  }
  func.func @transform_2(%arg0: i32, %arg1: memref<8xi32, #tpu.memory_space<smem>>) -> (i32, i32) {
    %c0_i32 = arith.constant 0 : i32
    %c0_i32_0 = arith.constant 0 : i32
    %c0_i32_1 = arith.constant 0 : i32
    return %c0_i32, %c0_i32_0 : i32, i32
  }
  func.func @transform_3(%arg0: i32, %arg1: memref<8xi32, #tpu.memory_space<smem>>) -> (i32, i32) {
    %c0_i32 = arith.constant 0 : i32
    %c0_i32_0 = arith.constant 0 : i32
    %c0_i32_1 = arith.constant 0 : i32
    return %c0_i32, %c0_i32_0 : i32, i32
  }
  func.func @transform_4(%arg0: i32, %arg1: memref<8xi32, #tpu.memory_space<smem>>) -> (i32, i32) {
    %c0_i32 = arith.constant 0 : i32
    %c0_i32_0 = arith.constant 0 : i32
    %c0_i32_1 = arith.constant 0 : i32
    return %c0_i32, %c0_i32_0 : i32, i32
  }
  func.func @transform_5(%arg0: i32, %arg1: memref<8xi32, #tpu.memory_space<smem>>) -> (i32, i32) {
    %c0_i32 = arith.constant 0 : i32
    %c0_i32_0 = arith.constant 0 : i32
    %c0_i32_1 = arith.constant 0 : i32
    return %c0_i32, %c0_i32_0 : i32, i32
  }
  func.func @transform_6(%arg0: i32, %arg1: memref<8xi32, #tpu.memory_space<smem>>) -> (i32, i32) {
    %c0_i32 = arith.constant 0 : i32
    %c0_i32_0 = arith.constant 0 : i32
    %c0_i32_1 = arith.constant 0 : i32
    return %c0_i32, %c0_i32_0 : i32, i32
  }
}

</mosaic_0001>

<llo_original>
// kernel: tpu_custom_call.1
$region0: #{tpu_custom_call.1}
  #allocation0 [shape = 'u32[]', space=smem, size = 0x4, offset = 0x4, fixed_abs, tag = 'smem constant byte address 0x4 - core index']
  #allocation1 [shape = 'u32[144,128]{1,0:T(1,128)}', space=vmem, size = 0x12000, scoped, tag = 'internal scratch']
  #allocation2 [shape = 's32[1]{0}', space=sflag, size = 0x4, scoped, tag = 'scoped memory for tpu_custom_call.1']
  #allocation3 [shape = 'u8[512]{0}', space=smem, size = 0x200, scoped, tag = 'prefetched SMEM operand 0']
  %s0 = inlined_call_operand.hbm [shape: s32[8], index: 0, kind: input, shape index: {}]
  %s1 = inlined_call_operand.hbm [shape: f32[16,256], index: 1, kind: input, shape index: {}]
  %s2 = inlined_call_operand.vmem [shape: f32[1,256], index: 2, kind: input, shape index: {}]
  %s3 = inlined_call_operand.hbm [shape: bf16[256,768], index: 3, kind: input, shape index: {}]
  %s4 = inlined_call_operand.hbm [shape: bf16[256,768], index: 4, kind: input, shape index: {}]
  %s5 = inlined_call_operand.vmem [shape: f32[1,768], index: 5, kind: input, shape index: {}]
  %s6 = inlined_call_operand.vmem [shape: f32[1,256], index: 6, kind: input, shape index: {}]
  %s7 = inlined_call_operand.hbm [shape: f32[8,256], index: 7, kind: output, shape index: {}]
  %s8 = sld [smem:[#allocation0]]
  $region46: #{tpu_custom_call.1} parent=0
    _
  %s10 = ssub.s32 1, %s8
  %s11 = scalar_select 0, %s10, %s8
  %13 = dma.hbm_to_smem %s0, 16, [#allocation3], [#allocation2]
  %14 = dma.done [#allocation2], 16
  %15 = sfence
  $region1: #{tpu_custom_call.1} parent=0
    #allocation4 [shape = 'u8[16384]{0}', space=vmem, size = 0x4000, scoped, tag = 'input window, operand 1, single buffered']
    #allocation5 [shape = 's32[1]{0}', space=sflag, size = 0x4, scoped, tag = 'scoped memory for tpu_custom_call.1']
    #allocation6 [shape = 's32[1]{0}', space=sflag, size = 0x4, scoped, tag = 'scoped memory for tpu_custom_call.1']
    #allocation7 [shape = 'u8[393216]{0}', space=vmem, size = 0x60000, scoped, tag = 'input window, operand 3, single buffered']
    #allocation8 [shape = 's32[1]{0}', space=sflag, size = 0x4, scoped, tag = 'scoped memory for tpu_custom_call.1']
    #allocation9 [shape = 'u8[393216]{0}', space=vmem, size = 0x60000, scoped, tag = 'input window, operand 4, single buffered']
    #allocation10 [shape = 'u8[8192]{0}', space=vmem, size = 0x2000, scoped, tag = 'output window, operand 0, single buffered']
    %16 = vsyncpa [#allocation5], 0
    %17 = vsyncpa [#allocation8], 0
    %18 = vsyncpa [#allocation6], 0
    // Predicated region
    $region2: #{tpu_custom_call.1} parent=1 // pred_check
      _
    $region3: #{tpu_custom_call.1} parent=1 // pred_check_branch
      %20 = sbr.rel (0) target = $region5
    $region4: #{tpu_custom_call.1} parent=1 // pred_region
      %s22 = ssub.s32 512, 512
      %23 = vsyncadd [#allocation5], %s22
      %s24 = sshll.u32 [#allocation4], 4
      %s25 = int_to_ptr.vmem [resolvable:$true] %s24
      %30 = dma.hbm_to_vmem [thread:$0]  %s1, 512, %s25, [#allocation5], 256, 256, 16
    $region5: #{tpu_custom_call.1} parent=1 // pred_fallthru
      _
    // Predicated region
    $region6: #{tpu_custom_call.1} parent=1 // pred_check
      _
    $region7: #{tpu_custom_call.1} parent=1 // pred_check_branch
      %32 = sbr.rel (0) target = $region9
    $region8: #{tpu_custom_call.1} parent=1 // pred_region
      _
    $region9: #{tpu_custom_call.1} parent=1 // pred_fallthru
      _
    // Predicated region
    $region10: #{tpu_custom_call.1} parent=1 // pred_check
      _
    $region11: #{tpu_custom_call.1} parent=1 // pred_check_branch
      %34 = sbr.rel (0) target = $region13
    $region12: #{tpu_custom_call.1} parent=1 // pred_region
      %s36 = ssub.s32 12288, 12288
      %37 = vsyncadd [#allocation8], %s36
      %s38 = sshll.u32 [#allocation7], 4
      %s39 = int_to_ptr.vmem [resolvable:$true] %s38
      %44 = dma.hbm_to_vmem [thread:$0]  %s3, 12288, %s39, [#allocation8], 384, 384, 24
    $region13: #{tpu_custom_call.1} parent=1 // pred_fallthru
      _
    // Predicated region
    $region14: #{tpu_custom_call.1} parent=1 // pred_check
      _
    $region15: #{tpu_custom_call.1} parent=1 // pred_check_branch
      %46 = sbr.rel (0) target = $region17
    $region16: #{tpu_custom_call.1} parent=1 // pred_region
      %s48 = ssub.s32 12288, 12288
      %49 = vsyncadd [#allocation8], %s48
      %s50 = sshll.u32 [#allocation9], 4
      %s51 = int_to_ptr.vmem [resolvable:$true] %s50
      %56 = dma.hbm_to_vmem [thread:$0]  %s4, 12288, %s51, [#allocation8], 384, 384, 24
    $region17: #{tpu_custom_call.1} parent=1 // pred_fallthru
      _
    // Predicated region
    $region18: #{tpu_custom_call.1} parent=1 // pred_check
      _
    $region19: #{tpu_custom_call.1} parent=1 // pred_check_branch
      %58 = sbr.rel (0) target = $region21
    $region20: #{tpu_custom_call.1} parent=1 // pred_region
      _
    $region21: #{tpu_custom_call.1} parent=1 // pred_fallthru
      _
    // Predicated region
    $region22: #{tpu_custom_call.1} parent=1 // pred_check
      _
    $region23: #{tpu_custom_call.1} parent=1 // pred_check_branch
      %60 = sbr.rel (0) target = $region25
    $region24: #{tpu_custom_call.1} parent=1 // pred_region
      _
    $region25: #{tpu_custom_call.1} parent=1 // pred_fallthru
      _
    // Predicated region
    $region26: #{tpu_custom_call.1} parent=1 // pred_check
      _
    $region27: #{tpu_custom_call.1} parent=1 // pred_check_branch
      %62 = sbr.rel (0) target = $region29
    $region28: #{tpu_custom_call.1} parent=1 // pred_region
      %63 = dma.done [#allocation5], 512
    $region29: #{tpu_custom_call.1} parent=1 // pred_fallthru
      _
    // Predicated region
    $region30: #{tpu_custom_call.1} parent=1 // pred_check
      _
    $region31: #{tpu_custom_call.1} parent=1 // pred_check_branch
      %65 = sbr.rel (0) target = $region33
    $region32: #{tpu_custom_call.1} parent=1 // pred_region
      %66 = dma.done [#allocation8], 12288
    $region33: #{tpu_custom_call.1} parent=1 // pred_fallthru
      _
    // Predicated region
    $region34: #{tpu_custom_call.1} parent=1 // pred_check
      _
    $region35: #{tpu_custom_call.1} parent=1 // pred_check_branch
      %68 = sbr.rel (0) target = $region37
    $region36: #{tpu_custom_call.1} parent=1 // pred_region
      %69 = dma.done [#allocation8], 12288
    $region37: #{tpu_custom_call.1} parent=1 // pred_fallthru
      _
    %s70 = sld [smem:[#allocation3]]
    %s71 = sshra.s32 %s70, 3
    %s72 = sand.u32 %s70, 7
    %s73 = sshra.s32 %s70, 3
    %s74 = sand.u32 %s70, 7
    %s75 = smul.u32 %s71, 2
    %s76 = smul.u32 %s75, 8
    %s77 = sadd.s32 %s76, %s74
    %s78 = scalar_lea.vmem [#allocation4], %s77
    %v79 = vld [vmem:[%s78] ss:$8 sm:$0x3]
    %s80 = sld [smem:[#allocation3 + $0x1]]
    %s81 = sshra.s32 %s80, 3
    %s82 = sand.u32 %s80, 7
    %s83 = sshra.s32 %s80, 3
    %s84 = sand.u32 %s80, 7
    %s85 = smul.u32 %s81, 2
    %s86 = smul.u32 %s85, 8
    %s87 = sadd.s32 %s86, %s84
    %s88 = scalar_lea.vmem [#allocation4], %s87
    %v89 = vld [vmem:[%s88] ss:$8 sm:$0x3]
    %s90 = sld [smem:[#allocation3 + $0x2]]
    %s91 = sshra.s32 %s90, 3
    %s92 = sand.u32 %s90, 7
    %s93 = sshra.s32 %s90, 3
    %s94 = sand.u32 %s90, 7
    %s95 = smul.u32 %s91, 2
    %s96 = smul.u32 %s95, 8
    %s97 = sadd.s32 %s96, %s94
    %s98 = scalar_lea.vmem [#allocation4], %s97
    %v99 = vld [vmem:[%s98] ss:$8 sm:$0x3]
    %s100 = sld [smem:[#allocation3 + $0x3]]
    %s101 = sshra.s32 %s100, 3
    %s102 = sand.u32 %s100, 7
    %s103 = sshra.s32 %s100, 3
    %s104 = sand.u32 %s100, 7
    %s105 = smul.u32 %s101, 2
    %s106 = smul.u32 %s105, 8
    %s107 = sadd.s32 %s106, %s104
    %s108 = scalar_lea.vmem [#allocation4], %s107
    %v109 = vld [vmem:[%s108] ss:$8 sm:$0x3]
    %s110 = sld [smem:[#allocation3 + $0x4]]
    %s111 = sshra.s32 %s110, 3
    %s112 = sand.u32 %s110, 7
    %s113 = sshra.s32 %s110, 3
    %s114 = sand.u32 %s110, 7
    %s115 = smul.u32 %s111, 2
    %s116 = smul.u32 %s115, 8
    %s117 = sadd.s32 %s116, %s114
    %s118 = scalar_lea.vmem [#allocation4], %s117
    %v119 = vld [vmem:[%s118] ss:$8 sm:$0x3]
    %s120 = sld [smem:[#allocation3 + $0x5]]
    %s121 = sshra.s32 %s120, 3
    %s122 = sand.u32 %s120, 7
    %s123 = sshra.s32 %s120, 3
    %s124 = sand.u32 %s120, 7
    %s125 = smul.u32 %s121, 2
    %s126 = smul.u32 %s125, 8
    %s127 = sadd.s32 %s126, %s124
    %s128 = scalar_lea.vmem [#allocation4], %s127
    %v129 = vld [vmem:[%s128] ss:$8 sm:$0x3]
    %s130 = sld [smem:[#allocation3 + $0x6]]
    %s131 = sshra.s32 %s130, 3
    %s132 = sand.u32 %s130, 7
    %s133 = sshra.s32 %s130, 3
    %s134 = sand.u32 %s130, 7
    %s135 = smul.u32 %s131, 2
    %s136 = smul.u32 %s135, 8
    %s137 = sadd.s32 %s136, %s134
    %s138 = scalar_lea.vmem [#allocation4], %s137
    %v139 = vld [vmem:[%s138] ss:$8 sm:$0x3]
    %s140 = sld [smem:[#allocation3 + $0x7]]
    %s141 = sshra.s32 %s140, 3
    %s142 = sand.u32 %s140, 7
    %s143 = sshra.s32 %s140, 3
    %s144 = sand.u32 %s140, 7
    %s145 = smul.u32 %s141, 2
    %s146 = smul.u32 %s145, 8
    %s147 = sadd.s32 %s146, %s144
    %s148 = scalar_lea.vmem [#allocation4], %s147
    %v149 = vld [vmem:[%s148] ss:$8 sm:$0x3]
    %v151 = vlaneseq
    %v152 = vshrl.u32 %v151, 7
    %v153 = vsub.s32 0, %v152
    %v154 = vrot.slane %v79, %v153
    %v155 = vlaneseq
    %v156 = vshrl.u32 %v155, 7
    %v157 = vsub.s32 1, %v156
    %v158 = vrot.slane %v79, %v157
    %v162 = vlaneseq
    %v163 = vshrl.u32 %v162, 7
    %v164 = vsub.s32 0, %v163
    %v165 = vrot.slane %v89, %v164
    %v166 = vlaneseq
    %v167 = vshrl.u32 %v166, 7
    %v168 = vsub.s32 1, %v167
    %v169 = vrot.slane %v89, %v168
    %v173 = vlaneseq
    %v174 = vshrl.u32 %v173, 7
    %v175 = vsub.s32 0, %v174
    %v176 = vrot.slane %v99, %v175
    %v177 = vlaneseq
    %v178 = vshrl.u32 %v177, 7
    %v179 = vsub.s32 1, %v178
    %v180 = vrot.slane %v99, %v179
    %v184 = vlaneseq
    %v185 = vshrl.u32 %v184, 7
    %v186 = vsub.s32 0, %v185
    %v187 = vrot.slane %v109, %v186
    %v188 = vlaneseq
    %v189 = vshrl.u32 %v188, 7
    %v190 = vsub.s32 1, %v189
    %v191 = vrot.slane %v109, %v190
    %v195 = vlaneseq
    %v196 = vshrl.u32 %v195, 7
    %v197 = vsub.s32 0, %v196
    %v198 = vrot.slane %v119, %v197
    %v199 = vlaneseq
    %v200 = vshrl.u32 %v199, 7
    %v201 = vsub.s32 1, %v200
    %v202 = vrot.slane %v119, %v201
    %v206 = vlaneseq
    %v207 = vshrl.u32 %v206, 7
    %v208 = vsub.s32 0, %v207
    %v209 = vrot.slane %v129, %v208
    %v210 = vlaneseq
    %v211 = vshrl.u32 %v210, 7
    %v212 = vsub.s32 1, %v211
    %v213 = vrot.slane %v129, %v212
    %v217 = vlaneseq
    %v218 = vshrl.u32 %v217, 7
    %v219 = vsub.s32 0, %v218
    %v220 = vrot.slane %v139, %v219
    %v221 = vlaneseq
    %v222 = vshrl.u32 %v221, 7
    %v223 = vsub.s32 1, %v222
    %v224 = vrot.slane %v139, %v223
    %v228 = vlaneseq
    %v229 = vshrl.u32 %v228, 7
    %v230 = vsub.s32 0, %v229
    %v231 = vrot.slane %v149, %v230
    %v232 = vlaneseq
    %v233 = vshrl.u32 %v232, 7
    %v234 = vsub.s32 1, %v233
    %v235 = vrot.slane %v149, %v234
    %vm238 = vcmask 1040384
    %v239 = vsel %vm238, %v154, %v165
    %v240 = vsel %vm238, %v158, %v169
    %vm241 = vcmask 1041408
    %v242 = vsel %vm241, %v239, %v176
    %v243 = vsel %vm241, %v240, %v180
    %vm244 = vcmask 1042432
    %v245 = vsel %vm244, %v242, %v187
    %v246 = vsel %vm244, %v243, %v191
    %vm247 = vcmask 1043456
    %v248 = vsel %vm247, %v245, %v198
    %v249 = vsel %vm247, %v246, %v202
    %vm250 = vcmask 1044480
    %v251 = vsel %vm250, %v248, %v209
    %v252 = vsel %vm250, %v249, %v213
    %vm253 = vcmask 1045504
    %v254 = vsel %vm253, %v251, %v220
    %v255 = vsel %vm253, %v252, %v224
    %vm256 = vcmask 1046528
    %v257 = vsel %vm256, %v254, %v231
    %v258 = vsel %vm256, %v255, %v235
    %v259 = vpack.c.bf16 %v257, %v257
    %v260 = vpack.c.bf16 %v258, %v258
    %v261 = vld [vmem:[#allocation7] sm:$0xff]
    %v262 = vld [vmem:[#allocation7 + $0x8] sm:$0xff]
    %v263 = vld [vmem:[#allocation7 + $0x10] sm:$0xff]
    %v264 = vld [vmem:[#allocation7 + $0x18] sm:$0xff]
    %v265 = vld [vmem:[#allocation7 + $0x20] sm:$0xff]
    %v266 = vld [vmem:[#allocation7 + $0x28] sm:$0xff]
    %v267 = vld [vmem:[#allocation7 + $0x30] sm:$0xff]
    %v268 = vld [vmem:[#allocation7 + $0x38] sm:$0xff]
    %v269 = vld [vmem:[#allocation7 + $0x40] sm:$0xff]
    %v270 = vld [vmem:[#allocation7 + $0x48] sm:$0xff]
    %v271 = vld [vmem:[#allocation7 + $0x50] sm:$0xff]
    %v272 = vld [vmem:[#allocation7 + $0x58] sm:$0xff]
    %v273 = vld [vmem:[#allocation7 + $0x60] sm:$0xff]
    %v274 = vld [vmem:[#allocation7 + $0x68] sm:$0xff]
    %v275 = vld [vmem:[#allocation7 + $0x70] sm:$0xff]
    %v276 = vld [vmem:[#allocation7 + $0x78] sm:$0xff]
    %v277 = vld [vmem:[#allocation7 + $0x80] sm:$0xff]
    %v278 = vld [vmem:[#allocation7 + $0x88] sm:$0xff]
    %v279 = vld [vmem:[#allocation7 + $0x90] sm:$0xff]
    %v280 = vld [vmem:[#allocation7 + $0x98] sm:$0xff]
    %v281 = vld [vmem:[#allocation7 + $0xa0] sm:$0xff]
    %v282 = vld [vmem:[#allocation7 + $0xa8] sm:$0xff]
    %v283 = vld [vmem:[#allocation7 + $0xb0] sm:$0xff]
    %v284 = vld [vmem:[#allocation7 + $0xb8] sm:$0xff]
    %v285 = vld [vmem:[#allocation7 + $0xc0] sm:$0xff]
    %v286 = vld [vmem:[#allocation7 + $0xc8] sm:$0xff]
    %v287 = vld [vmem:[#allocation7 + $0xd0] sm:$0xff]
    %v288 = vld [vmem:[#allocation7 + $0xd8] sm:$0xff]
    %v289 = vld [vmem:[#allocation7 + $0xe0] sm:$0xff]
    %v290 = vld [vmem:[#allocation7 + $0xe8] sm:$0xff]
    %v291 = vld [vmem:[#allocation7 + $0xf0] sm:$0xff]
    %v292 = vld [vmem:[#allocation7 + $0xf8] sm:$0xff]
    %v293 = vld [vmem:[#allocation7 + $0x100] sm:$0xff]
    %v294 = vld [vmem:[#allocation7 + $0x108] sm:$0xff]
    %v295 = vld [vmem:[#allocation7 + $0x110] sm:$0xff]
    %v296 = vld [vmem:[#allocation7 + $0x118] sm:$0xff]
    %v297 = vld [vmem:[#allocation7 + $0x120] sm:$0xff]
    %v298 = vld [vmem:[#allocation7 + $0x128] sm:$0xff]
    %v299 = vld [vmem:[#allocation7 + $0x130] sm:$0xff]
    %v300 = vld [vmem:[#allocation7 + $0x138] sm:$0xff]
    %v301 = vld [vmem:[#allocation7 + $0x140] sm:$0xff]
    %v302 = vld [vmem:[#allocation7 + $0x148] sm:$0xff]
    %v303 = vld [vmem:[#allocation7 + $0x150] sm:$0xff]
    %v304 = vld [vmem:[#allocation7 + $0x158] sm:$0xff]
    %v305 = vld [vmem:[#allocation7 + $0x160] sm:$0xff]
    %v306 = vld [vmem:[#allocation7 + $0x168] sm:$0xff]
    %v307 = vld [vmem:[#allocation7 + $0x170] sm:$0xff]
    %v308 = vld [vmem:[#allocation7 + $0x178] sm:$0xff]
    %v309 = vld [vmem:[#allocation7 + $0x180] sm:$0xff]
    %v310 = vld [vmem:[#allocation7 + $0x188] sm:$0xff]
    %v311 = vld [vmem:[#allocation7 + $0x190] sm:$0xff]
    %v312 = vld [vmem:[#allocation7 + $0x198] sm:$0xff]
    %v313 = vld [vmem:[#allocation7 + $0x1a0] sm:$0xff]
    %v314 = vld [vmem:[#allocation7 + $0x1a8] sm:$0xff]
    %v315 = vld [vmem:[#allocation7 + $0x1b0] sm:$0xff]
    %v316 = vld [vmem:[#allocation7 + $0x1b8] sm:$0xff]
    %v317 = vld [vmem:[#allocation7 + $0x1c0] sm:$0xff]
    %v318 = vld [vmem:[#allocation7 + $0x1c8] sm:$0xff]
    %v319 = vld [vmem:[#allocation7 + $0x1d0] sm:$0xff]
    %v320 = vld [vmem:[#allocation7 + $0x1d8] sm:$0xff]
    %v321 = vld [vmem:[#allocation7 + $0x1e0] sm:$0xff]
    %v322 = vld [vmem:[#allocation7 + $0x1e8] sm:$0xff]
    %v323 = vld [vmem:[#allocation7 + $0x1f0] sm:$0xff]
    %v324 = vld [vmem:[#allocation7 + $0x1f8] sm:$0xff]
    %v325 = vld [vmem:[#allocation7 + $0x200] sm:$0xff]
    %v326 = vld [vmem:[#allocation7 + $0x208] sm:$0xff]
    %v327 = vld [vmem:[#allocation7 + $0x210] sm:$0xff]
    %v328 = vld [vmem:[#allocation7 + $0x218] sm:$0xff]
    %v329 = vld [vmem:[#allocation7 + $0x220] sm:$0xff]
    %v330 = vld [vmem:[#allocation7 + $0x228] sm:$0xff]
    %v331 = vld [vmem:[#allocation7 + $0x230] sm:$0xff]
    %v332 = vld [vmem:[#allocation7 + $0x238] sm:$0xff]
    %v333 = vld [vmem:[#allocation7 + $0x240] sm:$0xff]
    %v334 = vld [vmem:[#allocation7 + $0x248] sm:$0xff]
    %v335 = vld [vmem:[#allocation7 + $0x250] sm:$0xff]
    %v336 = vld [vmem:[#allocation7 + $0x258] sm:$0xff]
    %v337 = vld [vmem:[#allocation7 + $0x260] sm:$0xff]
    %v338 = vld [vmem:[#allocation7 + $0x268] sm:$0xff]
    %v339 = vld [vmem:[#allocation7 + $0x270] sm:$0xff]
    %v340 = vld [vmem:[#allocation7 + $0x278] sm:$0xff]
    %v341 = vld [vmem:[#allocation7 + $0x280] sm:$0xff]
    %v342 = vld [vmem:[#allocation7 + $0x288] sm:$0xff]
    %v343 = vld [vmem:[#allocation7 + $0x290] sm:$0xff]
    %v344 = vld [vmem:[#allocation7 + $0x298] sm:$0xff]
    %v345 = vld [vmem:[#allocation7 + $0x2a0] sm:$0xff]
    %v346 = vld [vmem:[#allocation7 + $0x2a8] sm:$0xff]
    %v347 = vld [vmem:[#allocation7 + $0x2b0] sm:$0xff]
    %v348 = vld [vmem:[#allocation7 + $0x2b8] sm:$0xff]
    %v349 = vld [vmem:[#allocation7 + $0x2c0] sm:$0xff]
    %v350 = vld [vmem:[#allocation7 + $0x2c8] sm:$0xff]
    %v351 = vld [vmem:[#allocation7 + $0x2d0] sm:$0xff]
    %v352 = vld [vmem:[#allocation7 + $0x2d8] sm:$0xff]
    %v353 = vld [vmem:[#allocation7 + $0x2e0] sm:$0xff]
    %v354 = vld [vmem:[#allocation7 + $0x2e8] sm:$0xff]
    %v355 = vld [vmem:[#allocation7 + $0x2f0] sm:$0xff]
    %v356 = vld [vmem:[#allocation7 + $0x2f8] sm:$0xff]
    %v357 = vld [vmem:[%s5] sm:$0x3f]
    %v359 = vlaneseq
    %v360 = vshrl.u32 %v359, 7
    %v361 = vsub.s32 0, %v360
    %v362 = vrot.slane %v357, %v361
    %v363 = vlaneseq
    %v364 = vshrl.u32 %v363, 7
    %v365 = vsub.s32 1, %v364
    %v366 = vrot.slane %v357, %v365
    %v367 = vlaneseq
    %v368 = vshrl.u32 %v367, 7
    %v369 = vsub.s32 2, %v368
    %v370 = vrot.slane %v357, %v369
    %v371 = vlaneseq
    %v372 = vshrl.u32 %v371, 7
    %v373 = vsub.s32 3, %v372
    %v374 = vrot.slane %v357, %v373
    %v375 = vlaneseq
    %v376 = vshrl.u32 %v375, 7
    %v377 = vsub.s32 4, %v376
    %v378 = vrot.slane %v357, %v377
    %v379 = vlaneseq
    %v380 = vshrl.u32 %v379, 7
    %v381 = vsub.s32 5, %v380
    %v382 = vrot.slane %v357, %v381
    %v485 = vunpack.c.l.b16 %v261
    %v486 = vunpack.c.h.b16 %v261
    %v487 = vunpack.c.l.b16 %v262
    %v488 = vunpack.c.h.b16 %v262
    %v489 = vunpack.c.l.b16 %v263
    %v490 = vunpack.c.h.b16 %v263
    %v491 = vunpack.c.l.b16 %v264
    %v492 = vunpack.c.h.b16 %v264
    %v493 = vunpack.c.l.b16 %v265
    %v494 = vunpack.c.h.b16 %v265
    %v495 = vunpack.c.l.b16 %v266
    %v496 = vunpack.c.h.b16 %v266
    %v497 = vunpack.c.l.b16 %v267
    %v498 = vunpack.c.h.b16 %v267
    %v499 = vunpack.c.l.b16 %v268
    %v500 = vunpack.c.h.b16 %v268
    %v501 = vunpack.c.l.b16 %v269
    %v502 = vunpack.c.h.b16 %v269
    %v503 = vunpack.c.l.b16 %v270
    %v504 = vunpack.c.h.b16 %v270
    %v505 = vunpack.c.l.b16 %v271
    %v506 = vunpack.c.h.b16 %v271
    %v507 = vunpack.c.l.b16 %v272
    %v508 = vunpack.c.h.b16 %v272
    %v509 = vunpack.c.l.b16 %v273
    %v510 = vunpack.c.h.b16 %v273
    %v511 = vunpack.c.l.b16 %v274
    %v512 = vunpack.c.h.b16 %v274
    %v513 = vunpack.c.l.b16 %v275
    %v514 = vunpack.c.h.b16 %v275
    %v515 = vunpack.c.l.b16 %v276
    %v516 = vunpack.c.h.b16 %v276
    %v517 = vunpack.c.l.b16 %v277
    %v518 = vunpack.c.h.b16 %v277
    %v519 = vunpack.c.l.b16 %v278
    %v520 = vunpack.c.h.b16 %v278
    %v521 = vunpack.c.l.b16 %v279
    %v522 = vunpack.c.h.b16 %v279
    %v523 = vunpack.c.l.b16 %v280
    %v524 = vunpack.c.h.b16 %v280
    %v525 = vunpack.c.l.b16 %v281
    %v526 = vunpack.c.h.b16 %v281
    %v527 = vunpack.c.l.b16 %v282
    %v528 = vunpack.c.h.b16 %v282
    %v529 = vunpack.c.l.b16 %v283
    %v530 = vunpack.c.h.b16 %v283
    %v531 = vunpack.c.l.b16 %v284
    %v532 = vunpack.c.h.b16 %v284
    %v533 = vunpack.c.l.b16 %v285
    %v534 = vunpack.c.h.b16 %v285
    %v535 = vunpack.c.l.b16 %v286
    %v536 = vunpack.c.h.b16 %v286
    %v537 = vunpack.c.l.b16 %v287
    %v538 = vunpack.c.h.b16 %v287
    %v539 = vunpack.c.l.b16 %v288
    %v540 = vunpack.c.h.b16 %v288
    %v541 = vunpack.c.l.b16 %v289
    %v542 = vunpack.c.h.b16 %v289
    %v543 = vunpack.c.l.b16 %v290
    %v544 = vunpack.c.h.b16 %v290
    %v545 = vunpack.c.l.b16 %v291
    %v546 = vunpack.c.h.b16 %v291
    %v547 = vunpack.c.l.b16 %v292
    %v548 = vunpack.c.h.b16 %v292
    %v549 = vunpack.c.l.b16 %v293
    %v550 = vunpack.c.h.b16 %v293
    %v551 = vunpack.c.l.b16 %v294
    %v552 = vunpack.c.h.b16 %v294
    %v553 = vunpack.c.l.b16 %v295
    %v554 = vunpack.c.h.b16 %v295
    %v555 = vunpack.c.l.b16 %v296
    %v556 = vunpack.c.h.b16 %v296
    %v557 = vunpack.c.l.b16 %v297
    %v558 = vunpack.c.h.b16 %v297
    %v559 = vunpack.c.l.b16 %v298
    %v560 = vunpack.c.h.b16 %v298
    %v561 = vunpack.c.l.b16 %v299
    %v562 = vunpack.c.h.b16 %v299
    %v563 = vunpack.c.l.b16 %v300
    %v564 = vunpack.c.h.b16 %v300
    %v565 = vunpack.c.l.b16 %v301
    %v566 = vunpack.c.h.b16 %v301
    %v567 = vunpack.c.l.b16 %v302
    %v568 = vunpack.c.h.b16 %v302
    %v569 = vunpack.c.l.b16 %v303
    %v570 = vunpack.c.h.b16 %v303
    %v571 = vunpack.c.l.b16 %v304
    %v572 = vunpack.c.h.b16 %v304
    %v573 = vunpack.c.l.b16 %v305
    %v574 = vunpack.c.h.b16 %v305
    %v575 = vunpack.c.l.b16 %v306
    %v576 = vunpack.c.h.b16 %v306
    %v577 = vunpack.c.l.b16 %v307
    %v578 = vunpack.c.h.b16 %v307
    %v579 = vunpack.c.l.b16 %v308
    %v580 = vunpack.c.h.b16 %v308
    %v581 = vunpack.c.l.b16 %v309
    %v582 = vunpack.c.h.b16 %v309
    %v583 = vunpack.c.l.b16 %v310
    %v584 = vunpack.c.h.b16 %v310
    %v585 = vunpack.c.l.b16 %v311
    %v586 = vunpack.c.h.b16 %v311
    %v587 = vunpack.c.l.b16 %v312
    %v588 = vunpack.c.h.b16 %v312
    %v589 = vunpack.c.l.b16 %v313
    %v590 = vunpack.c.h.b16 %v313
    %v591 = vunpack.c.l.b16 %v314
    %v592 = vunpack.c.h.b16 %v314
    %v593 = vunpack.c.l.b16 %v315
    %v594 = vunpack.c.h.b16 %v315
    %v595 = vunpack.c.l.b16 %v316
    %v596 = vunpack.c.h.b16 %v316
    %v597 = vunpack.c.l.b16 %v317
    %v598 = vunpack.c.h.b16 %v317
    %v599 = vunpack.c.l.b16 %v318
    %v600 = vunpack.c.h.b16 %v318
    %v601 = vunpack.c.l.b16 %v319
    %v602 = vunpack.c.h.b16 %v319
    %v603 = vunpack.c.l.b16 %v320
    %v604 = vunpack.c.h.b16 %v320
    %v605 = vunpack.c.l.b16 %v321
    %v606 = vunpack.c.h.b16 %v321
    %v607 = vunpack.c.l.b16 %v322
    %v608 = vunpack.c.h.b16 %v322
    %v609 = vunpack.c.l.b16 %v323
    %v610 = vunpack.c.h.b16 %v323
    %v611 = vunpack.c.l.b16 %v324
    %v612 = vunpack.c.h.b16 %v324
    %v613 = vunpack.c.l.b16 %v325
    %v614 = vunpack.c.h.b16 %v325
    %v615 = vunpack.c.l.b16 %v326
    %v616 = vunpack.c.h.b16 %v326
    %v617 = vunpack.c.l.b16 %v327
    %v618 = vunpack.c.h.b16 %v327
    %v619 = vunpack.c.l.b16 %v328
    %v620 = vunpack.c.h.b16 %v328
    %v621 = vunpack.c.l.b16 %v329
    %v622 = vunpack.c.h.b16 %v329
    %v623 = vunpack.c.l.b16 %v330
    %v624 = vunpack.c.h.b16 %v330
    %v625 = vunpack.c.l.b16 %v331
    %v626 = vunpack.c.h.b16 %v331
    %v627 = vunpack.c.l.b16 %v332
    %v628 = vunpack.c.h.b16 %v332
    %v629 = vunpack.c.l.b16 %v333
    %v630 = vunpack.c.h.b16 %v333
    %v631 = vunpack.c.l.b16 %v334
    %v632 = vunpack.c.h.b16 %v334
    %v633 = vunpack.c.l.b16 %v335
    %v634 = vunpack.c.h.b16 %v335
    %v635 = vunpack.c.l.b16 %v336
    %v636 = vunpack.c.h.b16 %v336
    %v637 = vunpack.c.l.b16 %v337
    %v638 = vunpack.c.h.b16 %v337
    %v639 = vunpack.c.l.b16 %v338
    %v640 = vunpack.c.h.b16 %v338
    %v641 = vunpack.c.l.b16 %v339
    %v642 = vunpack.c.h.b16 %v339
    %v643 = vunpack.c.l.b16 %v340
    %v644 = vunpack.c.h.b16 %v340
    %v645 = vunpack.c.l.b16 %v341
    %v646 = vunpack.c.h.b16 %v341
    %v647 = vunpack.c.l.b16 %v342
    %v648 = vunpack.c.h.b16 %v342
    %v649 = vunpack.c.l.b16 %v343
    %v650 = vunpack.c.h.b16 %v343
    %v651 = vunpack.c.l.b16 %v344
    %v652 = vunpack.c.h.b16 %v344
    %v653 = vunpack.c.l.b16 %v345
    %v654 = vunpack.c.h.b16 %v345
    %v655 = vunpack.c.l.b16 %v346
    %v656 = vunpack.c.h.b16 %v346
    %v657 = vunpack.c.l.b16 %v347
    %v658 = vunpack.c.h.b16 %v347
    %v659 = vunpack.c.l.b16 %v348
    %v660 = vunpack.c.h.b16 %v348
    %v661 = vunpack.c.l.b16 %v349
    %v662 = vunpack.c.h.b16 %v349
    %v663 = vunpack.c.l.b16 %v350
    %v664 = vunpack.c.h.b16 %v350
    %v665 = vunpack.c.l.b16 %v351
    %v666 = vunpack.c.h.b16 %v351
    %v667 = vunpack.c.l.b16 %v352
    %v668 = vunpack.c.h.b16 %v352
    %v669 = vunpack.c.l.b16 %v353
    %v670 = vunpack.c.h.b16 %v353
    %v671 = vunpack.c.l.b16 %v354
    %v672 = vunpack.c.h.b16 %v354
    %v673 = vunpack.c.l.b16 %v355
    %v674 = vunpack.c.h.b16 %v355
    %v675 = vunpack.c.l.b16 %v356
    %v676 = vunpack.c.h.b16 %v356
    %v677 = vpack.c.b16 %v491, %v485
    %v678 = vpack.c.b16 %v492, %v486
    %v679 = vpack.c.b16 %v493, %v487
    %v680 = vpack.c.b16 %v494, %v488
    %v681 = vpack.c.b16 %v495, %v489
    %v682 = vpack.c.b16 %v496, %v490
    %v683 = vpack.c.b16 %v503, %v497
    %v684 = vpack.c.b16 %v504, %v498
    %v685 = vpack.c.b16 %v505, %v499
    %v686 = vpack.c.b16 %v506, %v500
    %v687 = vpack.c.b16 %v507, %v501
    %v688 = vpack.c.b16 %v508, %v502
    %v689 = vpack.c.b16 %v515, %v509
    %v690 = vpack.c.b16 %v516, %v510
    %v691 = vpack.c.b16 %v517, %v511
    %v692 = vpack.c.b16 %v518, %v512
    %v693 = vpack.c.b16 %v519, %v513
    %v694 = vpack.c.b16 %v520, %v514
    %v695 = vpack.c.b16 %v527, %v521
    %v696 = vpack.c.b16 %v528, %v522
    %v697 = vpack.c.b16 %v529, %v523
    %v698 = vpack.c.b16 %v530, %v524
    %v699 = vpack.c.b16 %v531, %v525
    %v700 = vpack.c.b16 %v532, %v526
    %v701 = vpack.c.b16 %v539, %v533
    %v702 = vpack.c.b16 %v540, %v534
    %v703 = vpack.c.b16 %v541, %v535
    %v704 = vpack.c.b16 %v542, %v536
    %v705 = vpack.c.b16 %v543, %v537
    %v706 = vpack.c.b16 %v544, %v538
    %v707 = vpack.c.b16 %v551, %v545
    %v708 = vpack.c.b16 %v552, %v546
    %v709 = vpack.c.b16 %v553, %v547
    %v710 = vpack.c.b16 %v554, %v548
    %v711 = vpack.c.b16 %v555, %v549
    %v712 = vpack.c.b16 %v556, %v550
    %v713 = vpack.c.b16 %v563, %v557
    %v714 = vpack.c.b16 %v564, %v558
    %v715 = vpack.c.b16 %v565, %v559
    %v716 = vpack.c.b16 %v566, %v560
    %v717 = vpack.c.b16 %v567, %v561
    %v718 = vpack.c.b16 %v568, %v562
    %v719 = vpack.c.b16 %v575, %v569
    %v720 = vpack.c.b16 %v576, %v570
    %v721 = vpack.c.b16 %v577, %v571
    %v722 = vpack.c.b16 %v578, %v572
    %v723 = vpack.c.b16 %v579, %v573
    %v724 = vpack.c.b16 %v580, %v574
    %v725 = vpack.c.b16 %v587, %v581
    %v726 = vpack.c.b16 %v588, %v582
    %v727 = vpack.c.b16 %v589, %v583
    %v728 = vpack.c.b16 %v590, %v584
    %v729 = vpack.c.b16 %v591, %v585
    %v730 = vpack.c.b16 %v592, %v586
    %v731 = vpack.c.b16 %v599, %v593
    %v732 = vpack.c.b16 %v600, %v594
    %v733 = vpack.c.b16 %v601, %v595
    %v734 = vpack.c.b16 %v602, %v596
    %v735 = vpack.c.b16 %v603, %v597
    %v736 = vpack.c.b16 %v604, %v598
    %v737 = vpack.c.b16 %v611, %v605
    %v738 = vpack.c.b16 %v612, %v606
    %v739 = vpack.c.b16 %v613, %v607
    %v740 = vpack.c.b16 %v614, %v608
    %v741 = vpack.c.b16 %v615, %v609
    %v742 = vpack.c.b16 %v616, %v610
    %v743 = vpack.c.b16 %v623, %v617
    %v744 = vpack.c.b16 %v624, %v618
    %v745 = vpack.c.b16 %v625, %v619
    %v746 = vpack.c.b16 %v626, %v620
    %v747 = vpack.c.b16 %v627, %v621
    %v748 = vpack.c.b16 %v628, %v622
    %v749 = vpack.c.b16 %v635, %v629
    %v750 = vpack.c.b16 %v636, %v630
    %v751 = vpack.c.b16 %v637, %v631
    %v752 = vpack.c.b16 %v638, %v632
    %v753 = vpack.c.b16 %v639, %v633
    %v754 = vpack.c.b16 %v640, %v634
    %v755 = vpack.c.b16 %v647, %v641
    %v756 = vpack.c.b16 %v648, %v642
    %v757 = vpack.c.b16 %v649, %v643
    %v758 = vpack.c.b16 %v650, %v644
    %v759 = vpack.c.b16 %v651, %v645
    %v760 = vpack.c.b16 %v652, %v646
    %v761 = vpack.c.b16 %v659, %v653
    %v762 = vpack.c.b16 %v660, %v654
    %v763 = vpack.c.b16 %v661, %v655
    %v764 = vpack.c.b16 %v662, %v656
    %v765 = vpack.c.b16 %v663, %v657
    %v766 = vpack.c.b16 %v664, %v658
    %v767 = vpack.c.b16 %v671, %v665
    %v768 = vpack.c.b16 %v672, %v666
    %v769 = vpack.c.b16 %v673, %v667
    %v770 = vpack.c.b16 %v674, %v668
    %v771 = vpack.c.b16 %v675, %v669
    %v772 = vpack.c.b16 %v676, %v670
    %869 = vmatprep.subr.bf16.mxu0 %v720
    %870 = vmatpush1.bf16.msra.mxu0 %v719
    %871 = vmatprep.subr.bf16.mxu0 %v714
    %872 = vmatpush1.bf16.msra.mxu0 %v713
    %873 = vmatprep.subr.bf16.mxu0 %v708
    %874 = vmatpush1.bf16.msra.mxu0 %v707
    %875 = vmatprep.subr.bf16.mxu0 %v702
    %876 = vmatpush1.bf16.msra.mxu0 %v701
    %877 = vmatprep.subr.bf16.mxu0 %v696
    %878 = vmatpush1.bf16.msra.mxu0 %v695
    %879 = vmatprep.subr.bf16.mxu0 %v690
    %880 = vmatpush1.bf16.msra.mxu0 %v689
    %881 = vmatprep.subr.bf16.mxu0 %v684
    %882 = vmatpush1.bf16.msra.mxu0 %v683
    %883 = vmatprep.subr.bf16.mxu0 %v678
    %884 = vmatpush1.bf16.msra.mxu0 %v677
    %885 = vmatprep.subr.bf16.mxu0 %v768
    %886 = vmatpush2.bf16.msra.mxu0 %v767
    %887 = vmatprep.subr.bf16.mxu0 %v762
    %888 = vmatpush2.bf16.msra.mxu0 %v761
    %889 = vmatprep.subr.bf16.mxu0 %v756
    %890 = vmatpush2.bf16.msra.mxu0 %v755
    %891 = vmatprep.subr.bf16.mxu0 %v750
    %892 = vmatpush2.bf16.msra.mxu0 %v749
    %893 = vmatprep.subr.bf16.mxu0 %v744
    %894 = vmatpush2.bf16.msra.mxu0 %v743
    %895 = vmatprep.subr.bf16.mxu0 %v738
    %896 = vmatpush2.bf16.msra.mxu0 %v737
    %897 = vmatprep.subr.bf16.mxu0 %v732
    %898 = vmatpush2.bf16.msra.mxu0 %v731
    %899 = vmatprep.subr.bf16.mxu0 %v726
    %900 = vmatpush2.bf16.msra.mxu0 %v725
    %901 = vmatprep.mubr.bf16.mxu0 %v260
    %902 = vmatmul.mubr.bf16.gmra.mxu0 %v259
    %v903 = vpop.f32.mrf.mxu0
    %v904 = vadd.f32 %v362, %v903
    %v905 = vpop.f32.mrf.mxu0
    %v906 = vadd.f32 %v366, %v905
    %v907 = vpop.f32.mrf.mxu0
    %v908 = vpop.f32.mrf.mxu0
    %909 = vdwg.mxu0
    %910 = vmatprep.subr.bf16.mxu0 %v722
    %911 = vmatpush1.bf16.msra.mxu0 %v721
    %912 = vmatprep.subr.bf16.mxu0 %v716
    %913 = vmatpush1.bf16.msra.mxu0 %v715
    %914 = vmatprep.subr.bf16.mxu0 %v710
    %915 = vmatpush1.bf16.msra.mxu0 %v709
    %916 = vmatprep.subr.bf16.mxu0 %v704
    %917 = vmatpush1.bf16.msra.mxu0 %v703
    %918 = vmatprep.subr.bf16.mxu0 %v698
    %919 = vmatpush1.bf16.msra.mxu0 %v697
    %920 = vmatprep.subr.bf16.mxu0 %v692
    %921 = vmatpush1.bf16.msra.mxu0 %v691
    %922 = vmatprep.subr.bf16.mxu0 %v686
    %923 = vmatpush1.bf16.msra.mxu0 %v685
    %924 = vmatprep.subr.bf16.mxu0 %v680
    %925 = vmatpush1.bf16.msra.mxu0 %v679
    %926 = vmatprep.subr.bf16.mxu0 %v770
    %927 = vmatpush2.bf16.msra.mxu0 %v769
    %928 = vmatprep.subr.bf16.mxu0 %v764
    %929 = vmatpush2.bf16.msra.mxu0 %v763
    %930 = vmatprep.subr.bf16.mxu0 %v758
    %931 = vmatpush2.bf16.msra.mxu0 %v757
    %932 = vmatprep.subr.bf16.mxu0 %v752
    %933 = vmatpush2.bf16.msra.mxu0 %v751
    %934 = vmatprep.subr.bf16.mxu0 %v746
    %935 = vmatpush2.bf16.msra.mxu0 %v745
    %936 = vmatprep.subr.bf16.mxu0 %v740
    %937 = vmatpush2.bf16.msra.mxu0 %v739
    %938 = vmatprep.subr.bf16.mxu0 %v734
    %939 = vmatpush2.bf16.msra.mxu0 %v733
    %940 = vmatprep.subr.bf16.mxu0 %v728
    %941 = vmatpush2.bf16.msra.mxu0 %v727
    %942 = vmatprep.mubr.bf16.mxu0 %v260
    %943 = vmatmul.mubr.bf16.gmra.mxu0 %v259
    %v944 = vpop.f32.mrf.mxu0
    %v945 = vadd.f32 %v370, %v944
    %v946 = vpop.f32.mrf.mxu0
    %v947 = vadd.f32 %v374, %v946
    %v948 = vpop.f32.mrf.mxu0
    %v949 = vpop.f32.mrf.mxu0
    %950 = vdwg.mxu0
    %951 = vmatprep.subr.bf16.mxu0 %v724
    %952 = vmatpush1.bf16.msra.mxu0 %v723
    %953 = vmatprep.subr.bf16.mxu0 %v718
    %954 = vmatpush1.bf16.msra.mxu0 %v717
    %955 = vmatprep.subr.bf16.mxu0 %v712
    %956 = vmatpush1.bf16.msra.mxu0 %v711
    %957 = vmatprep.subr.bf16.mxu0 %v706
    %958 = vmatpush1.bf16.msra.mxu0 %v705
    %959 = vmatprep.subr.bf16.mxu0 %v700
    %960 = vmatpush1.bf16.msra.mxu0 %v699
    %961 = vmatprep.subr.bf16.mxu0 %v694
    %962 = vmatpush1.bf16.msra.mxu0 %v693
    %963 = vmatprep.subr.bf16.mxu0 %v688
    %964 = vmatpush1.bf16.msra.mxu0 %v687
    %965 = vmatprep.subr.bf16.mxu0 %v682
    %966 = vmatpush1.bf16.msra.mxu0 %v681
    %967 = vmatprep.subr.bf16.mxu0 %v772
    %968 = vmatpush2.bf16.msra.mxu0 %v771
    %969 = vmatprep.subr.bf16.mxu0 %v766
    %970 = vmatpush2.bf16.msra.mxu0 %v765
    %971 = vmatprep.subr.bf16.mxu0 %v760
    %972 = vmatpush2.bf16.msra.mxu0 %v759
    %973 = vmatprep.subr.bf16.mxu0 %v754
    %974 = vmatpush2.bf16.msra.mxu0 %v753
    %975 = vmatprep.subr.bf16.mxu0 %v748
    %976 = vmatpush2.bf16.msra.mxu0 %v747
    %977 = vmatprep.subr.bf16.mxu0 %v742
    %978 = vmatpush2.bf16.msra.mxu0 %v741
    %979 = vmatprep.subr.bf16.mxu0 %v736
    %980 = vmatpush2.bf16.msra.mxu0 %v735
    %981 = vmatprep.subr.bf16.mxu0 %v730
    %982 = vmatpush2.bf16.msra.mxu0 %v729
    %983 = vmatprep.mubr.bf16.mxu0 %v260
    %984 = vmatmul.mubr.bf16.gmra.mxu0 %v259
    %v985 = vpop.f32.mrf.mxu0
    %v986 = vadd.f32 %v378, %v985
    %v987 = vpop.f32.mrf.mxu0
    %v988 = vadd.f32 %v382, %v987
    %v989 = vpop.f32.mrf.mxu0
    %v990 = vpop.f32.mrf.mxu0
    %991 = vdwg.mxu0
    %v992 = vld [vmem:[%s6] sm:$0x3]
    %v993 = vld [vmem:[%s2] sm:$0x3]
    %v995 = vlaneseq
    %v996 = vshrl.u32 %v995, 7
    %v997 = vsub.s32 0, %v996
    %v998 = vrot.slane %v993, %v997
    %v999 = vlaneseq
    %v1000 = vshrl.u32 %v999, 7
    %v1001 = vsub.s32 1, %v1000
    %v1002 = vrot.slane %v993, %v1001
    %v1005 = vpack.c.bf16 %v998, %v998
    %v1006 = vpack.c.bf16 %v1002, %v1002
    %v1007 = vld [vmem:[#allocation9] sm:$0xff]
    %v1008 = vld [vmem:[#allocation9 + $0x8] sm:$0xff]
    %v1009 = vld [vmem:[#allocation9 + $0x10] sm:$0xff]
    %v1010 = vld [vmem:[#allocation9 + $0x18] sm:$0xff]
    %v1011 = vld [vmem:[#allocation9 + $0x20] sm:$0xff]
    %v1012 = vld [vmem:[#allocation9 + $0x28] sm:$0xff]
    %v1013 = vld [vmem:[#allocation9 + $0x30] sm:$0xff]
    %v1014 = vld [vmem:[#allocation9 + $0x38] sm:$0xff]
    %v1015 = vld [vmem:[#allocation9 + $0x40] sm:$0xff]
    %v1016 = vld [vmem:[#allocation9 + $0x48] sm:$0xff]
    %v1017 = vld [vmem:[#allocation9 + $0x50] sm:$0xff]
    %v1018 = vld [vmem:[#allocation9 + $0x58] sm:$0xff]
    %v1019 = vld [vmem:[#allocation9 + $0x60] sm:$0xff]
    %v1020 = vld [vmem:[#allocation9 + $0x68] sm:$0xff]
    %v1021 = vld [vmem:[#allocation9 + $0x70] sm:$0xff]
    %v1022 = vld [vmem:[#allocation9 + $0x78] sm:$0xff]
    %v1023 = vld [vmem:[#allocation9 + $0x80] sm:$0xff]
    %v1024 = vld [vmem:[#allocation9 + $0x88] sm:$0xff]
    %v1025 = vld [vmem:[#allocation9 + $0x90] sm:$0xff]
    %v1026 = vld [vmem:[#allocation9 + $0x98] sm:$0xff]
    %v1027 = vld [vmem:[#allocation9 + $0xa0] sm:$0xff]
    %v1028 = vld [vmem:[#allocation9 + $0xa8] sm:$0xff]
    %v1029 = vld [vmem:[#allocation9 + $0xb0] sm:$0xff]
    %v1030 = vld [vmem:[#allocation9 + $0xb8] sm:$0xff]
    %v1031 = vld [vmem:[#allocation9 + $0xc0] sm:$0xff]
    %v1032 = vld [vmem:[#allocation9 + $0xc8] sm:$0xff]
    %v1033 = vld [vmem:[#allocation9 + $0xd0] sm:$0xff]
    %v1034 = vld [vmem:[#allocation9 + $0xd8] sm:$0xff]
    %v1035 = vld [vmem:[#allocation9 + $0xe0] sm:$0xff]
    %v1036 = vld [vmem:[#allocation9 + $0xe8] sm:$0xff]
    %v1037 = vld [vmem:[#allocation9 + $0xf0] sm:$0xff]
    %v1038 = vld [vmem:[#allocation9 + $0xf8] sm:$0xff]
    %v1039 = vld [vmem:[#allocation9 + $0x100] sm:$0xff]
    %v1040 = vld [vmem:[#allocation9 + $0x108] sm:$0xff]
    %v1041 = vld [vmem:[#allocation9 + $0x110] sm:$0xff]
    %v1042 = vld [vmem:[#allocation9 + $0x118] sm:$0xff]
    %v1043 = vld [vmem:[#allocation9 + $0x120] sm:$0xff]
    %v1044 = vld [vmem:[#allocation9 + $0x128] sm:$0xff]
    %v1045 = vld [vmem:[#allocation9 + $0x130] sm:$0xff]
    %v1046 = vld [vmem:[#allocation9 + $0x138] sm:$0xff]
    %v1047 = vld [vmem:[#allocation9 + $0x140] sm:$0xff]
    %v1048 = vld [vmem:[#allocation9 + $0x148] sm:$0xff]
    %v1049 = vld [vmem:[#allocation9 + $0x150] sm:$0xff]
    %v1050 = vld [vmem:[#allocation9 + $0x158] sm:$0xff]
    %v1051 = vld [vmem:[#allocation9 + $0x160] sm:$0xff]
    %v1052 = vld [vmem:[#allocation9 + $0x168] sm:$0xff]
    %v1053 = vld [vmem:[#allocation9 + $0x170] sm:$0xff]
    %v1054 = vld [vmem:[#allocation9 + $0x178] sm:$0xff]
    %v1055 = vld [vmem:[#allocation9 + $0x180] sm:$0xff]
    %v1056 = vld [vmem:[#allocation9 + $0x188] sm:$0xff]
    %v1057 = vld [vmem:[#allocation9 + $0x190] sm:$0xff]
    %v1058 = vld [vmem:[#allocation9 + $0x198] sm:$0xff]
    %v1059 = vld [vmem:[#allocation9 + $0x1a0] sm:$0xff]
    %v1060 = vld [vmem:[#allocation9 + $0x1a8] sm:$0xff]
    %v1061 = vld [vmem:[#allocation9 + $0x1b0] sm:$0xff]
    %v1062 = vld [vmem:[#allocation9 + $0x1b8] sm:$0xff]
    %v1063 = vld [vmem:[#allocation9 + $0x1c0] sm:$0xff]
    %v1064 = vld [vmem:[#allocation9 + $0x1c8] sm:$0xff]
    %v1065 = vld [vmem:[#allocation9 + $0x1d0] sm:$0xff]
    %v1066 = vld [vmem:[#allocation9 + $0x1d8] sm:$0xff]
    %v1067 = vld [vmem:[#allocation9 + $0x1e0] sm:$0xff]
    %v1068 = vld [vmem:[#allocation9 + $0x1e8] sm:$0xff]
    %v1069 = vld [vmem:[#allocation9 + $0x1f0] sm:$0xff]
    %v1070 = vld [vmem:[#allocation9 + $0x1f8] sm:$0xff]
    %v1071 = vld [vmem:[#allocation9 + $0x200] sm:$0xff]
    %v1072 = vld [vmem:[#allocation9 + $0x208] sm:$0xff]
    %v1073 = vld [vmem:[#allocation9 + $0x210] sm:$0xff]
    %v1074 = vld [vmem:[#allocation9 + $0x218] sm:$0xff]
    %v1075 = vld [vmem:[#allocation9 + $0x220] sm:$0xff]
    %v1076 = vld [vmem:[#allocation9 + $0x228] sm:$0xff]
    %v1077 = vld [vmem:[#allocation9 + $0x230] sm:$0xff]
    %v1078 = vld [vmem:[#allocation9 + $0x238] sm:$0xff]
    %v1079 = vld [vmem:[#allocation9 + $0x240] sm:$0xff]
    %v1080 = vld [vmem:[#allocation9 + $0x248] sm:$0xff]
    %v1081 = vld [vmem:[#allocation9 + $0x250] sm:$0xff]
    %v1082 = vld [vmem:[#allocation9 + $0x258] sm:$0xff]
    %v1083 = vld [vmem:[#allocation9 + $0x260] sm:$0xff]
    %v1084 = vld [vmem:[#allocation9 + $0x268] sm:$0xff]
    %v1085 = vld [vmem:[#allocation9 + $0x270] sm:$0xff]
    %v1086 = vld [vmem:[#allocation9 + $0x278] sm:$0xff]
    %v1087 = vld [vmem:[#allocation9 + $0x280] sm:$0xff]
    %v1088 = vld [vmem:[#allocation9 + $0x288] sm:$0xff]
    %v1089 = vld [vmem:[#allocation9 + $0x290] sm:$0xff]
    %v1090 = vld [vmem:[#allocation9 + $0x298] sm:$0xff]
    %v1091 = vld [vmem:[#allocation9 + $0x2a0] sm:$0xff]
    %v1092 = vld [vmem:[#allocation9 + $0x2a8] sm:$0xff]
    %v1093 = vld [vmem:[#allocation9 + $0x2b0] sm:$0xff]
    %v1094 = vld [vmem:[#allocation9 + $0x2b8] sm:$0xff]
    %v1095 = vld [vmem:[#allocation9 + $0x2c0] sm:$0xff]
    %v1096 = vld [vmem:[#allocation9 + $0x2c8] sm:$0xff]
    %v1097 = vld [vmem:[#allocation9 + $0x2d0] sm:$0xff]
    %v1098 = vld [vmem:[#allocation9 + $0x2d8] sm:$0xff]
    %v1099 = vld [vmem:[#allocation9 + $0x2e0] sm:$0xff]
    %v1100 = vld [vmem:[#allocation9 + $0x2e8] sm:$0xff]
    %v1101 = vld [vmem:[#allocation9 + $0x2f0] sm:$0xff]
    %v1102 = vld [vmem:[#allocation9 + $0x2f8] sm:$0xff]
    %v1199 = vunpack.c.l.b16 %v1007
    %v1200 = vunpack.c.h.b16 %v1007
    %v1201 = vunpack.c.l.b16 %v1008
    %v1202 = vunpack.c.h.b16 %v1008
    %v1203 = vunpack.c.l.b16 %v1009
    %v1204 = vunpack.c.h.b16 %v1009
    %v1205 = vunpack.c.l.b16 %v1010
    %v1206 = vunpack.c.h.b16 %v1010
    %v1207 = vunpack.c.l.b16 %v1011
    %v1208 = vunpack.c.h.b16 %v1011
    %v1209 = vunpack.c.l.b16 %v1012
    %v1210 = vunpack.c.h.b16 %v1012
    %v1211 = vunpack.c.l.b16 %v1013
    %v1212 = vunpack.c.h.b16 %v1013
    %v1213 = vunpack.c.l.b16 %v1014
    %v1214 = vunpack.c.h.b16 %v1014
    %v1215 = vunpack.c.l.b16 %v1015
    %v1216 = vunpack.c.h.b16 %v1015
    %v1217 = vunpack.c.l.b16 %v1016
    %v1218 = vunpack.c.h.b16 %v1016
    %v1219 = vunpack.c.l.b16 %v1017
    %v1220 = vunpack.c.h.b16 %v1017
    %v1221 = vunpack.c.l.b16 %v1018
    %v1222 = vunpack.c.h.b16 %v1018
    %v1223 = vunpack.c.l.b16 %v1019
    %v1224 = vunpack.c.h.b16 %v1019
    %v1225 = vunpack.c.l.b16 %v1020
    %v1226 = vunpack.c.h.b16 %v1020
    %v1227 = vunpack.c.l.b16 %v1021
    %v1228 = vunpack.c.h.b16 %v1021
    %v1229 = vunpack.c.l.b16 %v1022
    %v1230 = vunpack.c.h.b16 %v1022
    %v1231 = vunpack.c.l.b16 %v1023
    %v1232 = vunpack.c.h.b16 %v1023
    %v1233 = vunpack.c.l.b16 %v1024
    %v1234 = vunpack.c.h.b16 %v1024
    %v1235 = vunpack.c.l.b16 %v1025
    %v1236 = vunpack.c.h.b16 %v1025
    %v1237 = vunpack.c.l.b16 %v1026
    %v1238 = vunpack.c.h.b16 %v1026
    %v1239 = vunpack.c.l.b16 %v1027
    %v1240 = vunpack.c.h.b16 %v1027
    %v1241 = vunpack.c.l.b16 %v1028
    %v1242 = vunpack.c.h.b16 %v1028
    %v1243 = vunpack.c.l.b16 %v1029
    %v1244 = vunpack.c.h.b16 %v1029
    %v1245 = vunpack.c.l.b16 %v1030
    %v1246 = vunpack.c.h.b16 %v1030
    %v1247 = vunpack.c.l.b16 %v1031
    %v1248 = vunpack.c.h.b16 %v1031
    %v1249 = vunpack.c.l.b16 %v1032
    %v1250 = vunpack.c.h.b16 %v1032
    %v1251 = vunpack.c.l.b16 %v1033
    %v1252 = vunpack.c.h.b16 %v1033
    %v1253 = vunpack.c.l.b16 %v1034
    %v1254 = vunpack.c.h.b16 %v1034
    %v1255 = vunpack.c.l.b16 %v1035
    %v1256 = vunpack.c.h.b16 %v1035
    %v1257 = vunpack.c.l.b16 %v1036
    %v1258 = vunpack.c.h.b16 %v1036
    %v1259 = vunpack.c.l.b16 %v1037
    %v1260 = vunpack.c.h.b16 %v1037
    %v1261 = vunpack.c.l.b16 %v1038
    %v1262 = vunpack.c.h.b16 %v1038
    %v1263 = vunpack.c.l.b16 %v1039
    %v1264 = vunpack.c.h.b16 %v1039
    %v1265 = vunpack.c.l.b16 %v1040
    %v1266 = vunpack.c.h.b16 %v1040
    %v1267 = vunpack.c.l.b16 %v1041
    %v1268 = vunpack.c.h.b16 %v1041
    %v1269 = vunpack.c.l.b16 %v1042
    %v1270 = vunpack.c.h.b16 %v1042
    %v1271 = vunpack.c.l.b16 %v1043
    %v1272 = vunpack.c.h.b16 %v1043
    %v1273 = vunpack.c.l.b16 %v1044
    %v1274 = vunpack.c.h.b16 %v1044
    %v1275 = vunpack.c.l.b16 %v1045
    %v1276 = vunpack.c.h.b16 %v1045
    %v1277 = vunpack.c.l.b16 %v1046
    %v1278 = vunpack.c.h.b16 %v1046
    %v1279 = vunpack.c.l.b16 %v1047
    %v1280 = vunpack.c.h.b16 %v1047
    %v1281 = vunpack.c.l.b16 %v1048
    %v1282 = vunpack.c.h.b16 %v1048
    %v1283 = vunpack.c.l.b16 %v1049
    %v1284 = vunpack.c.h.b16 %v1049
    %v1285 = vunpack.c.l.b16 %v1050
    %v1286 = vunpack.c.h.b16 %v1050
    %v1287 = vunpack.c.l.b16 %v1051
    %v1288 = vunpack.c.h.b16 %v1051
    %v1289 = vunpack.c.l.b16 %v1052
    %v1290 = vunpack.c.h.b16 %v1052
    %v1291 = vunpack.c.l.b16 %v1053
    %v1292 = vunpack.c.h.b16 %v1053
    %v1293 = vunpack.c.l.b16 %v1054
    %v1294 = vunpack.c.h.b16 %v1054
    %v1295 = vunpack.c.l.b16 %v1055
    %v1296 = vunpack.c.h.b16 %v1055
    %v1297 = vunpack.c.l.b16 %v1056
    %v1298 = vunpack.c.h.b16 %v1056
    %v1299 = vunpack.c.l.b16 %v1057
    %v1300 = vunpack.c.h.b16 %v1057
    %v1301 = vunpack.c.l.b16 %v1058
    %v1302 = vunpack.c.h.b16 %v1058
    %v1303 = vunpack.c.l.b16 %v1059
    %v1304 = vunpack.c.h.b16 %v1059
    %v1305 = vunpack.c.l.b16 %v1060
    %v1306 = vunpack.c.h.b16 %v1060
    %v1307 = vunpack.c.l.b16 %v1061
    %v1308 = vunpack.c.h.b16 %v1061
    %v1309 = vunpack.c.l.b16 %v1062
    %v1310 = vunpack.c.h.b16 %v1062
    %v1311 = vunpack.c.l.b16 %v1063
    %v1312 = vunpack.c.h.b16 %v1063
    %v1313 = vunpack.c.l.b16 %v1064
    %v1314 = vunpack.c.h.b16 %v1064
    %v1315 = vunpack.c.l.b16 %v1065
    %v1316 = vunpack.c.h.b16 %v1065
    %v1317 = vunpack.c.l.b16 %v1066
    %v1318 = vunpack.c.h.b16 %v1066
    %v1319 = vunpack.c.l.b16 %v1067
    %v1320 = vunpack.c.h.b16 %v1067
    %v1321 = vunpack.c.l.b16 %v1068
    %v1322 = vunpack.c.h.b16 %v1068
    %v1323 = vunpack.c.l.b16 %v1069
    %v1324 = vunpack.c.h.b16 %v1069
    %v1325 = vunpack.c.l.b16 %v1070
    %v1326 = vunpack.c.h.b16 %v1070
    %v1327 = vunpack.c.l.b16 %v1071
    %v1328 = vunpack.c.h.b16 %v1071
    %v1329 = vunpack.c.l.b16 %v1072
    %v1330 = vunpack.c.h.b16 %v1072
    %v1331 = vunpack.c.l.b16 %v1073
    %v1332 = vunpack.c.h.b16 %v1073
    %v1333 = vunpack.c.l.b16 %v1074
    %v1334 = vunpack.c.h.b16 %v1074
    %v1335 = vunpack.c.l.b16 %v1075
    %v1336 = vunpack.c.h.b16 %v1075
    %v1337 = vunpack.c.l.b16 %v1076
    %v1338 = vunpack.c.h.b16 %v1076
    %v1339 = vunpack.c.l.b16 %v1077
    %v1340 = vunpack.c.h.b16 %v1077
    %v1341 = vunpack.c.l.b16 %v1078
    %v1342 = vunpack.c.h.b16 %v1078
    %v1343 = vunpack.c.l.b16 %v1079
    %v1344 = vunpack.c.h.b16 %v1079
    %v1345 = vunpack.c.l.b16 %v1080
    %v1346 = vunpack.c.h.b16 %v1080
    %v1347 = vunpack.c.l.b16 %v1081
    %v1348 = vunpack.c.h.b16 %v1081
    %v1349 = vunpack.c.l.b16 %v1082
    %v1350 = vunpack.c.h.b16 %v1082
    %v1351 = vunpack.c.l.b16 %v1083
    %v1352 = vunpack.c.h.b16 %v1083
    %v1353 = vunpack.c.l.b16 %v1084
    %v1354 = vunpack.c.h.b16 %v1084
    %v1355 = vunpack.c.l.b16 %v1085
    %v1356 = vunpack.c.h.b16 %v1085
    %v1357 = vunpack.c.l.b16 %v1086
    %v1358 = vunpack.c.h.b16 %v1086
    %v1359 = vunpack.c.l.b16 %v1087
    %v1360 = vunpack.c.h.b16 %v1087
    %v1361 = vunpack.c.l.b16 %v1088
    %v1362 = vunpack.c.h.b16 %v1088
    %v1363 = vunpack.c.l.b16 %v1089
    %v1364 = vunpack.c.h.b16 %v1089
    %v1365 = vunpack.c.l.b16 %v1090
    %v1366 = vunpack.c.h.b16 %v1090
    %v1367 = vunpack.c.l.b16 %v1091
    %v1368 = vunpack.c.h.b16 %v1091
    %v1369 = vunpack.c.l.b16 %v1092
    %v1370 = vunpack.c.h.b16 %v1092
    %v1371 = vunpack.c.l.b16 %v1093
    %v1372 = vunpack.c.h.b16 %v1093
    %v1373 = vunpack.c.l.b16 %v1094
    %v1374 = vunpack.c.h.b16 %v1094
    %v1375 = vunpack.c.l.b16 %v1095
    %v1376 = vunpack.c.h.b16 %v1095
    %v1377 = vunpack.c.l.b16 %v1096
    %v1378 = vunpack.c.h.b16 %v1096
    %v1379 = vunpack.c.l.b16 %v1097
    %v1380 = vunpack.c.h.b16 %v1097
    %v1381 = vunpack.c.l.b16 %v1098
    %v1382 = vunpack.c.h.b16 %v1098
    %v1383 = vunpack.c.l.b16 %v1099
    %v1384 = vunpack.c.h.b16 %v1099
    %v1385 = vunpack.c.l.b16 %v1100
    %v1386 = vunpack.c.h.b16 %v1100
    %v1387 = vunpack.c.l.b16 %v1101
    %v1388 = vunpack.c.h.b16 %v1101
    %v1389 = vunpack.c.l.b16 %v1102
    %v1390 = vunpack.c.h.b16 %v1102
    %v1391 = vpack.c.b16 %v1205, %v1199
    %v1392 = vpack.c.b16 %v1206, %v1200
    %v1393 = vpack.c.b16 %v1207, %v1201
    %v1394 = vpack.c.b16 %v1208, %v1202
    %v1395 = vpack.c.b16 %v1209, %v1203
    %v1396 = vpack.c.b16 %v1210, %v1204
    %v1397 = vpack.c.b16 %v1217, %v1211
    %v1398 = vpack.c.b16 %v1218, %v1212
    %v1399 = vpack.c.b16 %v1219, %v1213
    %v1400 = vpack.c.b16 %v1220, %v1214
    %v1401 = vpack.c.b16 %v1221, %v1215
    %v1402 = vpack.c.b16 %v1222, %v1216
    %v1403 = vpack.c.b16 %v1229, %v1223
    %v1404 = vpack.c.b16 %v1230, %v1224
    %v1405 = vpack.c.b16 %v1231, %v1225
    %v1406 = vpack.c.b16 %v1232, %v1226
    %v1407 = vpack.c.b16 %v1233, %v1227
    %v1408 = vpack.c.b16 %v1234, %v1228
    %v1409 = vpack.c.b16 %v1241, %v1235
    %v1410 = vpack.c.b16 %v1242, %v1236
    %v1411 = vpack.c.b16 %v1243, %v1237
    %v1412 = vpack.c.b16 %v1244, %v1238
    %v1413 = vpack.c.b16 %v1245, %v1239
    %v1414 = vpack.c.b16 %v1246, %v1240
    %v1415 = vpack.c.b16 %v1253, %v1247
    %v1416 = vpack.c.b16 %v1254, %v1248
    %v1417 = vpack.c.b16 %v1255, %v1249
    %v1418 = vpack.c.b16 %v1256, %v1250
    %v1419 = vpack.c.b16 %v1257, %v1251
    %v1420 = vpack.c.b16 %v1258, %v1252
    %v1421 = vpack.c.b16 %v1265, %v1259
    %v1422 = vpack.c.b16 %v1266, %v1260
    %v1423 = vpack.c.b16 %v1267, %v1261
    %v1424 = vpack.c.b16 %v1268, %v1262
    %v1425 = vpack.c.b16 %v1269, %v1263
    %v1426 = vpack.c.b16 %v1270, %v1264
    %v1427 = vpack.c.b16 %v1277, %v1271
    %v1428 = vpack.c.b16 %v1278, %v1272
    %v1429 = vpack.c.b16 %v1279, %v1273
    %v1430 = vpack.c.b16 %v1280, %v1274
    %v1431 = vpack.c.b16 %v1281, %v1275
    %v1432 = vpack.c.b16 %v1282, %v1276
    %v1433 = vpack.c.b16 %v1289, %v1283
    %v1434 = vpack.c.b16 %v1290, %v1284
    %v1435 = vpack.c.b16 %v1291, %v1285
    %v1436 = vpack.c.b16 %v1292, %v1286
    %v1437 = vpack.c.b16 %v1293, %v1287
    %v1438 = vpack.c.b16 %v1294, %v1288
    %v1439 = vpack.c.b16 %v1301, %v1295
    %v1440 = vpack.c.b16 %v1302, %v1296
    %v1441 = vpack.c.b16 %v1303, %v1297
    %v1442 = vpack.c.b16 %v1304, %v1298
    %v1443 = vpack.c.b16 %v1305, %v1299
    %v1444 = vpack.c.b16 %v1306, %v1300
    %v1445 = vpack.c.b16 %v1313, %v1307
    %v1446 = vpack.c.b16 %v1314, %v1308
    %v1447 = vpack.c.b16 %v1315, %v1309
    %v1448 = vpack.c.b16 %v1316, %v1310
    %v1449 = vpack.c.b16 %v1317, %v1311
    %v1450 = vpack.c.b16 %v1318, %v1312
    %v1451 = vpack.c.b16 %v1325, %v1319
    %v1452 = vpack.c.b16 %v1326, %v1320
    %v1453 = vpack.c.b16 %v1327, %v1321
    %v1454 = vpack.c.b16 %v1328, %v1322
    %v1455 = vpack.c.b16 %v1329, %v1323
    %v1456 = vpack.c.b16 %v1330, %v1324
    %v1457 = vpack.c.b16 %v1337, %v1331
    %v1458 = vpack.c.b16 %v1338, %v1332
    %v1459 = vpack.c.b16 %v1339, %v1333
    %v1460 = vpack.c.b16 %v1340, %v1334
    %v1461 = vpack.c.b16 %v1341, %v1335
    %v1462 = vpack.c.b16 %v1342, %v1336
    %v1463 = vpack.c.b16 %v1349, %v1343
    %v1464 = vpack.c.b16 %v1350, %v1344
    %v1465 = vpack.c.b16 %v1351, %v1345
    %v1466 = vpack.c.b16 %v1352, %v1346
    %v1467 = vpack.c.b16 %v1353, %v1347
    %v1468 = vpack.c.b16 %v1354, %v1348
    %v1469 = vpack.c.b16 %v1361, %v1355
    %v1470 = vpack.c.b16 %v1362, %v1356
    %v1471 = vpack.c.b16 %v1363, %v1357
    %v1472 = vpack.c.b16 %v1364, %v1358
    %v1473 = vpack.c.b16 %v1365, %v1359
    %v1474 = vpack.c.b16 %v1366, %v1360
    %v1475 = vpack.c.b16 %v1373, %v1367
    %v1476 = vpack.c.b16 %v1374, %v1368
    %v1477 = vpack.c.b16 %v1375, %v1369
    %v1478 = vpack.c.b16 %v1376, %v1370
    %v1479 = vpack.c.b16 %v1377, %v1371
    %v1480 = vpack.c.b16 %v1378, %v1372
    %v1481 = vpack.c.b16 %v1385, %v1379
    %v1482 = vpack.c.b16 %v1386, %v1380
    %v1483 = vpack.c.b16 %v1387, %v1381
    %v1484 = vpack.c.b16 %v1388, %v1382
    %v1485 = vpack.c.b16 %v1389, %v1383
    %v1486 = vpack.c.b16 %v1390, %v1384
    %1583 = vmatprep.subr.bf16.mxu0 %v1434
    %1584 = vmatpush1.bf16.msra.mxu0 %v1433
    %1585 = vmatprep.subr.bf16.mxu0 %v1428
    %1586 = vmatpush1.bf16.msra.mxu0 %v1427
    %1587 = vmatprep.subr.bf16.mxu0 %v1422
    %1588 = vmatpush1.bf16.msra.mxu0 %v1421
    %1589 = vmatprep.subr.bf16.mxu0 %v1416
    %1590 = vmatpush1.bf16.msra.mxu0 %v1415
    %1591 = vmatprep.subr.bf16.mxu0 %v1410
    %1592 = vmatpush1.bf16.msra.mxu0 %v1409
    %1593 = vmatprep.subr.bf16.mxu0 %v1404
    %1594 = vmatpush1.bf16.msra.mxu0 %v1403
    %1595 = vmatprep.subr.bf16.mxu0 %v1398
    %1596 = vmatpush1.bf16.msra.mxu0 %v1397
    %1597 = vmatprep.subr.bf16.mxu0 %v1392
    %1598 = vmatpush1.bf16.msra.mxu0 %v1391
    %1599 = vmatprep.subr.bf16.mxu0 %v1482
    %1600 = vmatpush2.bf16.msra.mxu0 %v1481
    %1601 = vmatprep.subr.bf16.mxu0 %v1476
    %1602 = vmatpush2.bf16.msra.mxu0 %v1475
    %1603 = vmatprep.subr.bf16.mxu0 %v1470
    %1604 = vmatpush2.bf16.msra.mxu0 %v1469
    %1605 = vmatprep.subr.bf16.mxu0 %v1464
    %1606 = vmatpush2.bf16.msra.mxu0 %v1463
    %1607 = vmatprep.subr.bf16.mxu0 %v1458
    %1608 = vmatpush2.bf16.msra.mxu0 %v1457
    %1609 = vmatprep.subr.bf16.mxu0 %v1452
    %1610 = vmatpush2.bf16.msra.mxu0 %v1451
    %1611 = vmatprep.subr.bf16.mxu0 %v1446
    %1612 = vmatpush2.bf16.msra.mxu0 %v1445
    %1613 = vmatprep.subr.bf16.mxu0 %v1440
    %1614 = vmatpush2.bf16.msra.mxu0 %v1439
    %1615 = vmatprep.mubr.bf16.mxu0 %v1006
    %1616 = vmatmul.mubr.bf16.gmra.mxu0 %v1005
    %v1617 = vpop.f32.mrf.mxu0
    %v1618 = vadd.f32 0.0, %v1617
    %v1619 = vpop.f32.mrf.mxu0
    %v1620 = vadd.f32 0.0, %v1619
    %v1621 = vpop.f32.mrf.mxu0
    %v1622 = vpop.f32.mrf.mxu0
    %1623 = vdwg.mxu0
    %1624 = vmatprep.subr.bf16.mxu0 %v1436
    %1625 = vmatpush1.bf16.msra.mxu0 %v1435
    %1626 = vmatprep.subr.bf16.mxu0 %v1430
    %1627 = vmatpush1.bf16.msra.mxu0 %v1429
    %1628 = vmatprep.subr.bf16.mxu0 %v1424
    %1629 = vmatpush1.bf16.msra.mxu0 %v1423
    %1630 = vmatprep.subr.bf16.mxu0 %v1418
    %1631 = vmatpush1.bf16.msra.mxu0 %v1417
    %1632 = vmatprep.subr.bf16.mxu0 %v1412
    %1633 = vmatpush1.bf16.msra.mxu0 %v1411
    %1634 = vmatprep.subr.bf16.mxu0 %v1406
    %1635 = vmatpush1.bf16.msra.mxu0 %v1405
    %1636 = vmatprep.subr.bf16.mxu0 %v1400
    %1637 = vmatpush1.bf16.msra.mxu0 %v1399
    %1638 = vmatprep.subr.bf16.mxu0 %v1394
    %1639 = vmatpush1.bf16.msra.mxu0 %v1393
    %1640 = vmatprep.subr.bf16.mxu0 %v1484
    %1641 = vmatpush2.bf16.msra.mxu0 %v1483
    %1642 = vmatprep.subr.bf16.mxu0 %v1478
    %1643 = vmatpush2.bf16.msra.mxu0 %v1477
    %1644 = vmatprep.subr.bf16.mxu0 %v1472
    %1645 = vmatpush2.bf16.msra.mxu0 %v1471
    %1646 = vmatprep.subr.bf16.mxu0 %v1466
    %1647 = vmatpush2.bf16.msra.mxu0 %v1465
    %1648 = vmatprep.subr.bf16.mxu0 %v1460
    %1649 = vmatpush2.bf16.msra.mxu0 %v1459
    %1650 = vmatprep.subr.bf16.mxu0 %v1454
    %1651 = vmatpush2.bf16.msra.mxu0 %v1453
    %1652 = vmatprep.subr.bf16.mxu0 %v1448
    %1653 = vmatpush2.bf16.msra.mxu0 %v1447
    %1654 = vmatprep.subr.bf16.mxu0 %v1442
    %1655 = vmatpush2.bf16.msra.mxu0 %v1441
    %1656 = vmatprep.mubr.bf16.mxu0 %v1006
    %1657 = vmatmul.mubr.bf16.gmra.mxu0 %v1005
    %v1658 = vpop.f32.mrf.mxu0
    %v1659 = vadd.f32 0.0, %v1658
    %v1660 = vpop.f32.mrf.mxu0
    %v1661 = vadd.f32 0.0, %v1660
    %v1662 = vpop.f32.mrf.mxu0
    %v1663 = vpop.f32.mrf.mxu0
    %1664 = vdwg.mxu0
    %1665 = vmatprep.subr.bf16.mxu0 %v1438
    %1666 = vmatpush1.bf16.msra.mxu0 %v1437
    %1667 = vmatprep.subr.bf16.mxu0 %v1432
    %1668 = vmatpush1.bf16.msra.mxu0 %v1431
    %1669 = vmatprep.subr.bf16.mxu0 %v1426
    %1670 = vmatpush1.bf16.msra.mxu0 %v1425
    %1671 = vmatprep.subr.bf16.mxu0 %v1420
    %1672 = vmatpush1.bf16.msra.mxu0 %v1419
    %1673 = vmatprep.subr.bf16.mxu0 %v1414
    %1674 = vmatpush1.bf16.msra.mxu0 %v1413
    %1675 = vmatprep.subr.bf16.mxu0 %v1408
    %1676 = vmatpush1.bf16.msra.mxu0 %v1407
    %1677 = vmatprep.subr.bf16.mxu0 %v1402
    %1678 = vmatpush1.bf16.msra.mxu0 %v1401
    %1679 = vmatprep.subr.bf16.mxu0 %v1396
    %1680 = vmatpush1.bf16.msra.mxu0 %v1395
    %1681 = vmatprep.subr.bf16.mxu0 %v1486
    %1682 = vmatpush2.bf16.msra.mxu0 %v1485
    %1683 = vmatprep.subr.bf16.mxu0 %v1480
    %1684 = vmatpush2.bf16.msra.mxu0 %v1479
    %1685 = vmatprep.subr.bf16.mxu0 %v1474
    %1686 = vmatpush2.bf16.msra.mxu0 %v1473
    %1687 = vmatprep.subr.bf16.mxu0 %v1468
    %1688 = vmatpush2.bf16.msra.mxu0 %v1467
    %1689 = vmatprep.subr.bf16.mxu0 %v1462
    %1690 = vmatpush2.bf16.msra.mxu0 %v1461
    %1691 = vmatprep.subr.bf16.mxu0 %v1456
    %1692 = vmatpush2.bf16.msra.mxu0 %v1455
    %1693 = vmatprep.subr.bf16.mxu0 %v1450
    %1694 = vmatpush2.bf16.msra.mxu0 %v1449
    %1695 = vmatprep.subr.bf16.mxu0 %v1444
    %1696 = vmatpush2.bf16.msra.mxu0 %v1443
    %1697 = vmatprep.mubr.bf16.mxu0 %v1006
    %1698 = vmatmul.mubr.bf16.gmra.mxu0 %v1005
    %v1699 = vpop.f32.mrf.mxu0
    %v1700 = vadd.f32 0.0, %v1699
    %v1701 = vpop.f32.mrf.mxu0
    %v1702 = vadd.f32 0.0, %v1701
    %v1703 = vpop.f32.mrf.mxu0
    %v1704 = vpop.f32.mrf.mxu0
    %1705 = vdwg.mxu0
    %v1706 = vadd.f32 %v904, %v1618
    %v1707 = vadd.f32 %v906, %v1620
    %v1708 = vadd.f32 %v945, %v1659
    %v1709 = vadd.f32 %v947, %v1661
    %v1710 = vxor.u32 %v1706, 2147483648
    %v1711 = vxor.u32 %v1707, 2147483648
    %v1712 = vxor.u32 %v1708, 2147483648
    %v1713 = vxor.u32 %v1709, 2147483648
    %v1714 = vmul.f32 %v1710, 1.442695
    %v1715 = vpow.pop %v1714
    %v1716 = vmul.f32 %v1711, 1.442695
    %v1717 = vpow.pop %v1716
    %v1718 = vmul.f32 %v1712, 1.442695
    %v1719 = vpow.pop %v1718
    %v1720 = vmul.f32 %v1713, 1.442695
    %v1721 = vpow.pop %v1720
    %v1722 = vadd.f32 %v1715, 1.0
    %v1723 = vadd.f32 %v1717, 1.0
    %v1724 = vadd.f32 %v1719, 1.0
    %v1725 = vadd.f32 %v1721, 1.0
    %v1726 = vrcp.pop %v1722
    %v1727 = vmul.f32 1.0, %v1726
    %v1728 = vrcp.pop %v1723
    %v1729 = vmul.f32 1.0, %v1728
    %v1730 = vrcp.pop %v1724
    %v1731 = vmul.f32 1.0, %v1730
    %v1732 = vrcp.pop %v1725
    %v1733 = vmul.f32 1.0, %v1732
    %v1735 = vlaneseq
    %v1736 = vshrl.u32 %v1735, 7
    %v1737 = vsub.s32 0, %v1736
    %v1738 = vrot.slane %v992, %v1737
    %v1739 = vlaneseq
    %v1740 = vshrl.u32 %v1739, 7
    %v1741 = vsub.s32 1, %v1740
    %v1742 = vrot.slane %v992, %v1741
    %v1745 = vadd.f32 %v1700, %v1738
    %v1746 = vadd.f32 %v1702, %v1742
    %v1747 = vmul.f32 %v1727, %v1745
    %v1748 = vmul.f32 %v1729, %v1746
    %v1749 = vadd.f32 %v986, %v1747
    %v1750 = vadd.f32 %v988, %v1748
    %v1751 = vtanh.pop %v1749
    %v1752 = vtanh.pop %v1750
    %v1753 = vsub.f32 1.0, %v1731
    %v1754 = vsub.f32 1.0, %v1733
    %v1755 = vmul.f32 %v1753, %v1751
    %v1756 = vmul.f32 %v1754, %v1752
    %v1757 = vmul.f32 %v1731, %v998
    %v1758 = vmul.f32 %v1733, %v1002
    %v1759 = vadd.f32 %v1755, %v1757
    %v1760 = vadd.f32 %v1756, %v1758
    %v1763 = vcombine.low %v1759, %v1760
    %v1765 = vunpack.c.l.s4 1966171168
    %v1766 = vunpack.c.0.s8 %v1765
    %v1767 = vlaneseq
    %v1768 = vshrl.u32 %v1767, 7
    %v1769 = vsub.s32 %v1766, %v1768
    %v1770 = vrot.slane %v1763, %v1769
    %v1772 = vunpack.c.l.s4 1966171168
    %v1773 = vunpack.c.0.s8 %v1772
    %v1774 = vlaneseq
    %v1775 = vshrl.u32 %v1774, 7
    %v1776 = vsub.s32 %v1773, %v1775
    %v1777 = vrot.slane %v1770, %v1776
    %v1779 = vlaneseq
    %vm1780 = vcmp.ge.s32.totalorder %v1779, 0
    %vm1781 = vcmp.lt.s32.totalorder %v1779, 256
    %vm1782 = vmand %vm1780, %vm1781
    %1783 = vst.msk [vmem:[#allocation10] ss:$8 sm:$0x3] %vm1782, %v1777
    %1784 = vst.msk [vmem:[#allocation10] ss:$8 sm:$0x0] %vm1782, %v1777
    %v1785 = vpack.c.bf16 %v1759, %v1759
    %v1786 = vpack.c.bf16 %v1760, %v1760
    %v1787 = vld [vmem:[#allocation9] sm:$0xff]
    %v1788 = vld [vmem:[#allocation9 + $0x8] sm:$0xff]
    %v1789 = vld [vmem:[#allocation9 + $0x10] sm:$0xff]
    %v1790 = vld [vmem:[#allocation9 + $0x18] sm:$0xff]
    %v1791 = vld [vmem:[#allocation9 + $0x20] sm:$0xff]
    %v1792 = vld [vmem:[#allocation9 + $0x28] sm:$0xff]
    %v1793 = vld [vmem:[#allocation9 + $0x30] sm:$0xff]
    %v1794 = vld [vmem:[#allocation9 + $0x38] sm:$0xff]
    %v1795 = vld [vmem:[#allocation9 + $0x40] sm:$0xff]
    %v1796 = vld [vmem:[#allocation9 + $0x48] sm:$0xff]
    %v1797 = vld [vmem:[#allocation9 + $0x50] sm:$0xff]
    %v1798 = vld [vmem:[#allocation9 + $0x58] sm:$0xff]
    %v1799 = vld [vmem:[#allocation9 + $0x60] sm:$0xff]
    %v1800 = vld [vmem:[#allocation9 + $0x68] sm:$0xff]
    %v1801 = vld [vmem:[#allocation9 + $0x70] sm:$0xff]
    %v1802 = vld [vmem:[#allocation9 + $0x78] sm:$0xff]
    %v1803 = vld [vmem:[#allocation9 + $0x80] sm:$0xff]
    %v1804 = vld [vmem:[#allocation9 + $0x88] sm:$0xff]
    %v1805 = vld [vmem:[#allocation9 + $0x90] sm:$0xff]
    %v1806 = vld [vmem:[#allocation9 + $0x98] sm:$0xff]
    %v1807 = vld [vmem:[#allocation9 + $0xa0] sm:$0xff]
    %v1808 = vld [vmem:[#allocation9 + $0xa8] sm:$0xff]
    %v1809 = vld [vmem:[#allocation9 + $0xb0] sm:$0xff]
    %v1810 = vld [vmem:[#allocation9 + $0xb8] sm:$0xff]
    %v1811 = vld [vmem:[#allocation9 + $0xc0] sm:$0xff]
    %v1812 = vld [vmem:[#allocation9 + $0xc8] sm:$0xff]
    %v1813 = vld [vmem:[#allocation9 + $0xd0] sm:$0xff]
    %v1814 = vld [vmem:[#allocation9 + $0xd8] sm:$0xff]
    %v1815 = vld [vmem:[#allocation9 + $0xe0] sm:$0xff]
    %v1816 = vld [vmem:[#allocation9 + $0xe8] sm:$0xff]
    %v1817 = vld [vmem:[#allocation9 + $0xf0] sm:$0xff]
    %v1818 = vld [vmem:[#allocation9 + $0xf8] sm:$0xff]
    %v1819 = vld [vmem:[#allocation9 + $0x100] sm:$0xff]
    %v1820 = vld [vmem:[#allocation9 + $0x108] sm:$0xff]
    %v1821 = vld [vmem:[#allocation9 + $0x110] sm:$0xff]
    %v1822 = vld [vmem:[#allocation9 + $0x118] sm:$0xff]
    %v1823 = vld [vmem:[#allocation9 + $0x120] sm:$0xff]
    %v1824 = vld [vmem:[#allocation9 + $0x128] sm:$0xff]
    %v1825 = vld [vmem:[#allocation9 + $0x130] sm:$0xff]
    %v1826 = vld [vmem:[#allocation9 + $0x138] sm:$0xff]
    %v1827 = vld [vmem:[#allocation9 + $0x140] sm:$0xff]
    %v1828 = vld [vmem:[#allocation9 + $0x148] sm:$0xff]
    %v1829 = vld [vmem:[#allocation9 + $0x150] sm:$0xff]
    %v1830 = vld [vmem:[#allocation9 + $0x158] sm:$0xff]
    %v1831 = vld [vmem:[#allocation9 + $0x160] sm:$0xff]
    %v1832 = vld [vmem:[#allocation9 + $0x168] sm:$0xff]
    %v1833 = vld [vmem:[#allocation9 + $0x170] sm:$0xff]
    %v1834 = vld [vmem:[#allocation9 + $0x178] sm:$0xff]
    %v1835 = vld [vmem:[#allocation9 + $0x180] sm:$0xff]
    %v1836 = vld [vmem:[#allocation9 + $0x188] sm:$0xff]
    %v1837 = vld [vmem:[#allocation9 + $0x190] sm:$0xff]
    %v1838 = vld [vmem:[#allocation9 + $0x198] sm:$0xff]
    %v1839 = vld [vmem:[#allocation9 + $0x1a0] sm:$0xff]
    %v1840 = vld [vmem:[#allocation9 + $0x1a8] sm:$0xff]
    %v1841 = vld [vmem:[#allocation9 + $0x1b0] sm:$0xff]
    %v1842 = vld [vmem:[#allocation9 + $0x1b8] sm:$0xff]
    %v1843 = vld [vmem:[#allocation9 + $0x1c0] sm:$0xff]
    %v1844 = vld [vmem:[#allocation9 + $0x1c8] sm:$0xff]
    %v1845 = vld [vmem:[#allocation9 + $0x1d0] sm:$0xff]
    %v1846 = vld [vmem:[#allocation9 + $0x1d8] sm:$0xff]
    %v1847 = vld [vmem:[#allocation9 + $0x1e0] sm:$0xff]
    %v1848 = vld [vmem:[#allocation9 + $0x1e8] sm:$0xff]
    %v1849 = vld [vmem:[#allocation9 + $0x1f0] sm:$0xff]
    %v1850 = vld [vmem:[#allocation9 + $0x1f8] sm:$0xff]
    %v1851 = vld [vmem:[#allocation9 + $0x200] sm:$0xff]
    %v1852 = vld [vmem:[#allocation9 + $0x208] sm:$0xff]
    %v1853 = vld [vmem:[#allocation9 + $0x210] sm:$0xff]
    %v1854 = vld [vmem:[#allocation9 + $0x218] sm:$0xff]
    %v1855 = vld [vmem:[#allocation9 + $0x220] sm:$0xff]
    %v1856 = vld [vmem:[#allocation9 + $0x228] sm:$0xff]
    %v1857 = vld [vmem:[#allocation9 + $0x230] sm:$0xff]
    %v1858 = vld [vmem:[#allocation9 + $0x238] sm:$0xff]
    %v1859 = vld [vmem:[#allocation9 + $0x240] sm:$0xff]
    %v1860 = vld [vmem:[#allocation9 + $0x248] sm:$0xff]
    %v1861 = vld [vmem:[#allocation9 + $0x250] sm:$0xff]
    %v1862 = vld [vmem:[#allocation9 + $0x258] sm:$0xff]
    %v1863 = vld [vmem:[#allocation9 + $0x260] sm:$0xff]
    %v1864 = vld [vmem:[#allocation9 + $0x268] sm:$0xff]
    %v1865 = vld [vmem:[#allocation9 + $0x270] sm:$0xff]
    %v1866 = vld [vmem:[#allocation9 + $0x278] sm:$0xff]
    %v1867 = vld [vmem:[#allocation9 + $0x280] sm:$0xff]
    %v1868 = vld [vmem:[#allocation9 + $0x288] sm:$0xff]
    %v1869 = vld [vmem:[#allocation9 + $0x290] sm:$0xff]
    %v1870 = vld [vmem:[#allocation9 + $0x298] sm:$0xff]
    %v1871 = vld [vmem:[#allocation9 + $0x2a0] sm:$0xff]
    %v1872 = vld [vmem:[#allocation9 + $0x2a8] sm:$0xff]
    %v1873 = vld [vmem:[#allocation9 + $0x2b0] sm:$0xff]
    %v1874 = vld [vmem:[#allocation9 + $0x2b8] sm:$0xff]
    %v1875 = vld [vmem:[#allocation9 + $0x2c0] sm:$0xff]
    %v1876 = vld [vmem:[#allocation9 + $0x2c8] sm:$0xff]
    %v1877 = vld [vmem:[#allocation9 + $0x2d0] sm:$0xff]
    %v1878 = vld [vmem:[#allocation9 + $0x2d8] sm:$0xff]
    %v1879 = vld [vmem:[#allocation9 + $0x2e0] sm:$0xff]
    %v1880 = vld [vmem:[#allocation9 + $0x2e8] sm:$0xff]
    %v1881 = vld [vmem:[#allocation9 + $0x2f0] sm:$0xff]
    %v1882 = vld [vmem:[#allocation9 + $0x2f8] sm:$0xff]
    %v1979 = vunpack.c.l.b16 %v1787
    %v1980 = vunpack.c.h.b16 %v1787
    %v1981 = vunpack.c.l.b16 %v1788
    %v1982 = vunpack.c.h.b16 %v1788
    %v1983 = vunpack.c.l.b16 %v1789
    %v1984 = vunpack.c.h.b16 %v1789
    %v1985 = vunpack.c.l.b16 %v1790
    %v1986 = vunpack.c.h.b16 %v1790
    %v1987 = vunpack.c.l.b16 %v1791
    %v1988 = vunpack.c.h.b16 %v1791
    %v1989 = vunpack.c.l.b16 %v1792
    %v1990 = vunpack.c.h.b16 %v1792
    %v1991 = vunpack.c.l.b16 %v1793
    %v1992 = vunpack.c.h.b16 %v1793
    %v1993 = vunpack.c.l.b16 %v1794
    %v1994 = vunpack.c.h.b16 %v1794
    %v1995 = vunpack.c.l.b16 %v1795
    %v1996 = vunpack.c.h.b16 %v1795
    %v1997 = vunpack.c.l.b16 %v1796
    %v1998 = vunpack.c.h.b16 %v1796
    %v1999 = vunpack.c.l.b16 %v1797
    %v2000 = vunpack.c.h.b16 %v1797
    %v2001 = vunpack.c.l.b16 %v1798
    %v2002 = vunpack.c.h.b16 %v1798
    %v2003 = vunpack.c.l.b16 %v1799
    %v2004 = vunpack.c.h.b16 %v1799
    %v2005 = vunpack.c.l.b16 %v1800
    %v2006 = vunpack.c.h.b16 %v1800
    %v2007 = vunpack.c.l.b16 %v1801
    %v2008 = vunpack.c.h.b16 %v1801
    %v2009 = vunpack.c.l.b16 %v1802
    %v2010 = vunpack.c.h.b16 %v1802
    %v2011 = vunpack.c.l.b16 %v1803
    %v2012 = vunpack.c.h.b16 %v1803
    %v2013 = vunpack.c.l.b16 %v1804
    %v2014 = vunpack.c.h.b16 %v1804
    %v2015 = vunpack.c.l.b16 %v1805
    %v2016 = vunpack.c.h.b16 %v1805
    %v2017 = vunpack.c.l.b16 %v1806
    %v2018 = vunpack.c.h.b16 %v1806
    %v2019 = vunpack.c.l.b16 %v1807
    %v2020 = vunpack.c.h.b16 %v1807
    %v2021 = vunpack.c.l.b16 %v1808
    %v2022 = vunpack.c.h.b16 %v1808
    %v2023 = vunpack.c.l.b16 %v1809
    %v2024 = vunpack.c.h.b16 %v1809
    %v2025 = vunpack.c.l.b16 %v1810
    %v2026 = vunpack.c.h.b16 %v1810
    %v2027 = vunpack.c.l.b16 %v1811
    %v2028 = vunpack.c.h.b16 %v1811
    %v2029 = vunpack.c.l.b16 %v1812
    %v2030 = vunpack.c.h.b16 %v1812
    %v2031 = vunpack.c.l.b16 %v1813
    %v2032 = vunpack.c.h.b16 %v1813
    %v2033 = vunpack.c.l.b16 %v1814
    %v2034 = vunpack.c.h.b16 %v1814
    %v2035 = vunpack.c.l.b16 %v1815
    %v2036 = vunpack.c.h.b16 %v1815
    %v2037 = vunpack.c.l.b16 %v1816
    %v2038 = vunpack.c.h.b16 %v1816
    %v2039 = vunpack.c.l.b16 %v1817
    %v2040 = vunpack.c.h.b16 %v1817
    %v2041 = vunpack.c.l.b16 %v1818
    %v2042 = vunpack.c.h.b16 %v1818
    %v2043 = vunpack.c.l.b16 %v1819
    %v2044 = vunpack.c.h.b16 %v1819
    %v2045 = vunpack.c.l.b16 %v1820
    %v2046 = vunpack.c.h.b16 %v1820
    %v2047 = vunpack.c.l.b16 %v1821
    %v2048 = vunpack.c.h.b16 %v1821
    %v2049 = vunpack.c.l.b16 %v1822
    %v2050 = vunpack.c.h.b16 %v1822
    %v2051 = vunpack.c.l.b16 %v1823
    %v2052 = vunpack.c.h.b16 %v1823
    %v2053 = vunpack.c.l.b16 %v1824
    %v2054 = vunpack.c.h.b16 %v1824
    %v2055 = vunpack.c.l.b16 %v1825
    %v2056 = vunpack.c.h.b16 %v1825
    %v2057 = vunpack.c.l.b16 %v1826
    %v2058 = vunpack.c.h.b16 %v1826
    %v2059 = vunpack.c.l.b16 %v1827
    %v2060 = vunpack.c.h.b16 %v1827
    %v2061 = vunpack.c.l.b16 %v1828
    %v2062 = vunpack.c.h.b16 %v1828
    %v2063 = vunpack.c.l.b16 %v1829
    %v2064 = vunpack.c.h.b16 %v1829
    %v2065 = vunpack.c.l.b16 %v1830
    %v2066 = vunpack.c.h.b16 %v1830
    %v2067 = vunpack.c.l.b16 %v1831
    %v2068 = vunpack.c.h.b16 %v1831
    %v2069 = vunpack.c.l.b16 %v1832
    %v2070 = vunpack.c.h.b16 %v1832
    %v2071 = vunpack.c.l.b16 %v1833
    %v2072 = vunpack.c.h.b16 %v1833
    %v2073 = vunpack.c.l.b16 %v1834
    %v2074 = vunpack.c.h.b16 %v1834
    %v2075 = vunpack.c.l.b16 %v1835
    %v2076 = vunpack.c.h.b16 %v1835
    %v2077 = vunpack.c.l.b16 %v1836
    %v2078 = vunpack.c.h.b16 %v1836
    %v2079 = vunpack.c.l.b16 %v1837
    %v2080 = vunpack.c.h.b16 %v1837
    %v2081 = vunpack.c.l.b16 %v1838
    %v2082 = vunpack.c.h.b16 %v1838
    %v2083 = vunpack.c.l.b16 %v1839
    %v2084 = vunpack.c.h.b16 %v1839
    %v2085 = vunpack.c.l.b16 %v1840
    %v2086 = vunpack.c.h.b16 %v1840
    %v2087 = vunpack.c.l.b16 %v1841
    %v2088 = vunpack.c.h.b16 %v1841
    %v2089 = vunpack.c.l.b16 %v1842
    %v2090 = vunpack.c.h.b16 %v1842
    %v2091 = vunpack.c.l.b16 %v1843
    %v2092 = vunpack.c.h.b16 %v1843
    %v2093 = vunpack.c.l.b16 %v1844
    %v2094 = vunpack.c.h.b16 %v1844
    %v2095 = vunpack.c.l.b16 %v1845
    %v2096 = vunpack.c.h.b16 %v1845
    %v2097 = vunpack.c.l.b16 %v1846
    %v2098 = vunpack.c.h.b16 %v1846
    %v2099 = vunpack.c.l.b16 %v1847
    %v2100 = vunpack.c.h.b16 %v1847
    %v2101 = vunpack.c.l.b16 %v1848
    %v2102 = vunpack.c.h.b16 %v1848
    %v2103 = vunpack.c.l.b16 %v1849
    %v2104 = vunpack.c.h.b16 %v1849
    %v2105 = vunpack.c.l.b16 %v1850
    %v2106 = vunpack.c.h.b16 %v1850
    %v2107 = vunpack.c.l.b16 %v1851
    %v2108 = vunpack.c.h.b16 %v1851
    %v2109 = vunpack.c.l.b16 %v1852
    %v2110 = vunpack.c.h.b16 %v1852
    %v2111 = vunpack.c.l.b16 %v1853
    %v2112 = vunpack.c.h.b16 %v1853
    %v2113 = vunpack.c.l.b16 %v1854
    %v2114 = vunpack.c.h.b16 %v1854
    %v2115 = vunpack.c.l.b16 %v1855
    %v2116 = vunpack.c.h.b16 %v1855
    %v2117 = vunpack.c.l.b16 %v1856
    %v2118 = vunpack.c.h.b16 %v1856
    %v2119 = vunpack.c.l.b16 %v1857
    %v2120 = vunpack.c.h.b16 %v1857
    %v2121 = vunpack.c.l.b16 %v1858
    %v2122 = vunpack.c.h.b16 %v1858
    %v2123 = vunpack.c.l.b16 %v1859
    %v2124 = vunpack.c.h.b16 %v1859
    %v2125 = vunpack.c.l.b16 %v1860
    %v2126 = vunpack.c.h.b16 %v1860
    %v2127 = vunpack.c.l.b16 %v1861
    %v2128 = vunpack.c.h.b16 %v1861
    %v2129 = vunpack.c.l.b16 %v1862
    %v2130 = vunpack.c.h.b16 %v1862
    %v2131 = vunpack.c.l.b16 %v1863
    %v2132 = vunpack.c.h.b16 %v1863
    %v2133 = vunpack.c.l.b16 %v1864
    %v2134 = vunpack.c.h.b16 %v1864
    %v2135 = vunpack.c.l.b16 %v1865
    %v2136 = vunpack.c.h.b16 %v1865
    %v2137 = vunpack.c.l.b16 %v1866
    %v2138 = vunpack.c.h.b16 %v1866
    %v2139 = vunpack.c.l.b16 %v1867
    %v2140 = vunpack.c.h.b16 %v1867
    %v2141 = vunpack.c.l.b16 %v1868
    %v2142 = vunpack.c.h.b16 %v1868
    %v2143 = vunpack.c.l.b16 %v1869
    %v2144 = vunpack.c.h.b16 %v1869
    %v2145 = vunpack.c.l.b16 %v1870
    %v2146 = vunpack.c.h.b16 %v1870
    %v2147 = vunpack.c.l.b16 %v1871
    %v2148 = vunpack.c.h.b16 %v1871
    %v2149 = vunpack.c.l.b16 %v1872
    %v2150 = vunpack.c.h.b16 %v1872
    %v2151 = vunpack.c.l.b16 %v1873
    %v2152 = vunpack.c.h.b16 %v1873
    %v2153 = vunpack.c.l.b16 %v1874
    %v2154 = vunpack.c.h.b16 %v1874
    %v2155 = vunpack.c.l.b16 %v1875
    %v2156 = vunpack.c.h.b16 %v1875
    %v2157 = vunpack.c.l.b16 %v1876
    %v2158 = vunpack.c.h.b16 %v1876
    %v2159 = vunpack.c.l.b16 %v1877
    %v2160 = vunpack.c.h.b16 %v1877
    %v2161 = vunpack.c.l.b16 %v1878
    %v2162 = vunpack.c.h.b16 %v1878
    %v2163 = vunpack.c.l.b16 %v1879
    %v2164 = vunpack.c.h.b16 %v1879
    %v2165 = vunpack.c.l.b16 %v1880
    %v2166 = vunpack.c.h.b16 %v1880
    %v2167 = vunpack.c.l.b16 %v1881
    %v2168 = vunpack.c.h.b16 %v1881
    %v2169 = vunpack.c.l.b16 %v1882
    %v2170 = vunpack.c.h.b16 %v1882
    %v2171 = vpack.c.b16 %v1985, %v1979
    %v2172 = vpack.c.b16 %v1986, %v1980
    %v2173 = vpack.c.b16 %v1987, %v1981
    %v2174 = vpack.c.b16 %v1988, %v1982
    %v2175 = vpack.c.b16 %v1989, %v1983
    %v2176 = vpack.c.b16 %v1990, %v1984
    %v2177 = vpack.c.b16 %v1997, %v1991
    %v2178 = vpack.c.b16 %v1998, %v1992
    %v2179 = vpack.c.b16 %v1999, %v1993
    %v2180 = vpack.c.b16 %v2000, %v1994
    %v2181 = vpack.c.b16 %v2001, %v1995
    %v2182 = vpack.c.b16 %v2002, %v1996
    %v2183 = vpack.c.b16 %v2009, %v2003
    %v2184 = vpack.c.b16 %v2010, %v2004
    %v2185 = vpack.c.b16 %v2011, %v2005
    %v2186 = vpack.c.b16 %v2012, %v2006
    %v2187 = vpack.c.b16 %v2013, %v2007
    %v2188 = vpack.c.b16 %v2014, %v2008
    %v2189 = vpack.c.b16 %v2021, %v2015
    %v2190 = vpack.c.b16 %v2022, %v2016
    %v2191 = vpack.c.b16 %v2023, %v2017
    %v2192 = vpack.c.b16 %v2024, %v2018
    %v2193 = vpack.c.b16 %v2025, %v2019
    %v2194 = vpack.c.b16 %v2026, %v2020
    %v2195 = vpack.c.b16 %v2033, %v2027
    %v2196 = vpack.c.b16 %v2034, %v2028
    %v2197 = vpack.c.b16 %v2035, %v2029
    %v2198 = vpack.c.b16 %v2036, %v2030
    %v2199 = vpack.c.b16 %v2037, %v2031
    %v2200 = vpack.c.b16 %v2038, %v2032
    %v2201 = vpack.c.b16 %v2045, %v2039
    %v2202 = vpack.c.b16 %v2046, %v2040
    %v2203 = vpack.c.b16 %v2047, %v2041
    %v2204 = vpack.c.b16 %v2048, %v2042
    %v2205 = vpack.c.b16 %v2049, %v2043
    %v2206 = vpack.c.b16 %v2050, %v2044
    %v2207 = vpack.c.b16 %v2057, %v2051
    %v2208 = vpack.c.b16 %v2058, %v2052
    %v2209 = vpack.c.b16 %v2059, %v2053
    %v2210 = vpack.c.b16 %v2060, %v2054
    %v2211 = vpack.c.b16 %v2061, %v2055
    %v2212 = vpack.c.b16 %v2062, %v2056
    %v2213 = vpack.c.b16 %v2069, %v2063
    %v2214 = vpack.c.b16 %v2070, %v2064
    %v2215 = vpack.c.b16 %v2071, %v2065
    %v2216 = vpack.c.b16 %v2072, %v2066
    %v2217 = vpack.c.b16 %v2073, %v2067
    %v2218 = vpack.c.b16 %v2074, %v2068
    %v2219 = vpack.c.b16 %v2081, %v2075
    %v2220 = vpack.c.b16 %v2082, %v2076
    %v2221 = vpack.c.b16 %v2083, %v2077
    %v2222 = vpack.c.b16 %v2084, %v2078
    %v2223 = vpack.c.b16 %v2085, %v2079
    %v2224 = vpack.c.b16 %v2086, %v2080
    %v2225 = vpack.c.b16 %v2093, %v2087
    %v2226 = vpack.c.b16 %v2094, %v2088
    %v2227 = vpack.c.b16 %v2095, %v2089
    %v2228 = vpack.c.b16 %v2096, %v2090
    %v2229 = vpack.c.b16 %v2097, %v2091
    %v2230 = vpack.c.b16 %v2098, %v2092
    %v2231 = vpack.c.b16 %v2105, %v2099
    %v2232 = vpack.c.b16 %v2106, %v2100
    %v2233 = vpack.c.b16 %v2107, %v2101
    %v2234 = vpack.c.b16 %v2108, %v2102
    %v2235 = vpack.c.b16 %v2109, %v2103
    %v2236 = vpack.c.b16 %v2110, %v2104
    %v2237 = vpack.c.b16 %v2117, %v2111
    %v2238 = vpack.c.b16 %v2118, %v2112
    %v2239 = vpack.c.b16 %v2119, %v2113
    %v2240 = vpack.c.b16 %v2120, %v2114
    %v2241 = vpack.c.b16 %v2121, %v2115
    %v2242 = vpack.c.b16 %v2122, %v2116
    %v2243 = vpack.c.b16 %v2129, %v2123
    %v2244 = vpack.c.b16 %v2130, %v2124
    %v2245 = vpack.c.b16 %v2131, %v2125
    %v2246 = vpack.c.b16 %v2132, %v2126
    %v2247 = vpack.c.b16 %v2133, %v2127
    %v2248 = vpack.c.b16 %v2134, %v2128
    %v2249 = vpack.c.b16 %v2141, %v2135
    %v2250 = vpack.c.b16 %v2142, %v2136
    %v2251 = vpack.c.b16 %v2143, %v2137
    %v2252 = vpack.c.b16 %v2144, %v2138
    %v2253 = vpack.c.b16 %v2145, %v2139
    %v2254 = vpack.c.b16 %v2146, %v2140
    %v2255 = vpack.c.b16 %v2153, %v2147
    %v2256 = vpack.c.b16 %v2154, %v2148
    %v2257 = vpack.c.b16 %v2155, %v2149
    %v2258 = vpack.c.b16 %v2156, %v2150
    %v2259 = vpack.c.b16 %v2157, %v2151
    %v2260 = vpack.c.b16 %v2158, %v2152
    %v2261 = vpack.c.b16 %v2165, %v2159
    %v2262 = vpack.c.b16 %v2166, %v2160
    %v2263 = vpack.c.b16 %v2167, %v2161
    %v2264 = vpack.c.b16 %v2168, %v2162
    %v2265 = vpack.c.b16 %v2169, %v2163
    %v2266 = vpack.c.b16 %v2170, %v2164
    %2363 = vmatprep.subr.bf16.mxu0 %v2214
    %2364 = vmatpush1.bf16.msra.mxu0 %v2213
    %2365 = vmatprep.subr.bf16.mxu0 %v2208
    %2366 = vmatpush1.bf16.msra.mxu0 %v2207
    %2367 = vmatprep.subr.bf16.mxu0 %v2202
    %2368 = vmatpush1.bf16.msra.mxu0 %v2201
    %2369 = vmatprep.subr.bf16.mxu0 %v2196
    %2370 = vmatpush1.bf16.msra.mxu0 %v2195
    %2371 = vmatprep.subr.bf16.mxu0 %v2190
    %2372 = vmatpush1.bf16.msra.mxu0 %v2189
    %2373 = vmatprep.subr.bf16.mxu0 %v2184
    %2374 = vmatpush1.bf16.msra.mxu0 %v2183
    %2375 = vmatprep.subr.bf16.mxu0 %v2178
    %2376 = vmatpush1.bf16.msra.mxu0 %v2177
    %2377 = vmatprep.subr.bf16.mxu0 %v2172
    %2378 = vmatpush1.bf16.msra.mxu0 %v2171
    %2379 = vmatprep.subr.bf16.mxu0 %v2262
    %2380 = vmatpush2.bf16.msra.mxu0 %v2261
    %2381 = vmatprep.subr.bf16.mxu0 %v2256
    %2382 = vmatpush2.bf16.msra.mxu0 %v2255
    %2383 = vmatprep.subr.bf16.mxu0 %v2250
    %2384 = vmatpush2.bf16.msra.mxu0 %v2249
    %2385 = vmatprep.subr.bf16.mxu0 %v2244
    %2386 = vmatpush2.bf16.msra.mxu0 %v2243
    %2387 = vmatprep.subr.bf16.mxu0 %v2238
    %2388 = vmatpush2.bf16.msra.mxu0 %v2237
    %2389 = vmatprep.subr.bf16.mxu0 %v2232
    %2390 = vmatpush2.bf16.msra.mxu0 %v2231
    %2391 = vmatprep.subr.bf16.mxu0 %v2226
    %2392 = vmatpush2.bf16.msra.mxu0 %v2225
    %2393 = vmatprep.subr.bf16.mxu0 %v2220
    %2394 = vmatpush2.bf16.msra.mxu0 %v2219
    %2395 = vmatprep.mubr.bf16.mxu0 %v1786
    %2396 = vmatmul.mubr.bf16.gmra.mxu0 %v1785
    %v2397 = vpop.f32.mrf.mxu0
    %v2398 = vadd.f32 0.0, %v2397
    %v2399 = vpop.f32.mrf.mxu0
    %v2400 = vadd.f32 0.0, %v2399
    %v2401 = vpop.f32.mrf.mxu0
    %v2402 = vpop.f32.mrf.mxu0
    %2403 = vdwg.mxu0
    %2404 = vmatprep.subr.bf16.mxu0 %v2216
    %2405 = vmatpush1.bf16.msra.mxu0 %v2215
    %2406 = vmatprep.subr.bf16.mxu0 %v2210
    %2407 = vmatpush1.bf16.msra.mxu0 %v2209
    %2408 = vmatprep.subr.bf16.mxu0 %v2204
    %2409 = vmatpush1.bf16.msra.mxu0 %v2203
    %2410 = vmatprep.subr.bf16.mxu0 %v2198
    %2411 = vmatpush1.bf16.msra.mxu0 %v2197
    %2412 = vmatprep.subr.bf16.mxu0 %v2192
    %2413 = vmatpush1.bf16.msra.mxu0 %v2191
    %2414 = vmatprep.subr.bf16.mxu0 %v2186
    %2415 = vmatpush1.bf16.msra.mxu0 %v2185
    %2416 = vmatprep.subr.bf16.mxu0 %v2180
    %2417 = vmatpush1.bf16.msra.mxu0 %v2179
    %2418 = vmatprep.subr.bf16.mxu0 %v2174
    %2419 = vmatpush1.bf16.msra.mxu0 %v2173
    %2420 = vmatprep.subr.bf16.mxu0 %v2264
    %2421 = vmatpush2.bf16.msra.mxu0 %v2263
    %2422 = vmatprep.subr.bf16.mxu0 %v2258
    %2423 = vmatpush2.bf16.msra.mxu0 %v2257
    %2424 = vmatprep.subr.bf16.mxu0 %v2252
    %2425 = vmatpush2.bf16.msra.mxu0 %v2251
    %2426 = vmatprep.subr.bf16.mxu0 %v2246
    %2427 = vmatpush2.bf16.msra.mxu0 %v2245
    %2428 = vmatprep.subr.bf16.mxu0 %v2240
    %2429 = vmatpush2.bf16.msra.mxu0 %v2239
    %2430 = vmatprep.subr.bf16.mxu0 %v2234
    %2431 = vmatpush2.bf16.msra.mxu0 %v2233
    %2432 = vmatprep.subr.bf16.mxu0 %v2228
    %2433 = vmatpush2.bf16.msra.mxu0 %v2227
    %2434 = vmatprep.subr.bf16.mxu0 %v2222
    %2435 = vmatpush2.bf16.msra.mxu0 %v2221
    %2436 = vmatprep.mubr.bf16.mxu0 %v1786
    %2437 = vmatmul.mubr.bf16.gmra.mxu0 %v1785
    %v2438 = vpop.f32.mrf.mxu0
    %v2439 = vadd.f32 0.0, %v2438
    %v2440 = vpop.f32.mrf.mxu0
    %v2441 = vadd.f32 0.0, %v2440
    %v2442 = vpop.f32.mrf.mxu0
    %v2443 = vpop.f32.mrf.mxu0
    %2444 = vdwg.mxu0
    %2445 = vmatprep.subr.bf16.mxu0 %v2218
    %2446 = vmatpush1.bf16.msra.mxu0 %v2217
    %2447 = vmatprep.subr.bf16.mxu0 %v2212
    %2448 = vmatpush1.bf16.msra.mxu0 %v2211
    %2449 = vmatprep.subr.bf16.mxu0 %v2206
    %2450 = vmatpush1.bf16.msra.mxu0 %v2205
    %2451 = vmatprep.subr.bf16.mxu0 %v2200
    %2452 = vmatpush1.bf16.msra.mxu0 %v2199
    %2453 = vmatprep.subr.bf16.mxu0 %v2194
    %2454 = vmatpush1.bf16.msra.mxu0 %v2193
    %2455 = vmatprep.subr.bf16.mxu0 %v2188
    %2456 = vmatpush1.bf16.msra.mxu0 %v2187
    %2457 = vmatprep.subr.bf16.mxu0 %v2182
    %2458 = vmatpush1.bf16.msra.mxu0 %v2181
    %2459 = vmatprep.subr.bf16.mxu0 %v2176
    %2460 = vmatpush1.bf16.msra.mxu0 %v2175
    %2461 = vmatprep.subr.bf16.mxu0 %v2266
    %2462 = vmatpush2.bf16.msra.mxu0 %v2265
    %2463 = vmatprep.subr.bf16.mxu0 %v2260
    %2464 = vmatpush2.bf16.msra.mxu0 %v2259
    %2465 = vmatprep.subr.bf16.mxu0 %v2254
    %2466 = vmatpush2.bf16.msra.mxu0 %v2253
    %2467 = vmatprep.subr.bf16.mxu0 %v2248
    %2468 = vmatpush2.bf16.msra.mxu0 %v2247
    %2469 = vmatprep.subr.bf16.mxu0 %v2242
    %2470 = vmatpush2.bf16.msra.mxu0 %v2241
    %2471 = vmatprep.subr.bf16.mxu0 %v2236
    %2472 = vmatpush2.bf16.msra.mxu0 %v2235
    %2473 = vmatprep.subr.bf16.mxu0 %v2230
    %2474 = vmatpush2.bf16.msra.mxu0 %v2229
    %2475 = vmatprep.subr.bf16.mxu0 %v2224
    %2476 = vmatpush2.bf16.msra.mxu0 %v2223
    %2477 = vmatprep.mubr.bf16.mxu0 %v1786
    %2478 = vmatmul.mubr.bf16.gmra.mxu0 %v1785
    %v2479 = vpop.f32.mrf.mxu0
    %v2480 = vadd.f32 0.0, %v2479
    %v2481 = vpop.f32.mrf.mxu0
    %v2482 = vadd.f32 0.0, %v2481
    %v2483 = vpop.f32.mrf.mxu0
    %v2484 = vpop.f32.mrf.mxu0
    %2485 = vdwg.mxu0
    %v2490 = vrot.slane %v2398, 7
    %v2491 = vrot.slane %v2400, 7
    %v2492 = vrot.slane %v2439, 7
    %v2493 = vrot.slane %v2441, 7
    %v2498 = vadd.f32 %v904, %v2490
    %v2499 = vadd.f32 %v906, %v2491
    %v2500 = vadd.f32 %v945, %v2492
    %v2501 = vadd.f32 %v947, %v2493
    %v2502 = vxor.u32 %v2498, 2147483648
    %v2503 = vxor.u32 %v2499, 2147483648
    %v2504 = vxor.u32 %v2500, 2147483648
    %v2505 = vxor.u32 %v2501, 2147483648
    %v2506 = vmul.f32 %v2502, 1.442695
    %v2507 = vpow.pop %v2506
    %v2508 = vmul.f32 %v2503, 1.442695
    %v2509 = vpow.pop %v2508
    %v2510 = vmul.f32 %v2504, 1.442695
    %v2511 = vpow.pop %v2510
    %v2512 = vmul.f32 %v2505, 1.442695
    %v2513 = vpow.pop %v2512
    %v2514 = vadd.f32 %v2507, 1.0
    %v2515 = vadd.f32 %v2509, 1.0
    %v2516 = vadd.f32 %v2511, 1.0
    %v2517 = vadd.f32 %v2513, 1.0
    %v2518 = vrcp.pop %v2514
    %v2519 = vmul.f32 1.0, %v2518
    %v2520 = vrcp.pop %v2515
    %v2521 = vmul.f32 1.0, %v2520
    %v2522 = vrcp.pop %v2516
    %v2523 = vmul.f32 1.0, %v2522
    %v2524 = vrcp.pop %v2517
    %v2525 = vmul.f32 1.0, %v2524
    %v2526 = vadd.f32 %v2480, %v1738
    %v2527 = vadd.f32 %v2482, %v1742
    %v2530 = vrot.slane %v2526, 7
    %v2531 = vrot.slane %v2527, 7
    %v2534 = vmul.f32 %v2519, %v2530
    %v2535 = vmul.f32 %v2521, %v2531
    %v2536 = vadd.f32 %v986, %v2534
    %v2537 = vadd.f32 %v988, %v2535
    %v2538 = vtanh.pop %v2536
    %v2539 = vtanh.pop %v2537
    %v2540 = vsub.f32 1.0, %v2523
    %v2541 = vsub.f32 1.0, %v2525
    %v2542 = vmul.f32 %v2540, %v2538
    %v2543 = vmul.f32 %v2541, %v2539
    %v2544 = vrot.slane %v1759, 7
    %v2545 = vrot.slane %v1760, 7
    %v2548 = vmul.f32 %v2523, %v2544
    %v2549 = vmul.f32 %v2525, %v2545
    %v2550 = vadd.f32 %v2542, %v2548
    %v2551 = vadd.f32 %v2543, %v2549
    %v2554 = vcombine.low %v2550, %v2551
    %v2556 = vunpack.c.l.s4 1966171168
    %v2557 = vunpack.c.0.s8 %v2556
    %v2558 = vlaneseq
    %v2559 = vshrl.u32 %v2558, 7
    %v2560 = vsub.s32 %v2557, %v2559
    %v2561 = vrot.slane %v2554, %v2560
    %v2562 = vcombine.high %v2561, %v2561
    %v2564 = vunpack.c.l.s4 1966171168
    %v2565 = vunpack.c.0.s8 %v2564
    %v2566 = vlaneseq
    %v2567 = vshrl.u32 %v2566, 7
    %v2568 = vsub.s32 %v2565, %v2567
    %v2569 = vrot.slane %v2562, %v2568
    %s2571 = scalar_lea.vmem [#allocation10], 1
    %2572 = vst.msk [vmem:[%s2571] ss:$8 sm:$0x3] %vm1782, %v2569
    %2573 = vst.msk [vmem:[%s2571] ss:$8 sm:$0x0] %vm1782, %v2569
    %v2574 = vpack.c.bf16 %v2550, %v2550
    %v2575 = vpack.c.bf16 %v2551, %v2551
    %v2576 = vld [vmem:[#allocation9] sm:$0xff]
    %v2577 = vld [vmem:[#allocation9 + $0x8] sm:$0xff]
    %v2578 = vld [vmem:[#allocation9 + $0x10] sm:$0xff]
    %v2579 = vld [vmem:[#allocation9 + $0x18] sm:$0xff]
    %v2580 = vld [vmem:[#allocation9 + $0x20] sm:$0xff]
    %v2581 = vld [vmem:[#allocation9 + $0x28] sm:$0xff]
    %v2582 = vld [vmem:[#allocation9 + $0x30] sm:$0xff]
    %v2583 = vld [vmem:[#allocation9 + $0x38] sm:$0xff]
    %v2584 = vld [vmem:[#allocation9 + $0x40] sm:$0xff]
    %v2585 = vld [vmem:[#allocation9 + $0x48] sm:$0xff]
    %v2586 = vld [vmem:[#allocation9 + $0x50] sm:$0xff]
    %v2587 = vld [vmem:[#allocation9 + $0x58] sm:$0xff]
    %v2588 = vld [vmem:[#allocation9 + $0x60] sm:$0xff]
    %v2589 = vld [vmem:[#allocation9 + $0x68] sm:$0xff]
    %v2590 = vld [vmem:[#allocation9 + $0x70] sm:$0xff]
    %v2591 = vld [vmem:[#allocation9 + $0x78] sm:$0xff]
    %v2592 = vld [vmem:[#allocation9 + $0x80] sm:$0xff]
    %v2593 = vld [vmem:[#allocation9 + $0x88] sm:$0xff]
    %v2594 = vld [vmem:[#allocation9 + $0x90] sm:$0xff]
    %v2595 = vld [vmem:[#allocation9 + $0x98] sm:$0xff]
    %v2596 = vld [vmem:[#allocation9 + $0xa0] sm:$0xff]
    %v2597 = vld [vmem:[#allocation9 + $0xa8] sm:$0xff]
    %v2598 = vld [vmem:[#allocation9 + $0xb0] sm:$0xff]
    %v2599 = vld [vmem:[#allocation9 + $0xb8] sm:$0xff]
    %v2600 = vld [vmem:[#allocation9 + $0xc0] sm:$0xff]
    %v2601 = vld [vmem:[#allocation9 + $0xc8] sm:$0xff]
    %v2602 = vld [vmem:[#allocation9 + $0xd0] sm:$0xff]
    %v2603 = vld [vmem:[#allocation9 + $0xd8] sm:$0xff]
    %v2604 = vld [vmem:[#allocation9 + $0xe0] sm:$0xff]
    %v2605 = vld [vmem:[#allocation9 + $0xe8] sm:$0xff]
    %v2606 = vld [vmem:[#allocation9 + $0xf0] sm:$0xff]
    %v2607 = vld [vmem:[#allocation9 + $0xf8] sm:$0xff]
    %v2608 = vld [vmem:[#allocation9 + $0x100] sm:$0xff]
    %v2609 = vld [vmem:[#allocation9 + $0x108] sm:$0xff]
    %v2610 = vld [vmem:[#allocation9 + $0x110] sm:$0xff]
    %v2611 = vld [vmem:[#allocation9 + $0x118] sm:$0xff]
    %v2612 = vld [vmem:[#allocation9 + $0x120] sm:$0xff]
    %v2613 = vld [vmem:[#allocation9 + $0x128] sm:$0xff]
    %v2614 = vld [vmem:[#allocation9 + $0x130] sm:$0xff]
    %v2615 = vld [vmem:[#allocation9 + $0x138] sm:$0xff]
    %v2616 = vld [vmem:[#allocation9 + $0x140] sm:$0xff]
    %v2617 = vld [vmem:[#allocation9 + $0x148] sm:$0xff]
    %v2618 = vld [vmem:[#allocation9 + $0x150] sm:$0xff]
    %v2619 = vld [vmem:[#allocation9 + $0x158] sm:$0xff]
    %v2620 = vld [vmem:[#allocation9 + $0x160] sm:$0xff]
    %v2621 = vld [vmem:[#allocation9 + $0x168] sm:$0xff]
    %v2622 = vld [vmem:[#allocation9 + $0x170] sm:$0xff]
    %v2623 = vld [vmem:[#allocation9 + $0x178] sm:$0xff]
    %v2624 = vld [vmem:[#allocation9 + $0x180] sm:$0xff]
    %v2625 = vld [vmem:[#allocation9 + $0x188] sm:$0xff]
    %v2626 = vld [vmem:[#allocation9 + $0x190] sm:$0xff]
    %v2627 = vld [vmem:[#allocation9 + $0x198] sm:$0xff]
    %v2628 = vld [vmem:[#allocation9 + $0x1a0] sm:$0xff]
    %v2629 = vld [vmem:[#allocation9 + $0x1a8] sm:$0xff]
    %v2630 = vld [vmem:[#allocation9 + $0x1b0] sm:$0xff]
    %v2631 = vld [vmem:[#allocation9 + $0x1b8] sm:$0xff]
    %v2632 = vld [vmem:[#allocation9 + $0x1c0] sm:$0xff]
    %v2633 = vld [vmem:[#allocation9 + $0x1c8] sm:$0xff]
    %v2634 = vld [vmem:[#allocation9 + $0x1d0] sm:$0xff]
    %v2635 = vld [vmem:[#allocation9 + $0x1d8] sm:$0xff]
    %v2636 = vld [vmem:[#allocation9 + $0x1e0] sm:$0xff]
    %v2637 = vld [vmem:[#allocation9 + $0x1e8] sm:$0xff]
    %v2638 = vld [vmem:[#allocation9 + $0x1f0] sm:$0xff]
    %v2639 = vld [vmem:[#allocation9 + $0x1f8] sm:$0xff]
    %v2640 = vld [vmem:[#allocation9 + $0x200] sm:$0xff]
    %v2641 = vld [vmem:[#allocation9 + $0x208] sm:$0xff]
    %v2642 = vld [vmem:[#allocation9 + $0x210] sm:$0xff]
    %v2643 = vld [vmem:[#allocation9 + $0x218] sm:$0xff]
    %v2644 = vld [vmem:[#allocation9 + $0x220] sm:$0xff]
    %v2645 = vld [vmem:[#allocation9 + $0x228] sm:$0xff]
    %v2646 = vld [vmem:[#allocation9 + $0x230] sm:$0xff]
    %v2647 = vld [vmem:[#allocation9 + $0x238] sm:$0xff]
    %v2648 = vld [vmem:[#allocation9 + $0x240] sm:$0xff]
    %v2649 = vld [vmem:[#allocation9 + $0x248] sm:$0xff]
    %v2650 = vld [vmem:[#allocation9 + $0x250] sm:$0xff]
    %v2651 = vld [vmem:[#allocation9 + $0x258] sm:$0xff]
    %v2652 = vld [vmem:[#allocation9 + $0x260] sm:$0xff]
    %v2653 = vld [vmem:[#allocation9 + $0x268] sm:$0xff]
    %v2654 = vld [vmem:[#allocation9 + $0x270] sm:$0xff]
    %v2655 = vld [vmem:[#allocation9 + $0x278] sm:$0xff]
    %v2656 = vld [vmem:[#allocation9 + $0x280] sm:$0xff]
    %v2657 = vld [vmem:[#allocation9 + $0x288] sm:$0xff]
    %v2658 = vld [vmem:[#allocation9 + $0x290] sm:$0xff]
    %v2659 = vld [vmem:[#allocation9 + $0x298] sm:$0xff]
    %v2660 = vld [vmem:[#allocation9 + $0x2a0] sm:$0xff]
    %v2661 = vld [vmem:[#allocation9 + $0x2a8] sm:$0xff]
    %v2662 = vld [vmem:[#allocation9 + $0x2b0] sm:$0xff]
    %v2663 = vld [vmem:[#allocation9 + $0x2b8] sm:$0xff]
    %v2664 = vld [vmem:[#allocation9 + $0x2c0] sm:$0xff]
    %v2665 = vld [vmem:[#allocation9 + $0x2c8] sm:$0xff]
    %v2666 = vld [vmem:[#allocation9 + $0x2d0] sm:$0xff]
    %v2667 = vld [vmem:[#allocation9 + $0x2d8] sm:$0xff]
    %v2668 = vld [vmem:[#allocation9 + $0x2e0] sm:$0xff]
    %v2669 = vld [vmem:[#allocation9 + $0x2e8] sm:$0xff]
    %v2670 = vld [vmem:[#allocation9 + $0x2f0] sm:$0xff]
    %v2671 = vld [vmem:[#allocation9 + $0x2f8] sm:$0xff]
    %v2673 = vshrl.u32 %v2574, 16
    %v2676 = vshrl.u32 %v2575, 16
    %v2776 = vunpack.c.l.b16 %v2576
    %v2777 = vunpack.c.h.b16 %v2576
    %v2778 = vunpack.c.l.b16 %v2577
    %v2779 = vunpack.c.h.b16 %v2577
    %v2780 = vunpack.c.l.b16 %v2578
    %v2781 = vunpack.c.h.b16 %v2578
    %v2782 = vunpack.c.l.b16 %v2579
    %v2783 = vunpack.c.h.b16 %v2579
    %v2784 = vunpack.c.l.b16 %v2580
    %v2785 = vunpack.c.h.b16 %v2580
    %v2786 = vunpack.c.l.b16 %v2581
    %v2787 = vunpack.c.h.b16 %v2581
    %v2788 = vunpack.c.l.b16 %v2582
    %v2789 = vunpack.c.h.b16 %v2582
    %v2790 = vunpack.c.l.b16 %v2583
    %v2791 = vunpack.c.h.b16 %v2583
    %v2792 = vunpack.c.l.b16 %v2584
    %v2793 = vunpack.c.h.b16 %v2584
    %v2794 = vunpack.c.l.b16 %v2585
    %v2795 = vunpack.c.h.b16 %v2585
    %v2796 = vunpack.c.l.b16 %v2586
    %v2797 = vunpack.c.h.b16 %v2586
    %v2798 = vunpack.c.l.b16 %v2587
    %v2799 = vunpack.c.h.b16 %v2587
    %v2800 = vunpack.c.l.b16 %v2588
    %v2801 = vunpack.c.h.b16 %v2588
    %v2802 = vunpack.c.l.b16 %v2589
    %v2803 = vunpack.c.h.b16 %v2589
    %v2804 = vunpack.c.l.b16 %v2590
    %v2805 = vunpack.c.h.b16 %v2590
    %v2806 = vunpack.c.l.b16 %v2591
    %v2807 = vunpack.c.h.b16 %v2591
    %v2808 = vunpack.c.l.b16 %v2592
    %v2809 = vunpack.c.h.b16 %v2592
    %v2810 = vunpack.c.l.b16 %v2593
    %v2811 = vunpack.c.h.b16 %v2593
    %v2812 = vunpack.c.l.b16 %v2594
    %v2813 = vunpack.c.h.b16 %v2594
    %v2814 = vunpack.c.l.b16 %v2595
    %v2815 = vunpack.c.h.b16 %v2595
    %v2816 = vunpack.c.l.b16 %v2596
    %v2817 = vunpack.c.h.b16 %v2596
    %v2818 = vunpack.c.l.b16 %v2597
    %v2819 = vunpack.c.h.b16 %v2597
    %v2820 = vunpack.c.l.b16 %v2598
    %v2821 = vunpack.c.h.b16 %v2598
    %v2822 = vunpack.c.l.b16 %v2599
    %v2823 = vunpack.c.h.b16 %v2599
    %v2824 = vunpack.c.l.b16 %v2600
    %v2825 = vunpack.c.h.b16 %v2600
    %v2826 = vunpack.c.l.b16 %v2601
    %v2827 = vunpack.c.h.b16 %v2601
    %v2828 = vunpack.c.l.b16 %v2602
    %v2829 = vunpack.c.h.b16 %v2602
    %v2830 = vunpack.c.l.b16 %v2603
    %v2831 = vunpack.c.h.b16 %v2603
    %v2832 = vunpack.c.l.b16 %v2604
    %v2833 = vunpack.c.h.b16 %v2604
    %v2834 = vunpack.c.l.b16 %v2605
    %v2835 = vunpack.c.h.b16 %v2605
    %v2836 = vunpack.c.l.b16 %v2606
    %v2837 = vunpack.c.h.b16 %v2606
    %v2838 = vunpack.c.l.b16 %v2607
    %v2839 = vunpack.c.h.b16 %v2607
    %v2840 = vunpack.c.l.b16 %v2608
    %v2841 = vunpack.c.h.b16 %v2608
    %v2842 = vunpack.c.l.b16 %v2609
    %v2843 = vunpack.c.h.b16 %v2609
    %v2844 = vunpack.c.l.b16 %v2610
    %v2845 = vunpack.c.h.b16 %v2610
    %v2846 = vunpack.c.l.b16 %v2611
    %v2847 = vunpack.c.h.b16 %v2611
    %v2848 = vunpack.c.l.b16 %v2612
    %v2849 = vunpack.c.h.b16 %v2612
    %v2850 = vunpack.c.l.b16 %v2613
    %v2851 = vunpack.c.h.b16 %v2613
    %v2852 = vunpack.c.l.b16 %v2614
    %v2853 = vunpack.c.h.b16 %v2614
    %v2854 = vunpack.c.l.b16 %v2615
    %v2855 = vunpack.c.h.b16 %v2615
    %v2856 = vunpack.c.l.b16 %v2616
    %v2857 = vunpack.c.h.b16 %v2616
    %v2858 = vunpack.c.l.b16 %v2617
    %v2859 = vunpack.c.h.b16 %v2617
    %v2860 = vunpack.c.l.b16 %v2618
    %v2861 = vunpack.c.h.b16 %v2618
    %v2862 = vunpack.c.l.b16 %v2619
    %v2863 = vunpack.c.h.b16 %v2619
    %v2864 = vunpack.c.l.b16 %v2620
    %v2865 = vunpack.c.h.b16 %v2620
    %v2866 = vunpack.c.l.b16 %v2621
    %v2867 = vunpack.c.h.b16 %v2621
    %v2868 = vunpack.c.l.b16 %v2622
    %v2869 = vunpack.c.h.b16 %v2622
    %v2870 = vunpack.c.l.b16 %v2623
    %v2871 = vunpack.c.h.b16 %v2623
    %v2872 = vunpack.c.l.b16 %v2624
    %v2873 = vunpack.c.h.b16 %v2624
    %v2874 = vunpack.c.l.b16 %v2625
    %v2875 = vunpack.c.h.b16 %v2625
    %v2876 = vunpack.c.l.b16 %v2626
    %v2877 = vunpack.c.h.b16 %v2626
    %v2878 = vunpack.c.l.b16 %v2627
    %v2879 = vunpack.c.h.b16 %v2627
    %v2880 = vunpack.c.l.b16 %v2628
    %v2881 = vunpack.c.h.b16 %v2628
    %v2882 = vunpack.c.l.b16 %v2629
    %v2883 = vunpack.c.h.b16 %v2629
    %v2884 = vunpack.c.l.b16 %v2630
    %v2885 = vunpack.c.h.b16 %v2630
    %v2886 = vunpack.c.l.b16 %v2631
    %v2887 = vunpack.c.h.b16 %v2631
    %v2888 = vunpack.c.l.b16 %v2632
    %v2889 = vunpack.c.h.b16 %v2632
    %v2890 = vunpack.c.l.b16 %v2633
    %v2891 = vunpack.c.h.b16 %v2633
    %v2892 = vunpack.c.l.b16 %v2634
    %v2893 = vunpack.c.h.b16 %v2634
    %v2894 = vunpack.c.l.b16 %v2635
    %v2895 = vunpack.c.h.b16 %v2635
    %v2896 = vunpack.c.l.b16 %v2636
    %v2897 = vunpack.c.h.b16 %v2636
    %v2898 = vunpack.c.l.b16 %v2637
    %v2899 = vunpack.c.h.b16 %v2637
    %v2900 = vunpack.c.l.b16 %v2638
    %v2901 = vunpack.c.h.b16 %v2638
    %v2902 = vunpack.c.l.b16 %v2639
    %v2903 = vunpack.c.h.b16 %v2639
    %v2904 = vunpack.c.l.b16 %v2640
    %v2905 = vunpack.c.h.b16 %v2640
    %v2906 = vunpack.c.l.b16 %v2641
    %v2907 = vunpack.c.h.b16 %v2641
    %v2908 = vunpack.c.l.b16 %v2642
    %v2909 = vunpack.c.h.b16 %v2642
    %v2910 = vunpack.c.l.b16 %v2643
    %v2911 = vunpack.c.h.b16 %v2643
    %v2912 = vunpack.c.l.b16 %v2644
    %v2913 = vunpack.c.h.b16 %v2644
    %v2914 = vunpack.c.l.b16 %v2645
    %v2915 = vunpack.c.h.b16 %v2645
    %v2916 = vunpack.c.l.b16 %v2646
    %v2917 = vunpack.c.h.b16 %v2646
    %v2918 = vunpack.c.l.b16 %v2647
    %v2919 = vunpack.c.h.b16 %v2647
    %v2920 = vunpack.c.l.b16 %v2648
    %v2921 = vunpack.c.h.b16 %v2648
    %v2922 = vunpack.c.l.b16 %v2649
    %v2923 = vunpack.c.h.b16 %v2649
    %v2924 = vunpack.c.l.b16 %v2650
    %v2925 = vunpack.c.h.b16 %v2650
    %v2926 = vunpack.c.l.b16 %v2651
    %v2927 = vunpack.c.h.b16 %v2651
    %v2928 = vunpack.c.l.b16 %v2652
    %v2929 = vunpack.c.h.b16 %v2652
    %v2930 = vunpack.c.l.b16 %v2653
    %v2931 = vunpack.c.h.b16 %v2653
    %v2932 = vunpack.c.l.b16 %v2654
    %v2933 = vunpack.c.h.b16 %v2654
    %v2934 = vunpack.c.l.b16 %v2655
    %v2935 = vunpack.c.h.b16 %v2655
    %v2936 = vunpack.c.l.b16 %v2656
    %v2937 = vunpack.c.h.b16 %v2656
    %v2938 = vunpack.c.l.b16 %v2657
    %v2939 = vunpack.c.h.b16 %v2657
    %v2940 = vunpack.c.l.b16 %v2658
    %v2941 = vunpack.c.h.b16 %v2658
    %v2942 = vunpack.c.l.b16 %v2659
    %v2943 = vunpack.c.h.b16 %v2659
    %v2944 = vunpack.c.l.b16 %v2660
    %v2945 = vunpack.c.h.b16 %v2660
    %v2946 = vunpack.c.l.b16 %v2661
    %v2947 = vunpack.c.h.b16 %v2661
    %v2948 = vunpack.c.l.b16 %v2662
    %v2949 = vunpack.c.h.b16 %v2662
    %v2950 = vunpack.c.l.b16 %v2663
    %v2951 = vunpack.c.h.b16 %v2663
    %v2952 = vunpack.c.l.b16 %v2664
    %v2953 = vunpack.c.h.b16 %v2664
    %v2954 = vunpack.c.l.b16 %v2665
    %v2955 = vunpack.c.h.b16 %v2665
    %v2956 = vunpack.c.l.b16 %v2666
    %v2957 = vunpack.c.h.b16 %v2666
    %v2958 = vunpack.c.l.b16 %v2667
    %v2959 = vunpack.c.h.b16 %v2667
    %v2960 = vunpack.c.l.b16 %v2668
    %v2961 = vunpack.c.h.b16 %v2668
    %v2962 = vunpack.c.l.b16 %v2669
    %v2963 = vunpack.c.h.b16 %v2669
    %v2964 = vunpack.c.l.b16 %v2670
    %v2965 = vunpack.c.h.b16 %v2670
    %v2966 = vunpack.c.l.b16 %v2671
    %v2967 = vunpack.c.h.b16 %v2671
    %v2968 = vpack.c.b16 %v2782, %v2776
    %v2969 = vpack.c.b16 %v2783, %v2777
    %v2970 = vpack.c.b16 %v2784, %v2778
    %v2971 = vpack.c.b16 %v2785, %v2779
    %v2972 = vpack.c.b16 %v2786, %v2780
    %v2973 = vpack.c.b16 %v2787, %v2781
    %v2974 = vpack.c.b16 %v2794, %v2788
    %v2975 = vpack.c.b16 %v2795, %v2789
    %v2976 = vpack.c.b16 %v2796, %v2790
    %v2977 = vpack.c.b16 %v2797, %v2791
    %v2978 = vpack.c.b16 %v2798, %v2792
    %v2979 = vpack.c.b16 %v2799, %v2793
    %v2980 = vpack.c.b16 %v2806, %v2800
    %v2981 = vpack.c.b16 %v2807, %v2801
    %v2982 = vpack.c.b16 %v2808, %v2802
    %v2983 = vpack.c.b16 %v2809, %v2803
    %v2984 = vpack.c.b16 %v2810, %v2804
    %v2985 = vpack.c.b16 %v2811, %v2805
    %v2986 = vpack.c.b16 %v2818, %v2812
    %v2987 = vpack.c.b16 %v2819, %v2813
    %v2988 = vpack.c.b16 %v2820, %v2814
    %v2989 = vpack.c.b16 %v2821, %v2815
    %v2990 = vpack.c.b16 %v2822, %v2816
    %v2991 = vpack.c.b16 %v2823, %v2817
    %v2992 = vpack.c.b16 %v2830, %v2824
    %v2993 = vpack.c.b16 %v2831, %v2825
    %v2994 = vpack.c.b16 %v2832, %v2826
    %v2995 = vpack.c.b16 %v2833, %v2827
    %v2996 = vpack.c.b16 %v2834, %v2828
    %v2997 = vpack.c.b16 %v2835, %v2829
    %v2998 = vpack.c.b16 %v2842, %v2836
    %v2999 = vpack.c.b16 %v2843, %v2837
    %v3000 = vpack.c.b16 %v2844, %v2838
    %v3001 = vpack.c.b16 %v2845, %v2839
    %v3002 = vpack.c.b16 %v2846, %v2840
    %v3003 = vpack.c.b16 %v2847, %v2841
    %v3004 = vpack.c.b16 %v2854, %v2848
    %v3005 = vpack.c.b16 %v2855, %v2849
    %v3006 = vpack.c.b16 %v2856, %v2850
    %v3007 = vpack.c.b16 %v2857, %v2851
    %v3008 = vpack.c.b16 %v2858, %v2852
    %v3009 = vpack.c.b16 %v2859, %v2853
    %v3010 = vpack.c.b16 %v2866, %v2860
    %v3011 = vpack.c.b16 %v2867, %v2861
    %v3012 = vpack.c.b16 %v2868, %v2862
    %v3013 = vpack.c.b16 %v2869, %v2863
    %v3014 = vpack.c.b16 %v2870, %v2864
    %v3015 = vpack.c.b16 %v2871, %v2865
    %v3016 = vpack.c.b16 %v2878, %v2872
    %v3017 = vpack.c.b16 %v2879, %v2873
    %v3018 = vpack.c.b16 %v2880, %v2874
    %v3019 = vpack.c.b16 %v2881, %v2875
    %v3020 = vpack.c.b16 %v2882, %v2876
    %v3021 = vpack.c.b16 %v2883, %v2877
    %v3022 = vpack.c.b16 %v2890, %v2884
    %v3023 = vpack.c.b16 %v2891, %v2885
    %v3024 = vpack.c.b16 %v2892, %v2886
    %v3025 = vpack.c.b16 %v2893, %v2887
    %v3026 = vpack.c.b16 %v2894, %v2888
    %v3027 = vpack.c.b16 %v2895, %v2889
    %v3028 = vpack.c.b16 %v2902, %v2896
    %v3029 = vpack.c.b16 %v2903, %v2897
    %v3030 = vpack.c.b16 %v2904, %v2898
    %v3031 = vpack.c.b16 %v2905, %v2899
    %v3032 = vpack.c.b16 %v2906, %v2900
    %v3033 = vpack.c.b16 %v2907, %v2901
    %v3034 = vpack.c.b16 %v2914, %v2908
    %v3035 = vpack.c.b16 %v2915, %v2909
    %v3036 = vpack.c.b16 %v2916, %v2910
    %v3037 = vpack.c.b16 %v2917, %v2911
    %v3038 = vpack.c.b16 %v2918, %v2912
    %v3039 = vpack.c.b16 %v2919, %v2913
    %v3040 = vpack.c.b16 %v2926, %v2920
    %v3041 = vpack.c.b16 %v2927, %v2921
    %v3042 = vpack.c.b16 %v2928, %v2922
    %v3043 = vpack.c.b16 %v2929, %v2923
    %v3044 = vpack.c.b16 %v2930, %v2924
    %v3045 = vpack.c.b16 %v2931, %v2925
    %v3046 = vpack.c.b16 %v2938, %v2932
    %v3047 = vpack.c.b16 %v2939, %v2933
    %v3048 = vpack.c.b16 %v2940, %v2934
    %v3049 = vpack.c.b16 %v2941, %v2935
    %v3050 = vpack.c.b16 %v2942, %v2936
    %v3051 = vpack.c.b16 %v2943, %v2937
    %v3052 = vpack.c.b16 %v2950, %v2944
    %v3053 = vpack.c.b16 %v2951, %v2945
    %v3054 = vpack.c.b16 %v2952, %v2946
    %v3055 = vpack.c.b16 %v2953, %v2947
    %v3056 = vpack.c.b16 %v2954, %v2948
    %v3057 = vpack.c.b16 %v2955, %v2949
    %v3058 = vpack.c.b16 %v2962, %v2956
    %v3059 = vpack.c.b16 %v2963, %v2957
    %v3060 = vpack.c.b16 %v2964, %v2958
    %v3061 = vpack.c.b16 %v2965, %v2959
    %v3062 = vpack.c.b16 %v2966, %v2960
    %v3063 = vpack.c.b16 %v2967, %v2961
    %3160 = vmatprep.subr.bf16.mxu0 %v3011
    %3161 = vmatpush1.bf16.msra.mxu0 %v3010
    %3162 = vmatprep.subr.bf16.mxu0 %v3005
    %3163 = vmatpush1.bf16.msra.mxu0 %v3004
    %3164 = vmatprep.subr.bf16.mxu0 %v2999
    %3165 = vmatpush1.bf16.msra.mxu0 %v2998
    %3166 = vmatprep.subr.bf16.mxu0 %v2993
    %3167 = vmatpush1.bf16.msra.mxu0 %v2992
    %3168 = vmatprep.subr.bf16.mxu0 %v2987
    %3169 = vmatpush1.bf16.msra.mxu0 %v2986
    %3170 = vmatprep.subr.bf16.mxu0 %v2981
    %3171 = vmatpush1.bf16.msra.mxu0 %v2980
    %3172 = vmatprep.subr.bf16.mxu0 %v2975
    %3173 = vmatpush1.bf16.msra.mxu0 %v2974
    %3174 = vmatprep.subr.bf16.mxu0 %v2969
    %3175 = vmatpush1.bf16.msra.mxu0 %v2968
    %3176 = vmatprep.subr.bf16.mxu0 %v3059
    %3177 = vmatpush2.bf16.msra.mxu0 %v3058
    %3178 = vmatprep.subr.bf16.mxu0 %v3053
    %3179 = vmatpush2.bf16.msra.mxu0 %v3052
    %3180 = vmatprep.subr.bf16.mxu0 %v3047
    %3181 = vmatpush2.bf16.msra.mxu0 %v3046
    %3182 = vmatprep.subr.bf16.mxu0 %v3041
    %3183 = vmatpush2.bf16.msra.mxu0 %v3040
    %3184 = vmatprep.subr.bf16.mxu0 %v3035
    %3185 = vmatpush2.bf16.msra.mxu0 %v3034
    %3186 = vmatprep.subr.bf16.mxu0 %v3029
    %3187 = vmatpush2.bf16.msra.mxu0 %v3028
    %3188 = vmatprep.subr.bf16.mxu0 %v3023
    %3189 = vmatpush2.bf16.msra.mxu0 %v3022
    %3190 = vmatprep.subr.bf16.mxu0 %v3017
    %3191 = vmatpush2.bf16.msra.mxu0 %v3016
    %3192 = vmatprep.mubr.bf16.mxu0 %v2676
    %3193 = vmatmul.mubr.bf16.gmra.mxu0 %v2673
    %v3194 = vpop.f32.mrf.mxu0
    %v3195 = vadd.f32 0.0, %v3194
    %v3196 = vpop.f32.mrf.mxu0
    %v3197 = vadd.f32 0.0, %v3196
    %v3198 = vpop.f32.mrf.mxu0
    %v3199 = vpop.f32.mrf.mxu0
    %3200 = vdwg.mxu0
    %3201 = vmatprep.subr.bf16.mxu0 %v3013
    %3202 = vmatpush1.bf16.msra.mxu0 %v3012
    %3203 = vmatprep.subr.bf16.mxu0 %v3007
    %3204 = vmatpush1.bf16.msra.mxu0 %v3006
    %3205 = vmatprep.subr.bf16.mxu0 %v3001
    %3206 = vmatpush1.bf16.msra.mxu0 %v3000
    %3207 = vmatprep.subr.bf16.mxu0 %v2995
    %3208 = vmatpush1.bf16.msra.mxu0 %v2994
    %3209 = vmatprep.subr.bf16.mxu0 %v2989
    %3210 = vmatpush1.bf16.msra.mxu0 %v2988
    %3211 = vmatprep.subr.bf16.mxu0 %v2983
    %3212 = vmatpush1.bf16.msra.mxu0 %v2982
    %3213 = vmatprep.subr.bf16.mxu0 %v2977
    %3214 = vmatpush1.bf16.msra.mxu0 %v2976
    %3215 = vmatprep.subr.bf16.mxu0 %v2971
    %3216 = vmatpush1.bf16.msra.mxu0 %v2970
    %3217 = vmatprep.subr.bf16.mxu0 %v3061
    %3218 = vmatpush2.bf16.msra.mxu0 %v3060
    %3219 = vmatprep.subr.bf16.mxu0 %v3055
    %3220 = vmatpush2.bf16.msra.mxu0 %v3054
    %3221 = vmatprep.subr.bf16.mxu0 %v3049
    %3222 = vmatpush2.bf16.msra.mxu0 %v3048
    %3223 = vmatprep.subr.bf16.mxu0 %v3043
    %3224 = vmatpush2.bf16.msra.mxu0 %v3042
    %3225 = vmatprep.subr.bf16.mxu0 %v3037
    %3226 = vmatpush2.bf16.msra.mxu0 %v3036
    %3227 = vmatprep.subr.bf16.mxu0 %v3031
    %3228 = vmatpush2.bf16.msra.mxu0 %v3030
    %3229 = vmatprep.subr.bf16.mxu0 %v3025
    %3230 = vmatpush2.bf16.msra.mxu0 %v3024
    %3231 = vmatprep.subr.bf16.mxu0 %v3019
    %3232 = vmatpush2.bf16.msra.mxu0 %v3018
    %3233 = vmatprep.mubr.bf16.mxu0 %v2676
    %3234 = vmatmul.mubr.bf16.gmra.mxu0 %v2673
    %v3235 = vpop.f32.mrf.mxu0
    %v3236 = vadd.f32 0.0, %v3235
    %v3237 = vpop.f32.mrf.mxu0
    %v3238 = vadd.f32 0.0, %v3237
    %v3239 = vpop.f32.mrf.mxu0
    %v3240 = vpop.f32.mrf.mxu0
    %3241 = vdwg.mxu0
    %3242 = vmatprep.subr.bf16.mxu0 %v3015
    %3243 = vmatpush1.bf16.msra.mxu0 %v3014
    %3244 = vmatprep.subr.bf16.mxu0 %v3009
    %3245 = vmatpush1.bf16.msra.mxu0 %v3008
    %3246 = vmatprep.subr.bf16.mxu0 %v3003
    %3247 = vmatpush1.bf16.msra.mxu0 %v3002
    %3248 = vmatprep.subr.bf16.mxu0 %v2997
    %3249 = vmatpush1.bf16.msra.mxu0 %v2996
    %3250 = vmatprep.subr.bf16.mxu0 %v2991
    %3251 = vmatpush1.bf16.msra.mxu0 %v2990
    %3252 = vmatprep.subr.bf16.mxu0 %v2985
    %3253 = vmatpush1.bf16.msra.mxu0 %v2984
    %3254 = vmatprep.subr.bf16.mxu0 %v2979
    %3255 = vmatpush1.bf16.msra.mxu0 %v2978
    %3256 = vmatprep.subr.bf16.mxu0 %v2973
    %3257 = vmatpush1.bf16.msra.mxu0 %v2972
    %3258 = vmatprep.subr.bf16.mxu0 %v3063
    %3259 = vmatpush2.bf16.msra.mxu0 %v3062
    %3260 = vmatprep.subr.bf16.mxu0 %v3057
    %3261 = vmatpush2.bf16.msra.mxu0 %v3056
    %3262 = vmatprep.subr.bf16.mxu0 %v3051
    %3263 = vmatpush2.bf16.msra.mxu0 %v3050
    %3264 = vmatprep.subr.bf16.mxu0 %v3045
    %3265 = vmatpush2.bf16.msra.mxu0 %v3044
    %3266 = vmatprep.subr.bf16.mxu0 %v3039
    %3267 = vmatpush2.bf16.msra.mxu0 %v3038
    %3268 = vmatprep.subr.bf16.mxu0 %v3033
    %3269 = vmatpush2.bf16.msra.mxu0 %v3032
    %3270 = vmatprep.subr.bf16.mxu0 %v3027
    %3271 = vmatpush2.bf16.msra.mxu0 %v3026
    %3272 = vmatprep.subr.bf16.mxu0 %v3021
    %3273 = vmatpush2.bf16.msra.mxu0 %v3020
    %3274 = vmatprep.mubr.bf16.mxu0 %v2676
    %3275 = vmatmul.mubr.bf16.gmra.mxu0 %v2673
    %v3276 = vpop.f32.mrf.mxu0
    %v3277 = vadd.f32 0.0, %v3276
    %v3278 = vpop.f32.mrf.mxu0
    %v3279 = vadd.f32 0.0, %v3278
    %v3280 = vpop.f32.mrf.mxu0
    %v3281 = vpop.f32.mrf.mxu0
    %3282 = vdwg.mxu0
    %v3287 = vrot.slane %v3195, 6
    %v3288 = vrot.slane %v3197, 6
    %v3289 = vrot.slane %v3236, 6
    %v3290 = vrot.slane %v3238, 6
    %v3295 = vadd.f32 %v904, %v3287
    %v3296 = vadd.f32 %v906, %v3288
    %v3297 = vadd.f32 %v945, %v3289
    %v3298 = vadd.f32 %v947, %v3290
    %v3299 = vxor.u32 %v3295, 2147483648
    %v3300 = vxor.u32 %v3296, 2147483648
    %v3301 = vxor.u32 %v3297, 2147483648
    %v3302 = vxor.u32 %v3298, 2147483648
    %v3303 = vmul.f32 %v3299, 1.442695
    %v3304 = vpow.pop %v3303
    %v3305 = vmul.f32 %v3300, 1.442695
    %v3306 = vpow.pop %v3305
    %v3307 = vmul.f32 %v3301, 1.442695
    %v3308 = vpow.pop %v3307
    %v3309 = vmul.f32 %v3302, 1.442695
    %v3310 = vpow.pop %v3309
    %v3311 = vadd.f32 %v3304, 1.0
    %v3312 = vadd.f32 %v3306, 1.0
    %v3313 = vadd.f32 %v3308, 1.0
    %v3314 = vadd.f32 %v3310, 1.0
    %v3315 = vrcp.pop %v3311
    %v3316 = vmul.f32 1.0, %v3315
    %v3317 = vrcp.pop %v3312
    %v3318 = vmul.f32 1.0, %v3317
    %v3319 = vrcp.pop %v3313
    %v3320 = vmul.f32 1.0, %v3319
    %v3321 = vrcp.pop %v3314
    %v3322 = vmul.f32 1.0, %v3321
    %v3323 = vadd.f32 %v3277, %v1738
    %v3324 = vadd.f32 %v3279, %v1742
    %v3327 = vrot.slane %v3323, 6
    %v3328 = vrot.slane %v3324, 6
    %v3331 = vmul.f32 %v3316, %v3327
    %v3332 = vmul.f32 %v3318, %v3328
    %v3333 = vadd.f32 %v986, %v3331
    %v3334 = vadd.f32 %v988, %v3332
    %v3335 = vtanh.pop %v3333
    %v3336 = vtanh.pop %v3334
    %v3337 = vsub.f32 1.0, %v3320
    %v3338 = vsub.f32 1.0, %v3322
    %v3339 = vmul.f32 %v3337, %v3335
    %v3340 = vmul.f32 %v3338, %v3336
    %v3341 = vrot.slane %v2550, 7
    %v3342 = vrot.slane %v2551, 7
    %v3345 = vmul.f32 %v3320, %v3341
    %v3346 = vmul.f32 %v3322, %v3342
    %v3347 = vadd.f32 %v3339, %v3345
    %v3348 = vadd.f32 %v3340, %v3346
    %v3351 = vcombine.low %v3347, %v3348
    %v3353 = vunpack.c.l.s4 1966171168
    %v3354 = vunpack.c.0.s8 %v3353
    %v3355 = vlaneseq
    %v3356 = vshrl.u32 %v3355, 7
    %v3357 = vsub.s32 %v3354, %v3356
    %v3358 = vrot.slane %v3351, %v3357
    %v3360 = vunpack.c.l.s4 1966171168
    %v3361 = vunpack.c.0.s8 %v3360
    %v3362 = vlaneseq
    %v3363 = vshrl.u32 %v3362, 7
    %v3364 = vsub.s32 %v3361, %v3363
    %v3365 = vrot.slane %v3358, %v3364
    %v3366 = vcombine.high %v3365, %v3365
    %s3368 = scalar_lea.vmem [#allocation10], 2
    %3369 = vst.msk [vmem:[%s3368] ss:$8 sm:$0x3] %vm1782, %v3366
    %3370 = vst.msk [vmem:[%s3368] ss:$8 sm:$0x0] %vm1782, %v3366
    %v3371 = vpack.c.bf16 %v3347, %v3347
    %v3372 = vpack.c.bf16 %v3348, %v3348
    %v3373 = vld [vmem:[#allocation9] sm:$0xff]
    %v3374 = vld [vmem:[#allocation9 + $0x8] sm:$0xff]
    %v3375 = vld [vmem:[#allocation9 + $0x10] sm:$0xff]
    %v3376 = vld [vmem:[#allocation9 + $0x18] sm:$0xff]
    %v3377 = vld [vmem:[#allocation9 + $0x20] sm:$0xff]
    %v3378 = vld [vmem:[#allocation9 + $0x28] sm:$0xff]
    %v3379 = vld [vmem:[#allocation9 + $0x30] sm:$0xff]
    %v3380 = vld [vmem:[#allocation9 + $0x38] sm:$0xff]
    %v3381 = vld [vmem:[#allocation9 + $0x40] sm:$0xff]
    %v3382 = vld [vmem:[#allocation9 + $0x48] sm:$0xff]
    %v3383 = vld [vmem:[#allocation9 + $0x50] sm:$0xff]
    %v3384 = vld [vmem:[#allocation9 + $0x58] sm:$0xff]
    %v3385 = vld [vmem:[#allocation9 + $0x60] sm:$0xff]
    %v3386 = vld [vmem:[#allocation9 + $0x68] sm:$0xff]
    %v3387 = vld [vmem:[#allocation9 + $0x70] sm:$0xff]
    %v3388 = vld [vmem:[#allocation9 + $0x78] sm:$0xff]
    %v3389 = vld [vmem:[#allocation9 + $0x80] sm:$0xff]
    %v3390 = vld [vmem:[#allocation9 + $0x88] sm:$0xff]
    %v3391 = vld [vmem:[#allocation9 + $0x90] sm:$0xff]
    %v3392 = vld [vmem:[#allocation9 + $0x98] sm:$0xff]
    %v3393 = vld [vmem:[#allocation9 + $0xa0] sm:$0xff]
    %v3394 = vld [vmem:[#allocation9 + $0xa8] sm:$0xff]
    %v3395 = vld [vmem:[#allocation9 + $0xb0] sm:$0xff]
    %v3396 = vld [vmem:[#allocation9 + $0xb8] sm:$0xff]
    %v3397 = vld [vmem:[#allocation9 + $0xc0] sm:$0xff]
    %v3398 = vld [vmem:[#allocation9 + $0xc8] sm:$0xff]
    %v3399 = vld [vmem:[#allocation9 + $0xd0] sm:$0xff]
    %v3400 = vld [vmem:[#allocation9 + $0xd8] sm:$0xff]
    %v3401 = vld [vmem:[#allocation9 + $0xe0] sm:$0xff]
    %v3402 = vld [vmem:[#allocation9 + $0xe8] sm:$0xff]
    %v3403 = vld [vmem:[#allocation9 + $0xf0] sm:$0xff]
    %v3404 = vld [vmem:[#allocation9 + $0xf8] sm:$0xff]
    %v3405 = vld [vmem:[#allocation9 + $0x100] sm:$0xff]
    %v3406 = vld [vmem:[#allocation9 + $0x108] sm:$0xff]
    %v3407 = vld [vmem:[#allocation9 + $0x110] sm:$0xff]
    %v3408 = vld [vmem:[#allocation9 + $0x118] sm:$0xff]
    %v3409 = vld [vmem:[#allocation9 + $0x120] sm:$0xff]
    %v3410 = vld [vmem:[#allocation9 + $0x128] sm:$0xff]
    %v3411 = vld [vmem:[#allocation9 + $0x130] sm:$0xff]
    %v3412 = vld [vmem:[#allocation9 + $0x138] sm:$0xff]
    %v3413 = vld [vmem:[#allocation9 + $0x140] sm:$0xff]
    %v3414 = vld [vmem:[#allocation9 + $0x148] sm:$0xff]
    %v3415 = vld [vmem:[#allocation9 + $0x150] sm:$0xff]
    %v3416 = vld [vmem:[#allocation9 + $0x158] sm:$0xff]
    %v3417 = vld [vmem:[#allocation9 + $0x160] sm:$0xff]
    %v3418 = vld [vmem:[#allocation9 + $0x168] sm:$0xff]
    %v3419 = vld [vmem:[#allocation9 + $0x170] sm:$0xff]
    %v3420 = vld [vmem:[#allocation9 + $0x178] sm:$0xff]
    %v3421 = vld [vmem:[#allocation9 + $0x180] sm:$0xff]
    %v3422 = vld [vmem:[#allocation9 + $0x188] sm:$0xff]
    %v3423 = vld [vmem:[#allocation9 + $0x190] sm:$0xff]
    %v3424 = vld [vmem:[#allocation9 + $0x198] sm:$0xff]
    %v3425 = vld [vmem:[#allocation9 + $0x1a0] sm:$0xff]
    %v3426 = vld [vmem:[#allocation9 + $0x1a8] sm:$0xff]
    %v3427 = vld [vmem:[#allocation9 + $0x1b0] sm:$0xff]
    %v3428 = vld [vmem:[#allocation9 + $0x1b8] sm:$0xff]
    %v3429 = vld [vmem:[#allocation9 + $0x1c0] sm:$0xff]
    %v3430 = vld [vmem:[#allocation9 + $0x1c8] sm:$0xff]
    %v3431 = vld [vmem:[#allocation9 + $0x1d0] sm:$0xff]
    %v3432 = vld [vmem:[#allocation9 + $0x1d8] sm:$0xff]
    %v3433 = vld [vmem:[#allocation9 + $0x1e0] sm:$0xff]
    %v3434 = vld [vmem:[#allocation9 + $0x1e8] sm:$0xff]
    %v3435 = vld [vmem:[#allocation9 + $0x1f0] sm:$0xff]
    %v3436 = vld [vmem:[#allocation9 + $0x1f8] sm:$0xff]
    %v3437 = vld [vmem:[#allocation9 + $0x200] sm:$0xff]
    %v3438 = vld [vmem:[#allocation9 + $0x208] sm:$0xff]
    %v3439 = vld [vmem:[#allocation9 + $0x210] sm:$0xff]
    %v3440 = vld [vmem:[#allocation9 + $0x218] sm:$0xff]
    %v3441 = vld [vmem:[#allocation9 + $0x220] sm:$0xff]
    %v3442 = vld [vmem:[#allocation9 + $0x228] sm:$0xff]
    %v3443 = vld [vmem:[#allocation9 + $0x230] sm:$0xff]
    %v3444 = vld [vmem:[#allocation9 + $0x238] sm:$0xff]
    %v3445 = vld [vmem:[#allocation9 + $0x240] sm:$0xff]
    %v3446 = vld [vmem:[#allocation9 + $0x248] sm:$0xff]
    %v3447 = vld [vmem:[#allocation9 + $0x250] sm:$0xff]
    %v3448 = vld [vmem:[#allocation9 + $0x258] sm:$0xff]
    %v3449 = vld [vmem:[#allocation9 + $0x260] sm:$0xff]
    %v3450 = vld [vmem:[#allocation9 + $0x268] sm:$0xff]
    %v3451 = vld [vmem:[#allocation9 + $0x270] sm:$0xff]
    %v3452 = vld [vmem:[#allocation9 + $0x278] sm:$0xff]
    %v3453 = vld [vmem:[#allocation9 + $0x280] sm:$0xff]
    %v3454 = vld [vmem:[#allocation9 + $0x288] sm:$0xff]
    %v3455 = vld [vmem:[#allocation9 + $0x290] sm:$0xff]
    %v3456 = vld [vmem:[#allocation9 + $0x298] sm:$0xff]
    %v3457 = vld [vmem:[#allocation9 + $0x2a0] sm:$0xff]
    %v3458 = vld [vmem:[#allocation9 + $0x2a8] sm:$0xff]
    %v3459 = vld [vmem:[#allocation9 + $0x2b0] sm:$0xff]
    %v3460 = vld [vmem:[#allocation9 + $0x2b8] sm:$0xff]
    %v3461 = vld [vmem:[#allocation9 + $0x2c0] sm:$0xff]
    %v3462 = vld [vmem:[#allocation9 + $0x2c8] sm:$0xff]
    %v3463 = vld [vmem:[#allocation9 + $0x2d0] sm:$0xff]
    %v3464 = vld [vmem:[#allocation9 + $0x2d8] sm:$0xff]
    %v3465 = vld [vmem:[#allocation9 + $0x2e0] sm:$0xff]
    %v3466 = vld [vmem:[#allocation9 + $0x2e8] sm:$0xff]
    %v3467 = vld [vmem:[#allocation9 + $0x2f0] sm:$0xff]
    %v3468 = vld [vmem:[#allocation9 + $0x2f8] sm:$0xff]
    %v3471 = vrot.slane %v3371, 1
    %v3472 = vrot.slane %v3372, 1
    %v3571 = vunpack.c.l.b16 %v3373
    %v3572 = vunpack.c.h.b16 %v3373
    %v3573 = vunpack.c.l.b16 %v3374
    %v3574 = vunpack.c.h.b16 %v3374
    %v3575 = vunpack.c.l.b16 %v3375
    %v3576 = vunpack.c.h.b16 %v3375
    %v3577 = vunpack.c.l.b16 %v3376
    %v3578 = vunpack.c.h.b16 %v3376
    %v3579 = vunpack.c.l.b16 %v3377
    %v3580 = vunpack.c.h.b16 %v3377
    %v3581 = vunpack.c.l.b16 %v3378
    %v3582 = vunpack.c.h.b16 %v3378
    %v3583 = vunpack.c.l.b16 %v3379
    %v3584 = vunpack.c.h.b16 %v3379
    %v3585 = vunpack.c.l.b16 %v3380
    %v3586 = vunpack.c.h.b16 %v3380
    %v3587 = vunpack.c.l.b16 %v3381
    %v3588 = vunpack.c.h.b16 %v3381
    %v3589 = vunpack.c.l.b16 %v3382
    %v3590 = vunpack.c.h.b16 %v3382
    %v3591 = vunpack.c.l.b16 %v3383
    %v3592 = vunpack.c.h.b16 %v3383
    %v3593 = vunpack.c.l.b16 %v3384
    %v3594 = vunpack.c.h.b16 %v3384
    %v3595 = vunpack.c.l.b16 %v3385
    %v3596 = vunpack.c.h.b16 %v3385
    %v3597 = vunpack.c.l.b16 %v3386
    %v3598 = vunpack.c.h.b16 %v3386
    %v3599 = vunpack.c.l.b16 %v3387
    %v3600 = vunpack.c.h.b16 %v3387
    %v3601 = vunpack.c.l.b16 %v3388
    %v3602 = vunpack.c.h.b16 %v3388
    %v3603 = vunpack.c.l.b16 %v3389
    %v3604 = vunpack.c.h.b16 %v3389
    %v3605 = vunpack.c.l.b16 %v3390
    %v3606 = vunpack.c.h.b16 %v3390
    %v3607 = vunpack.c.l.b16 %v3391
    %v3608 = vunpack.c.h.b16 %v3391
    %v3609 = vunpack.c.l.b16 %v3392
    %v3610 = vunpack.c.h.b16 %v3392
    %v3611 = vunpack.c.l.b16 %v3393
    %v3612 = vunpack.c.h.b16 %v3393
    %v3613 = vunpack.c.l.b16 %v3394
    %v3614 = vunpack.c.h.b16 %v3394
    %v3615 = vunpack.c.l.b16 %v3395
    %v3616 = vunpack.c.h.b16 %v3395
    %v3617 = vunpack.c.l.b16 %v3396
    %v3618 = vunpack.c.h.b16 %v3396
    %v3619 = vunpack.c.l.b16 %v3397
    %v3620 = vunpack.c.h.b16 %v3397
    %v3621 = vunpack.c.l.b16 %v3398
    %v3622 = vunpack.c.h.b16 %v3398
    %v3623 = vunpack.c.l.b16 %v3399
    %v3624 = vunpack.c.h.b16 %v3399
    %v3625 = vunpack.c.l.b16 %v3400
    %v3626 = vunpack.c.h.b16 %v3400
    %v3627 = vunpack.c.l.b16 %v3401
    %v3628 = vunpack.c.h.b16 %v3401
    %v3629 = vunpack.c.l.b16 %v3402
    %v3630 = vunpack.c.h.b16 %v3402
    %v3631 = vunpack.c.l.b16 %v3403
    %v3632 = vunpack.c.h.b16 %v3403
    %v3633 = vunpack.c.l.b16 %v3404
    %v3634 = vunpack.c.h.b16 %v3404
    %v3635 = vunpack.c.l.b16 %v3405
    %v3636 = vunpack.c.h.b16 %v3405
    %v3637 = vunpack.c.l.b16 %v3406
    %v3638 = vunpack.c.h.b16 %v3406
    %v3639 = vunpack.c.l.b16 %v3407
    %v3640 = vunpack.c.h.b16 %v3407
    %v3641 = vunpack.c.l.b16 %v3408
    %v3642 = vunpack.c.h.b16 %v3408
    %v3643 = vunpack.c.l.b16 %v3409
    %v3644 = vunpack.c.h.b16 %v3409
    %v3645 = vunpack.c.l.b16 %v3410
    %v3646 = vunpack.c.h.b16 %v3410
    %v3647 = vunpack.c.l.b16 %v3411
    %v3648 = vunpack.c.h.b16 %v3411
    %v3649 = vunpack.c.l.b16 %v3412
    %v3650 = vunpack.c.h.b16 %v3412
    %v3651 = vunpack.c.l.b16 %v3413
    %v3652 = vunpack.c.h.b16 %v3413
    %v3653 = vunpack.c.l.b16 %v3414
    %v3654 = vunpack.c.h.b16 %v3414
    %v3655 = vunpack.c.l.b16 %v3415
    %v3656 = vunpack.c.h.b16 %v3415
    %v3657 = vunpack.c.l.b16 %v3416
    %v3658 = vunpack.c.h.b16 %v3416
    %v3659 = vunpack.c.l.b16 %v3417
    %v3660 = vunpack.c.h.b16 %v3417
    %v3661 = vunpack.c.l.b16 %v3418
    %v3662 = vunpack.c.h.b16 %v3418
    %v3663 = vunpack.c.l.b16 %v3419
    %v3664 = vunpack.c.h.b16 %v3419
    %v3665 = vunpack.c.l.b16 %v3420
    %v3666 = vunpack.c.h.b16 %v3420
    %v3667 = vunpack.c.l.b16 %v3421
    %v3668 = vunpack.c.h.b16 %v3421
    %v3669 = vunpack.c.l.b16 %v3422
    %v3670 = vunpack.c.h.b16 %v3422
    %v3671 = vunpack.c.l.b16 %v3423
    %v3672 = vunpack.c.h.b16 %v3423
    %v3673 = vunpack.c.l.b16 %v3424
    %v3674 = vunpack.c.h.b16 %v3424
    %v3675 = vunpack.c.l.b16 %v3425
    %v3676 = vunpack.c.h.b16 %v3425
    %v3677 = vunpack.c.l.b16 %v3426
    %v3678 = vunpack.c.h.b16 %v3426
    %v3679 = vunpack.c.l.b16 %v3427
    %v3680 = vunpack.c.h.b16 %v3427
    %v3681 = vunpack.c.l.b16 %v3428
    %v3682 = vunpack.c.h.b16 %v3428
    %v3683 = vunpack.c.l.b16 %v3429
    %v3684 = vunpack.c.h.b16 %v3429
    %v3685 = vunpack.c.l.b16 %v3430
    %v3686 = vunpack.c.h.b16 %v3430
    %v3687 = vunpack.c.l.b16 %v3431
    %v3688 = vunpack.c.h.b16 %v3431
    %v3689 = vunpack.c.l.b16 %v3432
    %v3690 = vunpack.c.h.b16 %v3432
    %v3691 = vunpack.c.l.b16 %v3433
    %v3692 = vunpack.c.h.b16 %v3433
    %v3693 = vunpack.c.l.b16 %v3434
    %v3694 = vunpack.c.h.b16 %v3434
    %v3695 = vunpack.c.l.b16 %v3435
    %v3696 = vunpack.c.h.b16 %v3435
    %v3697 = vunpack.c.l.b16 %v3436
    %v3698 = vunpack.c.h.b16 %v3436
    %v3699 = vunpack.c.l.b16 %v3437
    %v3700 = vunpack.c.h.b16 %v3437
    %v3701 = vunpack.c.l.b16 %v3438
    %v3702 = vunpack.c.h.b16 %v3438
    %v3703 = vunpack.c.l.b16 %v3439
    %v3704 = vunpack.c.h.b16 %v3439
    %v3705 = vunpack.c.l.b16 %v3440
    %v3706 = vunpack.c.h.b16 %v3440
    %v3707 = vunpack.c.l.b16 %v3441
    %v3708 = vunpack.c.h.b16 %v3441
    %v3709 = vunpack.c.l.b16 %v3442
    %v3710 = vunpack.c.h.b16 %v3442
    %v3711 = vunpack.c.l.b16 %v3443
    %v3712 = vunpack.c.h.b16 %v3443
    %v3713 = vunpack.c.l.b16 %v3444
    %v3714 = vunpack.c.h.b16 %v3444
    %v3715 = vunpack.c.l.b16 %v3445
    %v3716 = vunpack.c.h.b16 %v3445
    %v3717 = vunpack.c.l.b16 %v3446
    %v3718 = vunpack.c.h.b16 %v3446
    %v3719 = vunpack.c.l.b16 %v3447
    %v3720 = vunpack.c.h.b16 %v3447
    %v3721 = vunpack.c.l.b16 %v3448
    %v3722 = vunpack.c.h.b16 %v3448
    %v3723 = vunpack.c.l.b16 %v3449
    %v3724 = vunpack.c.h.b16 %v3449
    %v3725 = vunpack.c.l.b16 %v3450
    %v3726 = vunpack.c.h.b16 %v3450
    %v3727 = vunpack.c.l.b16 %v3451
    %v3728 = vunpack.c.h.b16 %v3451
    %v3729 = vunpack.c.l.b16 %v3452
    %v3730 = vunpack.c.h.b16 %v3452
    %v3731 = vunpack.c.l.b16 %v3453
    %v3732 = vunpack.c.h.b16 %v3453
    %v3733 = vunpack.c.l.b16 %v3454
    %v3734 = vunpack.c.h.b16 %v3454
    %v3735 = vunpack.c.l.b16 %v3455
    %v3736 = vunpack.c.h.b16 %v3455
    %v3737 = vunpack.c.l.b16 %v3456
    %v3738 = vunpack.c.h.b16 %v3456
    %v3739 = vunpack.c.l.b16 %v3457
    %v3740 = vunpack.c.h.b16 %v3457
    %v3741 = vunpack.c.l.b16 %v3458
    %v3742 = vunpack.c.h.b16 %v3458
    %v3743 = vunpack.c.l.b16 %v3459
    %v3744 = vunpack.c.h.b16 %v3459
    %v3745 = vunpack.c.l.b16 %v3460
    %v3746 = vunpack.c.h.b16 %v3460
    %v3747 = vunpack.c.l.b16 %v3461
    %v3748 = vunpack.c.h.b16 %v3461
    %v3749 = vunpack.c.l.b16 %v3462
    %v3750 = vunpack.c.h.b16 %v3462
    %v3751 = vunpack.c.l.b16 %v3463
    %v3752 = vunpack.c.h.b16 %v3463
    %v3753 = vunpack.c.l.b16 %v3464
    %v3754 = vunpack.c.h.b16 %v3464
    %v3755 = vunpack.c.l.b16 %v3465
    %v3756 = vunpack.c.h.b16 %v3465
    %v3757 = vunpack.c.l.b16 %v3466
    %v3758 = vunpack.c.h.b16 %v3466
    %v3759 = vunpack.c.l.b16 %v3467
    %v3760 = vunpack.c.h.b16 %v3467
    %v3761 = vunpack.c.l.b16 %v3468
    %v3762 = vunpack.c.h.b16 %v3468
    %v3763 = vpack.c.b16 %v3577, %v3571
    %v3764 = vpack.c.b16 %v3578, %v3572
    %v3765 = vpack.c.b16 %v3579, %v3573
    %v3766 = vpack.c.b16 %v3580, %v3574
    %v3767 = vpack.c.b16 %v3581, %v3575
    %v3768 = vpack.c.b16 %v3582, %v3576
    %v3769 = vpack.c.b16 %v3589, %v3583
    %v3770 = vpack.c.b16 %v3590, %v3584
    %v3771 = vpack.c.b16 %v3591, %v3585
    %v3772 = vpack.c.b16 %v3592, %v3586
    %v3773 = vpack.c.b16 %v3593, %v3587
    %v3774 = vpack.c.b16 %v3594, %v3588
    %v3775 = vpack.c.b16 %v3601, %v3595
    %v3776 = vpack.c.b16 %v3602, %v3596
    %v3777 = vpack.c.b16 %v3603, %v3597
    %v3778 = vpack.c.b16 %v3604, %v3598
    %v3779 = vpack.c.b16 %v3605, %v3599
    %v3780 = vpack.c.b16 %v3606, %v3600
    %v3781 = vpack.c.b16 %v3613, %v3607
    %v3782 = vpack.c.b16 %v3614, %v3608
    %v3783 = vpack.c.b16 %v3615, %v3609
    %v3784 = vpack.c.b16 %v3616, %v3610
    %v3785 = vpack.c.b16 %v3617, %v3611
    %v3786 = vpack.c.b16 %v3618, %v3612
    %v3787 = vpack.c.b16 %v3625, %v3619
    %v3788 = vpack.c.b16 %v3626, %v3620
    %v3789 = vpack.c.b16 %v3627, %v3621
    %v3790 = vpack.c.b16 %v3628, %v3622
    %v3791 = vpack.c.b16 %v3629, %v3623
    %v3792 = vpack.c.b16 %v3630, %v3624
    %v3793 = vpack.c.b16 %v3637, %v3631
    %v3794 = vpack.c.b16 %v3638, %v3632
    %v3795 = vpack.c.b16 %v3639, %v3633
    %v3796 = vpack.c.b16 %v3640, %v3634
    %v3797 = vpack.c.b16 %v3641, %v3635
    %v3798 = vpack.c.b16 %v3642, %v3636
    %v3799 = vpack.c.b16 %v3649, %v3643
    %v3800 = vpack.c.b16 %v3650, %v3644
    %v3801 = vpack.c.b16 %v3651, %v3645
    %v3802 = vpack.c.b16 %v3652, %v3646
    %v3803 = vpack.c.b16 %v3653, %v3647
    %v3804 = vpack.c.b16 %v3654, %v3648
    %v3805 = vpack.c.b16 %v3661, %v3655
    %v3806 = vpack.c.b16 %v3662, %v3656
    %v3807 = vpack.c.b16 %v3663, %v3657
    %v3808 = vpack.c.b16 %v3664, %v3658
    %v3809 = vpack.c.b16 %v3665, %v3659
    %v3810 = vpack.c.b16 %v3666, %v3660
    %v3811 = vpack.c.b16 %v3673, %v3667
    %v3812 = vpack.c.b16 %v3674, %v3668
    %v3813 = vpack.c.b16 %v3675, %v3669
    %v3814 = vpack.c.b16 %v3676, %v3670
    %v3815 = vpack.c.b16 %v3677, %v3671
    %v3816 = vpack.c.b16 %v3678, %v3672
    %v3817 = vpack.c.b16 %v3685, %v3679
    %v3818 = vpack.c.b16 %v3686, %v3680
    %v3819 = vpack.c.b16 %v3687, %v3681
    %v3820 = vpack.c.b16 %v3688, %v3682
    %v3821 = vpack.c.b16 %v3689, %v3683
    %v3822 = vpack.c.b16 %v3690, %v3684
    %v3823 = vpack.c.b16 %v3697, %v3691
    %v3824 = vpack.c.b16 %v3698, %v3692
    %v3825 = vpack.c.b16 %v3699, %v3693
    %v3826 = vpack.c.b16 %v3700, %v3694
    %v3827 = vpack.c.b16 %v3701, %v3695
    %v3828 = vpack.c.b16 %v3702, %v3696
    %v3829 = vpack.c.b16 %v3709, %v3703
    %v3830 = vpack.c.b16 %v3710, %v3704
    %v3831 = vpack.c.b16 %v3711, %v3705
    %v3832 = vpack.c.b16 %v3712, %v3706
    %v3833 = vpack.c.b16 %v3713, %v3707
    %v3834 = vpack.c.b16 %v3714, %v3708
    %v3835 = vpack.c.b16 %v3721, %v3715
    %v3836 = vpack.c.b16 %v3722, %v3716
    %v3837 = vpack.c.b16 %v3723, %v3717
    %v3838 = vpack.c.b16 %v3724, %v3718
    %v3839 = vpack.c.b16 %v3725, %v3719
    %v3840 = vpack.c.b16 %v3726, %v3720
    %v3841 = vpack.c.b16 %v3733, %v3727
    %v3842 = vpack.c.b16 %v3734, %v3728
    %v3843 = vpack.c.b16 %v3735, %v3729
    %v3844 = vpack.c.b16 %v3736, %v3730
    %v3845 = vpack.c.b16 %v3737, %v3731
    %v3846 = vpack.c.b16 %v3738, %v3732
    %v3847 = vpack.c.b16 %v3745, %v3739
    %v3848 = vpack.c.b16 %v3746, %v3740
    %v3849 = vpack.c.b16 %v3747, %v3741
    %v3850 = vpack.c.b16 %v3748, %v3742
    %v3851 = vpack.c.b16 %v3749, %v3743
    %v3852 = vpack.c.b16 %v3750, %v3744
    %v3853 = vpack.c.b16 %v3757, %v3751
    %v3854 = vpack.c.b16 %v3758, %v3752
    %v3855 = vpack.c.b16 %v3759, %v3753
    %v3856 = vpack.c.b16 %v3760, %v3754
    %v3857 = vpack.c.b16 %v3761, %v3755
    %v3858 = vpack.c.b16 %v3762, %v3756
    %3955 = vmatprep.subr.bf16.mxu0 %v3806
    %3956 = vmatpush1.bf16.msra.mxu0 %v3805
    %3957 = vmatprep.subr.bf16.mxu0 %v3800
    %3958 = vmatpush1.bf16.msra.mxu0 %v3799
    %3959 = vmatprep.subr.bf16.mxu0 %v3794
    %3960 = vmatpush1.bf16.msra.mxu0 %v3793
    %3961 = vmatprep.subr.bf16.mxu0 %v3788
    %3962 = vmatpush1.bf16.msra.mxu0 %v3787
    %3963 = vmatprep.subr.bf16.mxu0 %v3782
    %3964 = vmatpush1.bf16.msra.mxu0 %v3781
    %3965 = vmatprep.subr.bf16.mxu0 %v3776
    %3966 = vmatpush1.bf16.msra.mxu0 %v3775
    %3967 = vmatprep.subr.bf16.mxu0 %v3770
    %3968 = vmatpush1.bf16.msra.mxu0 %v3769
    %3969 = vmatprep.subr.bf16.mxu0 %v3764
    %3970 = vmatpush1.bf16.msra.mxu0 %v3763
    %3971 = vmatprep.subr.bf16.mxu0 %v3854
    %3972 = vmatpush2.bf16.msra.mxu0 %v3853
    %3973 = vmatprep.subr.bf16.mxu0 %v3848
    %3974 = vmatpush2.bf16.msra.mxu0 %v3847
    %3975 = vmatprep.subr.bf16.mxu0 %v3842
    %3976 = vmatpush2.bf16.msra.mxu0 %v3841
    %3977 = vmatprep.subr.bf16.mxu0 %v3836
    %3978 = vmatpush2.bf16.msra.mxu0 %v3835
    %3979 = vmatprep.subr.bf16.mxu0 %v3830
    %3980 = vmatpush2.bf16.msra.mxu0 %v3829
    %3981 = vmatprep.subr.bf16.mxu0 %v3824
    %3982 = vmatpush2.bf16.msra.mxu0 %v3823
    %3983 = vmatprep.subr.bf16.mxu0 %v3818
    %3984 = vmatpush2.bf16.msra.mxu0 %v3817
    %3985 = vmatprep.subr.bf16.mxu0 %v3812
    %3986 = vmatpush2.bf16.msra.mxu0 %v3811
    %3987 = vmatprep.mubr.bf16.mxu0 %v3472
    %3988 = vmatmul.mubr.bf16.gmra.mxu0 %v3471
    %v3989 = vpop.f32.mrf.mxu0
    %v3990 = vadd.f32 0.0, %v3989
    %v3991 = vpop.f32.mrf.mxu0
    %v3992 = vadd.f32 0.0, %v3991
    %v3993 = vpop.f32.mrf.mxu0
    %v3994 = vpop.f32.mrf.mxu0
    %3995 = vdwg.mxu0
    %3996 = vmatprep.subr.bf16.mxu0 %v3808
    %3997 = vmatpush1.bf16.msra.mxu0 %v3807
    %3998 = vmatprep.subr.bf16.mxu0 %v3802
    %3999 = vmatpush1.bf16.msra.mxu0 %v3801
    %4000 = vmatprep.subr.bf16.mxu0 %v3796
    %4001 = vmatpush1.bf16.msra.mxu0 %v3795
    %4002 = vmatprep.subr.bf16.mxu0 %v3790
    %4003 = vmatpush1.bf16.msra.mxu0 %v3789
    %4004 = vmatprep.subr.bf16.mxu0 %v3784
    %4005 = vmatpush1.bf16.msra.mxu0 %v3783
    %4006 = vmatprep.subr.bf16.mxu0 %v3778
    %4007 = vmatpush1.bf16.msra.mxu0 %v3777
    %4008 = vmatprep.subr.bf16.mxu0 %v3772
    %4009 = vmatpush1.bf16.msra.mxu0 %v3771
    %4010 = vmatprep.subr.bf16.mxu0 %v3766
    %4011 = vmatpush1.bf16.msra.mxu0 %v3765
    %4012 = vmatprep.subr.bf16.mxu0 %v3856
    %4013 = vmatpush2.bf16.msra.mxu0 %v3855
    %4014 = vmatprep.subr.bf16.mxu0 %v3850
    %4015 = vmatpush2.bf16.msra.mxu0 %v3849
    %4016 = vmatprep.subr.bf16.mxu0 %v3844
    %4017 = vmatpush2.bf16.msra.mxu0 %v3843
    %4018 = vmatprep.subr.bf16.mxu0 %v3838
    %4019 = vmatpush2.bf16.msra.mxu0 %v3837
    %4020 = vmatprep.subr.bf16.mxu0 %v3832
    %4021 = vmatpush2.bf16.msra.mxu0 %v3831
    %4022 = vmatprep.subr.bf16.mxu0 %v3826
    %4023 = vmatpush2.bf16.msra.mxu0 %v3825
    %4024 = vmatprep.subr.bf16.mxu0 %v3820
    %4025 = vmatpush2.bf16.msra.mxu0 %v3819
    %4026 = vmatprep.subr.bf16.mxu0 %v3814
    %4027 = vmatpush2.bf16.msra.mxu0 %v3813
    %4028 = vmatprep.mubr.bf16.mxu0 %v3472
    %4029 = vmatmul.mubr.bf16.gmra.mxu0 %v3471
    %v4030 = vpop.f32.mrf.mxu0
    %v4031 = vadd.f32 0.0, %v4030
    %v4032 = vpop.f32.mrf.mxu0
    %v4033 = vadd.f32 0.0, %v4032
    %v4034 = vpop.f32.mrf.mxu0
    %v4035 = vpop.f32.mrf.mxu0
    %4036 = vdwg.mxu0
    %4037 = vmatprep.subr.bf16.mxu0 %v3810
    %4038 = vmatpush1.bf16.msra.mxu0 %v3809
    %4039 = vmatprep.subr.bf16.mxu0 %v3804
    %4040 = vmatpush1.bf16.msra.mxu0 %v3803
    %4041 = vmatprep.subr.bf16.mxu0 %v3798
    %4042 = vmatpush1.bf16.msra.mxu0 %v3797
    %4043 = vmatprep.subr.bf16.mxu0 %v3792
    %4044 = vmatpush1.bf16.msra.mxu0 %v3791
    %4045 = vmatprep.subr.bf16.mxu0 %v3786
    %4046 = vmatpush1.bf16.msra.mxu0 %v3785
    %4047 = vmatprep.subr.bf16.mxu0 %v3780
    %4048 = vmatpush1.bf16.msra.mxu0 %v3779
    %4049 = vmatprep.subr.bf16.mxu0 %v3774
    %4050 = vmatpush1.bf16.msra.mxu0 %v3773
    %4051 = vmatprep.subr.bf16.mxu0 %v3768
    %4052 = vmatpush1.bf16.msra.mxu0 %v3767
    %4053 = vmatprep.subr.bf16.mxu0 %v3858
    %4054 = vmatpush2.bf16.msra.mxu0 %v3857
    %4055 = vmatprep.subr.bf16.mxu0 %v3852
    %4056 = vmatpush2.bf16.msra.mxu0 %v3851
    %4057 = vmatprep.subr.bf16.mxu0 %v3846
    %4058 = vmatpush2.bf16.msra.mxu0 %v3845
    %4059 = vmatprep.subr.bf16.mxu0 %v3840
    %4060 = vmatpush2.bf16.msra.mxu0 %v3839
    %4061 = vmatprep.subr.bf16.mxu0 %v3834
    %4062 = vmatpush2.bf16.msra.mxu0 %v3833
    %4063 = vmatprep.subr.bf16.mxu0 %v3828
    %4064 = vmatpush2.bf16.msra.mxu0 %v3827
    %4065 = vmatprep.subr.bf16.mxu0 %v3822
    %4066 = vmatpush2.bf16.msra.mxu0 %v3821
    %4067 = vmatprep.subr.bf16.mxu0 %v3816
    %4068 = vmatpush2.bf16.msra.mxu0 %v3815
    %4069 = vmatprep.mubr.bf16.mxu0 %v3472
    %4070 = vmatmul.mubr.bf16.gmra.mxu0 %v3471
    %v4071 = vpop.f32.mrf.mxu0
    %v4072 = vadd.f32 0.0, %v4071
    %v4073 = vpop.f32.mrf.mxu0
    %v4074 = vadd.f32 0.0, %v4073
    %v4075 = vpop.f32.mrf.mxu0
    %v4076 = vpop.f32.mrf.mxu0
    %4077 = vdwg.mxu0
    %v4082 = vrot.slane %v3990, 5
    %v4083 = vrot.slane %v3992, 5
    %v4084 = vrot.slane %v4031, 5
    %v4085 = vrot.slane %v4033, 5
    %v4090 = vadd.f32 %v904, %v4082
    %v4091 = vadd.f32 %v906, %v4083
    %v4092 = vadd.f32 %v945, %v4084
    %v4093 = vadd.f32 %v947, %v4085
    %v4094 = vxor.u32 %v4090, 2147483648
    %v4095 = vxor.u32 %v4091, 2147483648
    %v4096 = vxor.u32 %v4092, 2147483648
    %v4097 = vxor.u32 %v4093, 2147483648
    %v4098 = vmul.f32 %v4094, 1.442695
    %v4099 = vpow.pop %v4098
    %v4100 = vmul.f32 %v4095, 1.442695
    %v4101 = vpow.pop %v4100
    %v4102 = vmul.f32 %v4096, 1.442695
    %v4103 = vpow.pop %v4102
    %v4104 = vmul.f32 %v4097, 1.442695
    %v4105 = vpow.pop %v4104
    %v4106 = vadd.f32 %v4099, 1.0
    %v4107 = vadd.f32 %v4101, 1.0
    %v4108 = vadd.f32 %v4103, 1.0
    %v4109 = vadd.f32 %v4105, 1.0
    %v4110 = vrcp.pop %v4106
    %v4111 = vmul.f32 1.0, %v4110
    %v4112 = vrcp.pop %v4107
    %v4113 = vmul.f32 1.0, %v4112
    %v4114 = vrcp.pop %v4108
    %v4115 = vmul.f32 1.0, %v4114
    %v4116 = vrcp.pop %v4109
    %v4117 = vmul.f32 1.0, %v4116
    %v4118 = vadd.f32 %v4072, %v1738
    %v4119 = vadd.f32 %v4074, %v1742
    %v4122 = vrot.slane %v4118, 5
    %v4123 = vrot.slane %v4119, 5
    %v4126 = vmul.f32 %v4111, %v4122
    %v4127 = vmul.f32 %v4113, %v4123
    %v4128 = vadd.f32 %v986, %v4126
    %v4129 = vadd.f32 %v988, %v4127
    %v4130 = vtanh.pop %v4128
    %v4131 = vtanh.pop %v4129
    %v4132 = vsub.f32 1.0, %v4115
    %v4133 = vsub.f32 1.0, %v4117
    %v4134 = vmul.f32 %v4132, %v4130
    %v4135 = vmul.f32 %v4133, %v4131
    %v4136 = vrot.slane %v3347, 7
    %v4137 = vrot.slane %v3348, 7
    %v4140 = vmul.f32 %v4115, %v4136
    %v4141 = vmul.f32 %v4117, %v4137
    %v4142 = vadd.f32 %v4134, %v4140
    %v4143 = vadd.f32 %v4135, %v4141
    %v4146 = vcombine.low %v4142, %v4143
    %v4148 = vunpack.c.l.s4 1966171168
    %v4149 = vunpack.c.0.s8 %v4148
    %v4150 = vlaneseq
    %v4151 = vshrl.u32 %v4150, 7
    %v4152 = vsub.s32 %v4149, %v4151
    %v4153 = vrot.slane %v4146, %v4152
    %v4154 = vcombine.high %v4153, %v4153
    %v4156 = vunpack.c.l.s4 1966171168
    %v4157 = vunpack.c.0.s8 %v4156
    %v4158 = vlaneseq
    %v4159 = vshrl.u32 %v4158, 7
    %v4160 = vsub.s32 %v4157, %v4159
    %v4161 = vrot.slane %v4154, %v4160
    %v4162 = vcombine.high %v4161, %v4161
    %s4164 = scalar_lea.vmem [#allocation10], 3
    %4165 = vst.msk [vmem:[%s4164] ss:$8 sm:$0x3] %vm1782, %v4162
    %4166 = vst.msk [vmem:[%s4164] ss:$8 sm:$0x0] %vm1782, %v4162
    %v4167 = vpack.c.bf16 %v4142, %v4142
    %v4168 = vpack.c.bf16 %v4143, %v4143
    %v4169 = vld [vmem:[#allocation9] sm:$0xff]
    %v4170 = vld [vmem:[#allocation9 + $0x8] sm:$0xff]
    %v4171 = vld [vmem:[#allocation9 + $0x10] sm:$0xff]
    %v4172 = vld [vmem:[#allocation9 + $0x18] sm:$0xff]
    %v4173 = vld [vmem:[#allocation9 + $0x20] sm:$0xff]
    %v4174 = vld [vmem:[#allocation9 + $0x28] sm:$0xff]
    %v4175 = vld [vmem:[#allocation9 + $0x30] sm:$0xff]
    %v4176 = vld [vmem:[#allocation9 + $0x38] sm:$0xff]
    %v4177 = vld [vmem:[#allocation9 + $0x40] sm:$0xff]
    %v4178 = vld [vmem:[#allocation9 + $0x48] sm:$0xff]
    %v4179 = vld [vmem:[#allocation9 + $0x50] sm:$0xff]
    %v4180 = vld [vmem:[#allocation9 + $0x58] sm:$0xff]
    %v4181 = vld [vmem:[#allocation9 + $0x60] sm:$0xff]
    %v4182 = vld [vmem:[#allocation9 + $0x68] sm:$0xff]
    %v4183 = vld [vmem:[#allocation9 + $0x70] sm:$0xff]
    %v4184 = vld [vmem:[#allocation9 + $0x78] sm:$0xff]
    %v4185 = vld [vmem:[#allocation9 + $0x80] sm:$0xff]
    %v4186 = vld [vmem:[#allocation9 + $0x88] sm:$0xff]
    %v4187 = vld [vmem:[#allocation9 + $0x90] sm:$0xff]
    %v4188 = vld [vmem:[#allocation9 + $0x98] sm:$0xff]
    %v4189 = vld [vmem:[#allocation9 + $0xa0] sm:$0xff]
    %v4190 = vld [vmem:[#allocation9 + $0xa8] sm:$0xff]
    %v4191 = vld [vmem:[#allocation9 + $0xb0] sm:$0xff]
    %v4192 = vld [vmem:[#allocation9 + $0xb8] sm:$0xff]
    %v4193 = vld [vmem:[#allocation9 + $0xc0] sm:$0xff]
    %v4194 = vld [vmem:[#allocation9 + $0xc8] sm:$0xff]
    %v4195 = vld [vmem:[#allocation9 + $0xd0] sm:$0xff]
    %v4196 = vld [vmem:[#allocation9 + $0xd8] sm:$0xff]
    %v4197 = vld [vmem:[#allocation9 + $0xe0] sm:$0xff]
    %v4198 = vld [vmem:[#allocation9 + $0xe8] sm:$0xff]
    %v4199 = vld [vmem:[#allocation9 + $0xf0] sm:$0xff]
    %v4200 = vld [vmem:[#allocation9 + $0xf8] sm:$0xff]
    %v4201 = vld [vmem:[#allocation9 + $0x100] sm:$0xff]
    %v4202 = vld [vmem:[#allocation9 + $0x108] sm:$0xff]
    %v4203 = vld [vmem:[#allocation9 + $0x110] sm:$0xff]
    %v4204 = vld [vmem:[#allocation9 + $0x118] sm:$0xff]
    %v4205 = vld [vmem:[#allocation9 + $0x120] sm:$0xff]
    %v4206 = vld [vmem:[#allocation9 + $0x128] sm:$0xff]
    %v4207 = vld [vmem:[#allocation9 + $0x130] sm:$0xff]
    %v4208 = vld [vmem:[#allocation9 + $0x138] sm:$0xff]
    %v4209 = vld [vmem:[#allocation9 + $0x140] sm:$0xff]
    %v4210 = vld [vmem:[#allocation9 + $0x148] sm:$0xff]
    %v4211 = vld [vmem:[#allocation9 + $0x150] sm:$0xff]
    %v4212 = vld [vmem:[#allocation9 + $0x158] sm:$0xff]
    %v4213 = vld [vmem:[#allocation9 + $0x160] sm:$0xff]
    %v4214 = vld [vmem:[#allocation9 + $0x168] sm:$0xff]
    %v4215 = vld [vmem:[#allocation9 + $0x170] sm:$0xff]
    %v4216 = vld [vmem:[#allocation9 + $0x178] sm:$0xff]
    %v4217 = vld [vmem:[#allocation9 + $0x180] sm:$0xff]
    %v4218 = vld [vmem:[#allocation9 + $0x188] sm:$0xff]
    %v4219 = vld [vmem:[#allocation9 + $0x190] sm:$0xff]
    %v4220 = vld [vmem:[#allocation9 + $0x198] sm:$0xff]
    %v4221 = vld [vmem:[#allocation9 + $0x1a0] sm:$0xff]
    %v4222 = vld [vmem:[#allocation9 + $0x1a8] sm:$0xff]
    %v4223 = vld [vmem:[#allocation9 + $0x1b0] sm:$0xff]
    %v4224 = vld [vmem:[#allocation9 + $0x1b8] sm:$0xff]
    %v4225 = vld [vmem:[#allocation9 + $0x1c0] sm:$0xff]
    %v4226 = vld [vmem:[#allocation9 + $0x1c8] sm:$0xff]
    %v4227 = vld [vmem:[#allocation9 + $0x1d0] sm:$0xff]
    %v4228 = vld [vmem:[#allocation9 + $0x1d8] sm:$0xff]
    %v4229 = vld [vmem:[#allocation9 + $0x1e0] sm:$0xff]
    %v4230 = vld [vmem:[#allocation9 + $0x1e8] sm:$0xff]
    %v4231 = vld [vmem:[#allocation9 + $0x1f0] sm:$0xff]
    %v4232 = vld [vmem:[#allocation9 + $0x1f8] sm:$0xff]
    %v4233 = vld [vmem:[#allocation9 + $0x200] sm:$0xff]
    %v4234 = vld [vmem:[#allocation9 + $0x208] sm:$0xff]
    %v4235 = vld [vmem:[#allocation9 + $0x210] sm:$0xff]
    %v4236 = vld [vmem:[#allocation9 + $0x218] sm:$0xff]
    %v4237 = vld [vmem:[#allocation9 + $0x220] sm:$0xff]
    %v4238 = vld [vmem:[#allocation9 + $0x228] sm:$0xff]
    %v4239 = vld [vmem:[#allocation9 + $0x230] sm:$0xff]
    %v4240 = vld [vmem:[#allocation9 + $0x238] sm:$0xff]
    %v4241 = vld [vmem:[#allocation9 + $0x240] sm:$0xff]
    %v4242 = vld [vmem:[#allocation9 + $0x248] sm:$0xff]
    %v4243 = vld [vmem:[#allocation9 + $0x250] sm:$0xff]
    %v4244 = vld [vmem:[#allocation9 + $0x258] sm:$0xff]
    %v4245 = vld [vmem:[#allocation9 + $0x260] sm:$0xff]
    %v4246 = vld [vmem:[#allocation9 + $0x268] sm:$0xff]
    %v4247 = vld [vmem:[#allocation9 + $0x270] sm:$0xff]
    %v4248 = vld [vmem:[#allocation9 + $0x278] sm:$0xff]
    %v4249 = vld [vmem:[#allocation9 + $0x280] sm:$0xff]
    %v4250 = vld [vmem:[#allocation9 + $0x288] sm:$0xff]
    %v4251 = vld [vmem:[#allocation9 + $0x290] sm:$0xff]
    %v4252 = vld [vmem:[#allocation9 + $0x298] sm:$0xff]
    %v4253 = vld [vmem:[#allocation9 + $0x2a0] sm:$0xff]
    %v4254 = vld [vmem:[#allocation9 + $0x2a8] sm:$0xff]
    %v4255 = vld [vmem:[#allocation9 + $0x2b0] sm:$0xff]
    %v4256 = vld [vmem:[#allocation9 + $0x2b8] sm:$0xff]
    %v4257 = vld [vmem:[#allocation9 + $0x2c0] sm:$0xff]
    %v4258 = vld [vmem:[#allocation9 + $0x2c8] sm:$0xff]
    %v4259 = vld [vmem:[#allocation9 + $0x2d0] sm:$0xff]
    %v4260 = vld [vmem:[#allocation9 + $0x2d8] sm:$0xff]
    %v4261 = vld [vmem:[#allocation9 + $0x2e0] sm:$0xff]
    %v4262 = vld [vmem:[#allocation9 + $0x2e8] sm:$0xff]
    %v4263 = vld [vmem:[#allocation9 + $0x2f0] sm:$0xff]
    %v4264 = vld [vmem:[#allocation9 + $0x2f8] sm:$0xff]
    %v4266 = vshrl.u32 %v4167, 16
    %v4268 = vrot.slane %v4266, 1
    %v4270 = vshrl.u32 %v4168, 16
    %v4272 = vrot.slane %v4270, 1
    %v4371 = vunpack.c.l.b16 %v4169
    %v4372 = vunpack.c.h.b16 %v4169
    %v4373 = vunpack.c.l.b16 %v4170
    %v4374 = vunpack.c.h.b16 %v4170
    %v4375 = vunpack.c.l.b16 %v4171
    %v4376 = vunpack.c.h.b16 %v4171
    %v4377 = vunpack.c.l.b16 %v4172
    %v4378 = vunpack.c.h.b16 %v4172
    %v4379 = vunpack.c.l.b16 %v4173
    %v4380 = vunpack.c.h.b16 %v4173
    %v4381 = vunpack.c.l.b16 %v4174
    %v4382 = vunpack.c.h.b16 %v4174
    %v4383 = vunpack.c.l.b16 %v4175
    %v4384 = vunpack.c.h.b16 %v4175
    %v4385 = vunpack.c.l.b16 %v4176
    %v4386 = vunpack.c.h.b16 %v4176
    %v4387 = vunpack.c.l.b16 %v4177
    %v4388 = vunpack.c.h.b16 %v4177
    %v4389 = vunpack.c.l.b16 %v4178
    %v4390 = vunpack.c.h.b16 %v4178
    %v4391 = vunpack.c.l.b16 %v4179
    %v4392 = vunpack.c.h.b16 %v4179
    %v4393 = vunpack.c.l.b16 %v4180
    %v4394 = vunpack.c.h.b16 %v4180
    %v4395 = vunpack.c.l.b16 %v4181
    %v4396 = vunpack.c.h.b16 %v4181
    %v4397 = vunpack.c.l.b16 %v4182
    %v4398 = vunpack.c.h.b16 %v4182
    %v4399 = vunpack.c.l.b16 %v4183
    %v4400 = vunpack.c.h.b16 %v4183
    %v4401 = vunpack.c.l.b16 %v4184
    %v4402 = vunpack.c.h.b16 %v4184
    %v4403 = vunpack.c.l.b16 %v4185
    %v4404 = vunpack.c.h.b16 %v4185
    %v4405 = vunpack.c.l.b16 %v4186
    %v4406 = vunpack.c.h.b16 %v4186
    %v4407 = vunpack.c.l.b16 %v4187
    %v4408 = vunpack.c.h.b16 %v4187
    %v4409 = vunpack.c.l.b16 %v4188
    %v4410 = vunpack.c.h.b16 %v4188
    %v4411 = vunpack.c.l.b16 %v4189
    %v4412 = vunpack.c.h.b16 %v4189
    %v4413 = vunpack.c.l.b16 %v4190
    %v4414 = vunpack.c.h.b16 %v4190
    %v4415 = vunpack.c.l.b16 %v4191
    %v4416 = vunpack.c.h.b16 %v4191
    %v4417 = vunpack.c.l.b16 %v4192
    %v4418 = vunpack.c.h.b16 %v4192
    %v4419 = vunpack.c.l.b16 %v4193
    %v4420 = vunpack.c.h.b16 %v4193
    %v4421 = vunpack.c.l.b16 %v4194
    %v4422 = vunpack.c.h.b16 %v4194
    %v4423 = vunpack.c.l.b16 %v4195
    %v4424 = vunpack.c.h.b16 %v4195
    %v4425 = vunpack.c.l.b16 %v4196
    %v4426 = vunpack.c.h.b16 %v4196
    %v4427 = vunpack.c.l.b16 %v4197
    %v4428 = vunpack.c.h.b16 %v4197
    %v4429 = vunpack.c.l.b16 %v4198
    %v4430 = vunpack.c.h.b16 %v4198
    %v4431 = vunpack.c.l.b16 %v4199
    %v4432 = vunpack.c.h.b16 %v4199
    %v4433 = vunpack.c.l.b16 %v4200
    %v4434 = vunpack.c.h.b16 %v4200
    %v4435 = vunpack.c.l.b16 %v4201
    %v4436 = vunpack.c.h.b16 %v4201
    %v4437 = vunpack.c.l.b16 %v4202
    %v4438 = vunpack.c.h.b16 %v4202
    %v4439 = vunpack.c.l.b16 %v4203
    %v4440 = vunpack.c.h.b16 %v4203
    %v4441 = vunpack.c.l.b16 %v4204
    %v4442 = vunpack.c.h.b16 %v4204
    %v4443 = vunpack.c.l.b16 %v4205
    %v4444 = vunpack.c.h.b16 %v4205
    %v4445 = vunpack.c.l.b16 %v4206
    %v4446 = vunpack.c.h.b16 %v4206
    %v4447 = vunpack.c.l.b16 %v4207
    %v4448 = vunpack.c.h.b16 %v4207
    %v4449 = vunpack.c.l.b16 %v4208
    %v4450 = vunpack.c.h.b16 %v4208
    %v4451 = vunpack.c.l.b16 %v4209
    %v4452 = vunpack.c.h.b16 %v4209
    %v4453 = vunpack.c.l.b16 %v4210
    %v4454 = vunpack.c.h.b16 %v4210
    %v4455 = vunpack.c.l.b16 %v4211
    %v4456 = vunpack.c.h.b16 %v4211
    %v4457 = vunpack.c.l.b16 %v4212
    %v4458 = vunpack.c.h.b16 %v4212
    %v4459 = vunpack.c.l.b16 %v4213
    %v4460 = vunpack.c.h.b16 %v4213
    %v4461 = vunpack.c.l.b16 %v4214
    %v4462 = vunpack.c.h.b16 %v4214
    %v4463 = vunpack.c.l.b16 %v4215
    %v4464 = vunpack.c.h.b16 %v4215
    %v4465 = vunpack.c.l.b16 %v4216
    %v4466 = vunpack.c.h.b16 %v4216
    %v4467 = vunpack.c.l.b16 %v4217
    %v4468 = vunpack.c.h.b16 %v4217
    %v4469 = vunpack.c.l.b16 %v4218
    %v4470 = vunpack.c.h.b16 %v4218
    %v4471 = vunpack.c.l.b16 %v4219
    %v4472 = vunpack.c.h.b16 %v4219
    %v4473 = vunpack.c.l.b16 %v4220
    %v4474 = vunpack.c.h.b16 %v4220
    %v4475 = vunpack.c.l.b16 %v4221
    %v4476 = vunpack.c.h.b16 %v4221
    %v4477 = vunpack.c.l.b16 %v4222
    %v4478 = vunpack.c.h.b16 %v4222
    %v4479 = vunpack.c.l.b16 %v4223
    %v4480 = vunpack.c.h.b16 %v4223
    %v4481 = vunpack.c.l.b16 %v4224
    %v4482 = vunpack.c.h.b16 %v4224
    %v4483 = vunpack.c.l.b16 %v4225
    %v4484 = vunpack.c.h.b16 %v4225
    %v4485 = vunpack.c.l.b16 %v4226
    %v4486 = vunpack.c.h.b16 %v4226
    %v4487 = vunpack.c.l.b16 %v4227
    %v4488 = vunpack.c.h.b16 %v4227
    %v4489 = vunpack.c.l.b16 %v4228
    %v4490 = vunpack.c.h.b16 %v4228
    %v4491 = vunpack.c.l.b16 %v4229
    %v4492 = vunpack.c.h.b16 %v4229
    %v4493 = vunpack.c.l.b16 %v4230
    %v4494 = vunpack.c.h.b16 %v4230
    %v4495 = vunpack.c.l.b16 %v4231
    %v4496 = vunpack.c.h.b16 %v4231
    %v4497 = vunpack.c.l.b16 %v4232
    %v4498 = vunpack.c.h.b16 %v4232
    %v4499 = vunpack.c.l.b16 %v4233
    %v4500 = vunpack.c.h.b16 %v4233
    %v4501 = vunpack.c.l.b16 %v4234
    %v4502 = vunpack.c.h.b16 %v4234
    %v4503 = vunpack.c.l.b16 %v4235
    %v4504 = vunpack.c.h.b16 %v4235
    %v4505 = vunpack.c.l.b16 %v4236
    %v4506 = vunpack.c.h.b16 %v4236
    %v4507 = vunpack.c.l.b16 %v4237
    %v4508 = vunpack.c.h.b16 %v4237
    %v4509 = vunpack.c.l.b16 %v4238
    %v4510 = vunpack.c.h.b16 %v4238
    %v4511 = vunpack.c.l.b16 %v4239
    %v4512 = vunpack.c.h.b16 %v4239
    %v4513 = vunpack.c.l.b16 %v4240
    %v4514 = vunpack.c.h.b16 %v4240
    %v4515 = vunpack.c.l.b16 %v4241
    %v4516 = vunpack.c.h.b16 %v4241
    %v4517 = vunpack.c.l.b16 %v4242
    %v4518 = vunpack.c.h.b16 %v4242
    %v4519 = vunpack.c.l.b16 %v4243
    %v4520 = vunpack.c.h.b16 %v4243
    %v4521 = vunpack.c.l.b16 %v4244
    %v4522 = vunpack.c.h.b16 %v4244
    %v4523 = vunpack.c.l.b16 %v4245
    %v4524 = vunpack.c.h.b16 %v4245
    %v4525 = vunpack.c.l.b16 %v4246
    %v4526 = vunpack.c.h.b16 %v4246
    %v4527 = vunpack.c.l.b16 %v4247
    %v4528 = vunpack.c.h.b16 %v4247
    %v4529 = vunpack.c.l.b16 %v4248
    %v4530 = vunpack.c.h.b16 %v4248
    %v4531 = vunpack.c.l.b16 %v4249
    %v4532 = vunpack.c.h.b16 %v4249
    %v4533 = vunpack.c.l.b16 %v4250
    %v4534 = vunpack.c.h.b16 %v4250
    %v4535 = vunpack.c.l.b16 %v4251
    %v4536 = vunpack.c.h.b16 %v4251
    %v4537 = vunpack.c.l.b16 %v4252
    %v4538 = vunpack.c.h.b16 %v4252
    %v4539 = vunpack.c.l.b16 %v4253
    %v4540 = vunpack.c.h.b16 %v4253
    %v4541 = vunpack.c.l.b16 %v4254
    %v4542 = vunpack.c.h.b16 %v4254
    %v4543 = vunpack.c.l.b16 %v4255
    %v4544 = vunpack.c.h.b16 %v4255
    %v4545 = vunpack.c.l.b16 %v4256
    %v4546 = vunpack.c.h.b16 %v4256
    %v4547 = vunpack.c.l.b16 %v4257
    %v4548 = vunpack.c.h.b16 %v4257
    %v4549 = vunpack.c.l.b16 %v4258
    %v4550 = vunpack.c.h.b16 %v4258
    %v4551 = vunpack.c.l.b16 %v4259
    %v4552 = vunpack.c.h.b16 %v4259
    %v4553 = vunpack.c.l.b16 %v4260
    %v4554 = vunpack.c.h.b16 %v4260
    %v4555 = vunpack.c.l.b16 %v4261
    %v4556 = vunpack.c.h.b16 %v4261
    %v4557 = vunpack.c.l.b16 %v4262
    %v4558 = vunpack.c.h.b16 %v4262
    %v4559 = vunpack.c.l.b16 %v4263
    %v4560 = vunpack.c.h.b16 %v4263
    %v4561 = vunpack.c.l.b16 %v4264
    %v4562 = vunpack.c.h.b16 %v4264
    %v4563 = vpack.c.b16 %v4377, %v4371
    %v4564 = vpack.c.b16 %v4378, %v4372
    %v4565 = vpack.c.b16 %v4379, %v4373
    %v4566 = vpack.c.b16 %v4380, %v4374
    %v4567 = vpack.c.b16 %v4381, %v4375
    %v4568 = vpack.c.b16 %v4382, %v4376
    %v4569 = vpack.c.b16 %v4389, %v4383
    %v4570 = vpack.c.b16 %v4390, %v4384
    %v4571 = vpack.c.b16 %v4391, %v4385
    %v4572 = vpack.c.b16 %v4392, %v4386
    %v4573 = vpack.c.b16 %v4393, %v4387
    %v4574 = vpack.c.b16 %v4394, %v4388
    %v4575 = vpack.c.b16 %v4401, %v4395
    %v4576 = vpack.c.b16 %v4402, %v4396
    %v4577 = vpack.c.b16 %v4403, %v4397
    %v4578 = vpack.c.b16 %v4404, %v4398
    %v4579 = vpack.c.b16 %v4405, %v4399
    %v4580 = vpack.c.b16 %v4406, %v4400
    %v4581 = vpack.c.b16 %v4413, %v4407
    %v4582 = vpack.c.b16 %v4414, %v4408
    %v4583 = vpack.c.b16 %v4415, %v4409
    %v4584 = vpack.c.b16 %v4416, %v4410
    %v4585 = vpack.c.b16 %v4417, %v4411
    %v4586 = vpack.c.b16 %v4418, %v4412
    %v4587 = vpack.c.b16 %v4425, %v4419
    %v4588 = vpack.c.b16 %v4426, %v4420
    %v4589 = vpack.c.b16 %v4427, %v4421
    %v4590 = vpack.c.b16 %v4428, %v4422
    %v4591 = vpack.c.b16 %v4429, %v4423
    %v4592 = vpack.c.b16 %v4430, %v4424
    %v4593 = vpack.c.b16 %v4437, %v4431
    %v4594 = vpack.c.b16 %v4438, %v4432
    %v4595 = vpack.c.b16 %v4439, %v4433
    %v4596 = vpack.c.b16 %v4440, %v4434
    %v4597 = vpack.c.b16 %v4441, %v4435
    %v4598 = vpack.c.b16 %v4442, %v4436
    %v4599 = vpack.c.b16 %v4449, %v4443
    %v4600 = vpack.c.b16 %v4450, %v4444
    %v4601 = vpack.c.b16 %v4451, %v4445
    %v4602 = vpack.c.b16 %v4452, %v4446
    %v4603 = vpack.c.b16 %v4453, %v4447
    %v4604 = vpack.c.b16 %v4454, %v4448
    %v4605 = vpack.c.b16 %v4461, %v4455
    %v4606 = vpack.c.b16 %v4462, %v4456
    %v4607 = vpack.c.b16 %v4463, %v4457
    %v4608 = vpack.c.b16 %v4464, %v4458
    %v4609 = vpack.c.b16 %v4465, %v4459
    %v4610 = vpack.c.b16 %v4466, %v4460
    %v4611 = vpack.c.b16 %v4473, %v4467
    %v4612 = vpack.c.b16 %v4474, %v4468
    %v4613 = vpack.c.b16 %v4475, %v4469
    %v4614 = vpack.c.b16 %v4476, %v4470
    %v4615 = vpack.c.b16 %v4477, %v4471
    %v4616 = vpack.c.b16 %v4478, %v4472
    %v4617 = vpack.c.b16 %v4485, %v4479
    %v4618 = vpack.c.b16 %v4486, %v4480
    %v4619 = vpack.c.b16 %v4487, %v4481
    %v4620 = vpack.c.b16 %v4488, %v4482
    %v4621 = vpack.c.b16 %v4489, %v4483
    %v4622 = vpack.c.b16 %v4490, %v4484
    %v4623 = vpack.c.b16 %v4497, %v4491
    %v4624 = vpack.c.b16 %v4498, %v4492
    %v4625 = vpack.c.b16 %v4499, %v4493
    %v4626 = vpack.c.b16 %v4500, %v4494
    %v4627 = vpack.c.b16 %v4501, %v4495
    %v4628 = vpack.c.b16 %v4502, %v4496
    %v4629 = vpack.c.b16 %v4509, %v4503
    %v4630 = vpack.c.b16 %v4510, %v4504
    %v4631 = vpack.c.b16 %v4511, %v4505
    %v4632 = vpack.c.b16 %v4512, %v4506
    %v4633 = vpack.c.b16 %v4513, %v4507
    %v4634 = vpack.c.b16 %v4514, %v4508
    %v4635 = vpack.c.b16 %v4521, %v4515
    %v4636 = vpack.c.b16 %v4522, %v4516
    %v4637 = vpack.c.b16 %v4523, %v4517
    %v4638 = vpack.c.b16 %v4524, %v4518
    %v4639 = vpack.c.b16 %v4525, %v4519
    %v4640 = vpack.c.b16 %v4526, %v4520
    %v4641 = vpack.c.b16 %v4533, %v4527
    %v4642 = vpack.c.b16 %v4534, %v4528
    %v4643 = vpack.c.b16 %v4535, %v4529
    %v4644 = vpack.c.b16 %v4536, %v4530
    %v4645 = vpack.c.b16 %v4537, %v4531
    %v4646 = vpack.c.b16 %v4538, %v4532
    %v4647 = vpack.c.b16 %v4545, %v4539
    %v4648 = vpack.c.b16 %v4546, %v4540
    %v4649 = vpack.c.b16 %v4547, %v4541
    %v4650 = vpack.c.b16 %v4548, %v4542
    %v4651 = vpack.c.b16 %v4549, %v4543
    %v4652 = vpack.c.b16 %v4550, %v4544
    %v4653 = vpack.c.b16 %v4557, %v4551
    %v4654 = vpack.c.b16 %v4558, %v4552
    %v4655 = vpack.c.b16 %v4559, %v4553
    %v4656 = vpack.c.b16 %v4560, %v4554
    %v4657 = vpack.c.b16 %v4561, %v4555
    %v4658 = vpack.c.b16 %v4562, %v4556
    %4755 = vmatprep.subr.bf16.mxu0 %v4606
    %4756 = vmatpush1.bf16.msra.mxu0 %v4605
    %4757 = vmatprep.subr.bf16.mxu0 %v4600
    %4758 = vmatpush1.bf16.msra.mxu0 %v4599
    %4759 = vmatprep.subr.bf16.mxu0 %v4594
    %4760 = vmatpush1.bf16.msra.mxu0 %v4593
    %4761 = vmatprep.subr.bf16.mxu0 %v4588
    %4762 = vmatpush1.bf16.msra.mxu0 %v4587
    %4763 = vmatprep.subr.bf16.mxu0 %v4582
    %4764 = vmatpush1.bf16.msra.mxu0 %v4581
    %4765 = vmatprep.subr.bf16.mxu0 %v4576
    %4766 = vmatpush1.bf16.msra.mxu0 %v4575
    %4767 = vmatprep.subr.bf16.mxu0 %v4570
    %4768 = vmatpush1.bf16.msra.mxu0 %v4569
    %4769 = vmatprep.subr.bf16.mxu0 %v4564
    %4770 = vmatpush1.bf16.msra.mxu0 %v4563
    %4771 = vmatprep.subr.bf16.mxu0 %v4654
    %4772 = vmatpush2.bf16.msra.mxu0 %v4653
    %4773 = vmatprep.subr.bf16.mxu0 %v4648
    %4774 = vmatpush2.bf16.msra.mxu0 %v4647
    %4775 = vmatprep.subr.bf16.mxu0 %v4642
    %4776 = vmatpush2.bf16.msra.mxu0 %v4641
    %4777 = vmatprep.subr.bf16.mxu0 %v4636
    %4778 = vmatpush2.bf16.msra.mxu0 %v4635
    %4779 = vmatprep.subr.bf16.mxu0 %v4630
    %4780 = vmatpush2.bf16.msra.mxu0 %v4629
    %4781 = vmatprep.subr.bf16.mxu0 %v4624
    %4782 = vmatpush2.bf16.msra.mxu0 %v4623
    %4783 = vmatprep.subr.bf16.mxu0 %v4618
    %4784 = vmatpush2.bf16.msra.mxu0 %v4617
    %4785 = vmatprep.subr.bf16.mxu0 %v4612
    %4786 = vmatpush2.bf16.msra.mxu0 %v4611
    %4787 = vmatprep.mubr.bf16.mxu0 %v4272
    %4788 = vmatmul.mubr.bf16.gmra.mxu0 %v4268
    %v4789 = vpop.f32.mrf.mxu0
    %v4790 = vadd.f32 0.0, %v4789
    %v4791 = vpop.f32.mrf.mxu0
    %v4792 = vadd.f32 0.0, %v4791
    %v4793 = vpop.f32.mrf.mxu0
    %v4794 = vpop.f32.mrf.mxu0
    %4795 = vdwg.mxu0
    %4796 = vmatprep.subr.bf16.mxu0 %v4608
    %4797 = vmatpush1.bf16.msra.mxu0 %v4607
    %4798 = vmatprep.subr.bf16.mxu0 %v4602
    %4799 = vmatpush1.bf16.msra.mxu0 %v4601
    %4800 = vmatprep.subr.bf16.mxu0 %v4596
    %4801 = vmatpush1.bf16.msra.mxu0 %v4595
    %4802 = vmatprep.subr.bf16.mxu0 %v4590
    %4803 = vmatpush1.bf16.msra.mxu0 %v4589
    %4804 = vmatprep.subr.bf16.mxu0 %v4584
    %4805 = vmatpush1.bf16.msra.mxu0 %v4583
    %4806 = vmatprep.subr.bf16.mxu0 %v4578
    %4807 = vmatpush1.bf16.msra.mxu0 %v4577
    %4808 = vmatprep.subr.bf16.mxu0 %v4572
    %4809 = vmatpush1.bf16.msra.mxu0 %v4571
    %4810 = vmatprep.subr.bf16.mxu0 %v4566
    %4811 = vmatpush1.bf16.msra.mxu0 %v4565
    %4812 = vmatprep.subr.bf16.mxu0 %v4656
    %4813 = vmatpush2.bf16.msra.mxu0 %v4655
    %4814 = vmatprep.subr.bf16.mxu0 %v4650
    %4815 = vmatpush2.bf16.msra.mxu0 %v4649
    %4816 = vmatprep.subr.bf16.mxu0 %v4644
    %4817 = vmatpush2.bf16.msra.mxu0 %v4643
    %4818 = vmatprep.subr.bf16.mxu0 %v4638
    %4819 = vmatpush2.bf16.msra.mxu0 %v4637
    %4820 = vmatprep.subr.bf16.mxu0 %v4632
    %4821 = vmatpush2.bf16.msra.mxu0 %v4631
    %4822 = vmatprep.subr.bf16.mxu0 %v4626
    %4823 = vmatpush2.bf16.msra.mxu0 %v4625
    %4824 = vmatprep.subr.bf16.mxu0 %v4620
    %4825 = vmatpush2.bf16.msra.mxu0 %v4619
    %4826 = vmatprep.subr.bf16.mxu0 %v4614
    %4827 = vmatpush2.bf16.msra.mxu0 %v4613
    %4828 = vmatprep.mubr.bf16.mxu0 %v4272
    %4829 = vmatmul.mubr.bf16.gmra.mxu0 %v4268
    %v4830 = vpop.f32.mrf.mxu0
    %v4831 = vadd.f32 0.0, %v4830
    %v4832 = vpop.f32.mrf.mxu0
    %v4833 = vadd.f32 0.0, %v4832
    %v4834 = vpop.f32.mrf.mxu0
    %v4835 = vpop.f32.mrf.mxu0
    %4836 = vdwg.mxu0
    %4837 = vmatprep.subr.bf16.mxu0 %v4610
    %4838 = vmatpush1.bf16.msra.mxu0 %v4609
    %4839 = vmatprep.subr.bf16.mxu0 %v4604
    %4840 = vmatpush1.bf16.msra.mxu0 %v4603
    %4841 = vmatprep.subr.bf16.mxu0 %v4598
    %4842 = vmatpush1.bf16.msra.mxu0 %v4597
    %4843 = vmatprep.subr.bf16.mxu0 %v4592
    %4844 = vmatpush1.bf16.msra.mxu0 %v4591
    %4845 = vmatprep.subr.bf16.mxu0 %v4586
    %4846 = vmatpush1.bf16.msra.mxu0 %v4585
    %4847 = vmatprep.subr.bf16.mxu0 %v4580
    %4848 = vmatpush1.bf16.msra.mxu0 %v4579
    %4849 = vmatprep.subr.bf16.mxu0 %v4574
    %4850 = vmatpush1.bf16.msra.mxu0 %v4573
    %4851 = vmatprep.subr.bf16.mxu0 %v4568
    %4852 = vmatpush1.bf16.msra.mxu0 %v4567
    %4853 = vmatprep.subr.bf16.mxu0 %v4658
    %4854 = vmatpush2.bf16.msra.mxu0 %v4657
    %4855 = vmatprep.subr.bf16.mxu0 %v4652
    %4856 = vmatpush2.bf16.msra.mxu0 %v4651
    %4857 = vmatprep.subr.bf16.mxu0 %v4646
    %4858 = vmatpush2.bf16.msra.mxu0 %v4645
    %4859 = vmatprep.subr.bf16.mxu0 %v4640
    %4860 = vmatpush2.bf16.msra.mxu0 %v4639
    %4861 = vmatprep.subr.bf16.mxu0 %v4634
    %4862 = vmatpush2.bf16.msra.mxu0 %v4633
    %4863 = vmatprep.subr.bf16.mxu0 %v4628
    %4864 = vmatpush2.bf16.msra.mxu0 %v4627
    %4865 = vmatprep.subr.bf16.mxu0 %v4622
    %4866 = vmatpush2.bf16.msra.mxu0 %v4621
    %4867 = vmatprep.subr.bf16.mxu0 %v4616
    %4868 = vmatpush2.bf16.msra.mxu0 %v4615
    %4869 = vmatprep.mubr.bf16.mxu0 %v4272
    %4870 = vmatmul.mubr.bf16.gmra.mxu0 %v4268
    %v4871 = vpop.f32.mrf.mxu0
    %v4872 = vadd.f32 0.0, %v4871
    %v4873 = vpop.f32.mrf.mxu0
    %v4874 = vadd.f32 0.0, %v4873
    %v4875 = vpop.f32.mrf.mxu0
    %v4876 = vpop.f32.mrf.mxu0
    %4877 = vdwg.mxu0
    %v4882 = vrot.slane %v4790, 4
    %v4883 = vrot.slane %v4792, 4
    %v4884 = vrot.slane %v4831, 4
    %v4885 = vrot.slane %v4833, 4
    %v4890 = vadd.f32 %v904, %v4882
    %v4891 = vadd.f32 %v906, %v4883
    %v4892 = vadd.f32 %v945, %v4884
    %v4893 = vadd.f32 %v947, %v4885
    %v4894 = vxor.u32 %v4890, 2147483648
    %v4895 = vxor.u32 %v4891, 2147483648
    %v4896 = vxor.u32 %v4892, 2147483648
    %v4897 = vxor.u32 %v4893, 2147483648
    %v4898 = vmul.f32 %v4894, 1.442695
    %v4899 = vpow.pop %v4898
    %v4900 = vmul.f32 %v4895, 1.442695
    %v4901 = vpow.pop %v4900
    %v4902 = vmul.f32 %v4896, 1.442695
    %v4903 = vpow.pop %v4902
    %v4904 = vmul.f32 %v4897, 1.442695
    %v4905 = vpow.pop %v4904
    %v4906 = vadd.f32 %v4899, 1.0
    %v4907 = vadd.f32 %v4901, 1.0
    %v4908 = vadd.f32 %v4903, 1.0
    %v4909 = vadd.f32 %v4905, 1.0
    %v4910 = vrcp.pop %v4906
    %v4911 = vmul.f32 1.0, %v4910
    %v4912 = vrcp.pop %v4907
    %v4913 = vmul.f32 1.0, %v4912
    %v4914 = vrcp.pop %v4908
    %v4915 = vmul.f32 1.0, %v4914
    %v4916 = vrcp.pop %v4909
    %v4917 = vmul.f32 1.0, %v4916
    %v4918 = vadd.f32 %v4872, %v1738
    %v4919 = vadd.f32 %v4874, %v1742
    %v4922 = vrot.slane %v4918, 4
    %v4923 = vrot.slane %v4919, 4
    %v4926 = vmul.f32 %v4911, %v4922
    %v4927 = vmul.f32 %v4913, %v4923
    %v4928 = vadd.f32 %v986, %v4926
    %v4929 = vadd.f32 %v988, %v4927
    %v4930 = vtanh.pop %v4928
    %v4931 = vtanh.pop %v4929
    %v4932 = vsub.f32 1.0, %v4915
    %v4933 = vsub.f32 1.0, %v4917
    %v4934 = vmul.f32 %v4932, %v4930
    %v4935 = vmul.f32 %v4933, %v4931
    %v4936 = vrot.slane %v4142, 7
    %v4937 = vrot.slane %v4143, 7
    %v4940 = vmul.f32 %v4915, %v4936
    %v4941 = vmul.f32 %v4917, %v4937
    %v4942 = vadd.f32 %v4934, %v4940
    %v4943 = vadd.f32 %v4935, %v4941
    %v4946 = vcombine.high %v4942, %v4943
    %v4948 = vunpack.c.l.s4 1966171168
    %v4949 = vunpack.c.0.s8 %v4948
    %v4950 = vlaneseq
    %v4951 = vshrl.u32 %v4950, 7
    %v4952 = vsub.s32 %v4949, %v4951
    %v4953 = vrot.slane %v4946, %v4952
    %v4955 = vunpack.c.l.s4 1966171168
    %v4956 = vunpack.c.0.s8 %v4955
    %v4957 = vlaneseq
    %v4958 = vshrl.u32 %v4957, 7
    %v4959 = vsub.s32 %v4956, %v4958
    %v4960 = vrot.slane %v4953, %v4959
    %s4962 = scalar_lea.vmem [#allocation10], 4
    %4963 = vst.msk [vmem:[%s4962] ss:$8 sm:$0x3] %vm1782, %v4960
    %4964 = vst.msk [vmem:[%s4962] ss:$8 sm:$0x0] %vm1782, %v4960
    %v4965 = vpack.c.bf16 %v4942, %v4942
    %v4966 = vpack.c.bf16 %v4943, %v4943
    %v4967 = vld [vmem:[#allocation9] sm:$0xff]
    %v4968 = vld [vmem:[#allocation9 + $0x8] sm:$0xff]
    %v4969 = vld [vmem:[#allocation9 + $0x10] sm:$0xff]
    %v4970 = vld [vmem:[#allocation9 + $0x18] sm:$0xff]
    %v4971 = vld [vmem:[#allocation9 + $0x20] sm:$0xff]
    %v4972 = vld [vmem:[#allocation9 + $0x28] sm:$0xff]
    %v4973 = vld [vmem:[#allocation9 + $0x30] sm:$0xff]
    %v4974 = vld [vmem:[#allocation9 + $0x38] sm:$0xff]
    %v4975 = vld [vmem:[#allocation9 + $0x40] sm:$0xff]
    %v4976 = vld [vmem:[#allocation9 + $0x48] sm:$0xff]
    %v4977 = vld [vmem:[#allocation9 + $0x50] sm:$0xff]
    %v4978 = vld [vmem:[#allocation9 + $0x58] sm:$0xff]
    %v4979 = vld [vmem:[#allocation9 + $0x60] sm:$0xff]
    %v4980 = vld [vmem:[#allocation9 + $0x68] sm:$0xff]
    %v4981 = vld [vmem:[#allocation9 + $0x70] sm:$0xff]
    %v4982 = vld [vmem:[#allocation9 + $0x78] sm:$0xff]
    %v4983 = vld [vmem:[#allocation9 + $0x80] sm:$0xff]
    %v4984 = vld [vmem:[#allocation9 + $0x88] sm:$0xff]
    %v4985 = vld [vmem:[#allocation9 + $0x90] sm:$0xff]
    %v4986 = vld [vmem:[#allocation9 + $0x98] sm:$0xff]
    %v4987 = vld [vmem:[#allocation9 + $0xa0] sm:$0xff]
    %v4988 = vld [vmem:[#allocation9 + $0xa8] sm:$0xff]
    %v4989 = vld [vmem:[#allocation9 + $0xb0] sm:$0xff]
    %v4990 = vld [vmem:[#allocation9 + $0xb8] sm:$0xff]
    %v4991 = vld [vmem:[#allocation9 + $0xc0] sm:$0xff]
    %v4992 = vld [vmem:[#allocation9 + $0xc8] sm:$0xff]
    %v4993 = vld [vmem:[#allocation9 + $0xd0] sm:$0xff]
    %v4994 = vld [vmem:[#allocation9 + $0xd8] sm:$0xff]
    %v4995 = vld [vmem:[#allocation9 + $0xe0] sm:$0xff]
    %v4996 = vld [vmem:[#allocation9 + $0xe8] sm:$0xff]
    %v4997 = vld [vmem:[#allocation9 + $0xf0] sm:$0xff]
    %v4998 = vld [vmem:[#allocation9 + $0xf8] sm:$0xff]
    %v4999 = vld [vmem:[#allocation9 + $0x100] sm:$0xff]
    %v5000 = vld [vmem:[#allocation9 + $0x108] sm:$0xff]
    %v5001 = vld [vmem:[#allocation9 + $0x110] sm:$0xff]
    %v5002 = vld [vmem:[#allocation9 + $0x118] sm:$0xff]
    %v5003 = vld [vmem:[#allocation9 + $0x120] sm:$0xff]
    %v5004 = vld [vmem:[#allocation9 + $0x128] sm:$0xff]
    %v5005 = vld [vmem:[#allocation9 + $0x130] sm:$0xff]
    %v5006 = vld [vmem:[#allocation9 + $0x138] sm:$0xff]
    %v5007 = vld [vmem:[#allocation9 + $0x140] sm:$0xff]
    %v5008 = vld [vmem:[#allocation9 + $0x148] sm:$0xff]
    %v5009 = vld [vmem:[#allocation9 + $0x150] sm:$0xff]
    %v5010 = vld [vmem:[#allocation9 + $0x158] sm:$0xff]
    %v5011 = vld [vmem:[#allocation9 + $0x160] sm:$0xff]
    %v5012 = vld [vmem:[#allocation9 + $0x168] sm:$0xff]
    %v5013 = vld [vmem:[#allocation9 + $0x170] sm:$0xff]
    %v5014 = vld [vmem:[#allocation9 + $0x178] sm:$0xff]
    %v5015 = vld [vmem:[#allocation9 + $0x180] sm:$0xff]
    %v5016 = vld [vmem:[#allocation9 + $0x188] sm:$0xff]
    %v5017 = vld [vmem:[#allocation9 + $0x190] sm:$0xff]
    %v5018 = vld [vmem:[#allocation9 + $0x198] sm:$0xff]
    %v5019 = vld [vmem:[#allocation9 + $0x1a0] sm:$0xff]
    %v5020 = vld [vmem:[#allocation9 + $0x1a8] sm:$0xff]
    %v5021 = vld [vmem:[#allocation9 + $0x1b0] sm:$0xff]
    %v5022 = vld [vmem:[#allocation9 + $0x1b8] sm:$0xff]
    %v5023 = vld [vmem:[#allocation9 + $0x1c0] sm:$0xff]
    %v5024 = vld [vmem:[#allocation9 + $0x1c8] sm:$0xff]
    %v5025 = vld [vmem:[#allocation9 + $0x1d0] sm:$0xff]
    %v5026 = vld [vmem:[#allocation9 + $0x1d8] sm:$0xff]
    %v5027 = vld [vmem:[#allocation9 + $0x1e0] sm:$0xff]
    %v5028 = vld [vmem:[#allocation9 + $0x1e8] sm:$0xff]
    %v5029 = vld [vmem:[#allocation9 + $0x1f0] sm:$0xff]
    %v5030 = vld [vmem:[#allocation9 + $0x1f8] sm:$0xff]
    %v5031 = vld [vmem:[#allocation9 + $0x200] sm:$0xff]
    %v5032 = vld [vmem:[#allocation9 + $0x208] sm:$0xff]
    %v5033 = vld [vmem:[#allocation9 + $0x210] sm:$0xff]
    %v5034 = vld [vmem:[#allocation9 + $0x218] sm:$0xff]
    %v5035 = vld [vmem:[#allocation9 + $0x220] sm:$0xff]
    %v5036 = vld [vmem:[#allocation9 + $0x228] sm:$0xff]
    %v5037 = vld [vmem:[#allocation9 + $0x230] sm:$0xff]
    %v5038 = vld [vmem:[#allocation9 + $0x238] sm:$0xff]
    %v5039 = vld [vmem:[#allocation9 + $0x240] sm:$0xff]
    %v5040 = vld [vmem:[#allocation9 + $0x248] sm:$0xff]
    %v5041 = vld [vmem:[#allocation9 + $0x250] sm:$0xff]
    %v5042 = vld [vmem:[#allocation9 + $0x258] sm:$0xff]
    %v5043 = vld [vmem:[#allocation9 + $0x260] sm:$0xff]
    %v5044 = vld [vmem:[#allocation9 + $0x268] sm:$0xff]
    %v5045 = vld [vmem:[#allocation9 + $0x270] sm:$0xff]
    %v5046 = vld [vmem:[#allocation9 + $0x278] sm:$0xff]
    %v5047 = vld [vmem:[#allocation9 + $0x280] sm:$0xff]
    %v5048 = vld [vmem:[#allocation9 + $0x288] sm:$0xff]
    %v5049 = vld [vmem:[#allocation9 + $0x290] sm:$0xff]
    %v5050 = vld [vmem:[#allocation9 + $0x298] sm:$0xff]
    %v5051 = vld [vmem:[#allocation9 + $0x2a0] sm:$0xff]
    %v5052 = vld [vmem:[#allocation9 + $0x2a8] sm:$0xff]
    %v5053 = vld [vmem:[#allocation9 + $0x2b0] sm:$0xff]
    %v5054 = vld [vmem:[#allocation9 + $0x2b8] sm:$0xff]
    %v5055 = vld [vmem:[#allocation9 + $0x2c0] sm:$0xff]
    %v5056 = vld [vmem:[#allocation9 + $0x2c8] sm:$0xff]
    %v5057 = vld [vmem:[#allocation9 + $0x2d0] sm:$0xff]
    %v5058 = vld [vmem:[#allocation9 + $0x2d8] sm:$0xff]
    %v5059 = vld [vmem:[#allocation9 + $0x2e0] sm:$0xff]
    %v5060 = vld [vmem:[#allocation9 + $0x2e8] sm:$0xff]
    %v5061 = vld [vmem:[#allocation9 + $0x2f0] sm:$0xff]
    %v5062 = vld [vmem:[#allocation9 + $0x2f8] sm:$0xff]
    %v5065 = vrot.slane %v4965, 2
    %v5066 = vrot.slane %v4966, 2
    %v5165 = vunpack.c.l.b16 %v4967
    %v5166 = vunpack.c.h.b16 %v4967
    %v5167 = vunpack.c.l.b16 %v4968
    %v5168 = vunpack.c.h.b16 %v4968
    %v5169 = vunpack.c.l.b16 %v4969
    %v5170 = vunpack.c.h.b16 %v4969
    %v5171 = vunpack.c.l.b16 %v4970
    %v5172 = vunpack.c.h.b16 %v4970
    %v5173 = vunpack.c.l.b16 %v4971
    %v5174 = vunpack.c.h.b16 %v4971
    %v5175 = vunpack.c.l.b16 %v4972
    %v5176 = vunpack.c.h.b16 %v4972
    %v5177 = vunpack.c.l.b16 %v4973
    %v5178 = vunpack.c.h.b16 %v4973
    %v5179 = vunpack.c.l.b16 %v4974
    %v5180 = vunpack.c.h.b16 %v4974
    %v5181 = vunpack.c.l.b16 %v4975
    %v5182 = vunpack.c.h.b16 %v4975
    %v5183 = vunpack.c.l.b16 %v4976
    %v5184 = vunpack.c.h.b16 %v4976
    %v5185 = vunpack.c.l.b16 %v4977
    %v5186 = vunpack.c.h.b16 %v4977
    %v5187 = vunpack.c.l.b16 %v4978
    %v5188 = vunpack.c.h.b16 %v4978
    %v5189 = vunpack.c.l.b16 %v4979
    %v5190 = vunpack.c.h.b16 %v4979
    %v5191 = vunpack.c.l.b16 %v4980
    %v5192 = vunpack.c.h.b16 %v4980
    %v5193 = vunpack.c.l.b16 %v4981
    %v5194 = vunpack.c.h.b16 %v4981
    %v5195 = vunpack.c.l.b16 %v4982
    %v5196 = vunpack.c.h.b16 %v4982
    %v5197 = vunpack.c.l.b16 %v4983
    %v5198 = vunpack.c.h.b16 %v4983
    %v5199 = vunpack.c.l.b16 %v4984
    %v5200 = vunpack.c.h.b16 %v4984
    %v5201 = vunpack.c.l.b16 %v4985
    %v5202 = vunpack.c.h.b16 %v4985
    %v5203 = vunpack.c.l.b16 %v4986
    %v5204 = vunpack.c.h.b16 %v4986
    %v5205 = vunpack.c.l.b16 %v4987
    %v5206 = vunpack.c.h.b16 %v4987
    %v5207 = vunpack.c.l.b16 %v4988
    %v5208 = vunpack.c.h.b16 %v4988
    %v5209 = vunpack.c.l.b16 %v4989
    %v5210 = vunpack.c.h.b16 %v4989
    %v5211 = vunpack.c.l.b16 %v4990
    %v5212 = vunpack.c.h.b16 %v4990
    %v5213 = vunpack.c.l.b16 %v4991
    %v5214 = vunpack.c.h.b16 %v4991
    %v5215 = vunpack.c.l.b16 %v4992
    %v5216 = vunpack.c.h.b16 %v4992
    %v5217 = vunpack.c.l.b16 %v4993
    %v5218 = vunpack.c.h.b16 %v4993
    %v5219 = vunpack.c.l.b16 %v4994
    %v5220 = vunpack.c.h.b16 %v4994
    %v5221 = vunpack.c.l.b16 %v4995
    %v5222 = vunpack.c.h.b16 %v4995
    %v5223 = vunpack.c.l.b16 %v4996
    %v5224 = vunpack.c.h.b16 %v4996
    %v5225 = vunpack.c.l.b16 %v4997
    %v5226 = vunpack.c.h.b16 %v4997
    %v5227 = vunpack.c.l.b16 %v4998
    %v5228 = vunpack.c.h.b16 %v4998
    %v5229 = vunpack.c.l.b16 %v4999
    %v5230 = vunpack.c.h.b16 %v4999
    %v5231 = vunpack.c.l.b16 %v5000
    %v5232 = vunpack.c.h.b16 %v5000
    %v5233 = vunpack.c.l.b16 %v5001
    %v5234 = vunpack.c.h.b16 %v5001
    %v5235 = vunpack.c.l.b16 %v5002
    %v5236 = vunpack.c.h.b16 %v5002
    %v5237 = vunpack.c.l.b16 %v5003
    %v5238 = vunpack.c.h.b16 %v5003
    %v5239 = vunpack.c.l.b16 %v5004
    %v5240 = vunpack.c.h.b16 %v5004
    %v5241 = vunpack.c.l.b16 %v5005
    %v5242 = vunpack.c.h.b16 %v5005
    %v5243 = vunpack.c.l.b16 %v5006
    %v5244 = vunpack.c.h.b16 %v5006
    %v5245 = vunpack.c.l.b16 %v5007
    %v5246 = vunpack.c.h.b16 %v5007
    %v5247 = vunpack.c.l.b16 %v5008
    %v5248 = vunpack.c.h.b16 %v5008
    %v5249 = vunpack.c.l.b16 %v5009
    %v5250 = vunpack.c.h.b16 %v5009
    %v5251 = vunpack.c.l.b16 %v5010
    %v5252 = vunpack.c.h.b16 %v5010
    %v5253 = vunpack.c.l.b16 %v5011
    %v5254 = vunpack.c.h.b16 %v5011
    %v5255 = vunpack.c.l.b16 %v5012
    %v5256 = vunpack.c.h.b16 %v5012
    %v5257 = vunpack.c.l.b16 %v5013
    %v5258 = vunpack.c.h.b16 %v5013
    %v5259 = vunpack.c.l.b16 %v5014
    %v5260 = vunpack.c.h.b16 %v5014
    %v5261 = vunpack.c.l.b16 %v5015
    %v5262 = vunpack.c.h.b16 %v5015
    %v5263 = vunpack.c.l.b16 %v5016
    %v5264 = vunpack.c.h.b16 %v5016
    %v5265 = vunpack.c.l.b16 %v5017
    %v5266 = vunpack.c.h.b16 %v5017
    %v5267 = vunpack.c.l.b16 %v5018
    %v5268 = vunpack.c.h.b16 %v5018
    %v5269 = vunpack.c.l.b16 %v5019
    %v5270 = vunpack.c.h.b16 %v5019
    %v5271 = vunpack.c.l.b16 %v5020
    %v5272 = vunpack.c.h.b16 %v5020
    %v5273 = vunpack.c.l.b16 %v5021
    %v5274 = vunpack.c.h.b16 %v5021
    %v5275 = vunpack.c.l.b16 %v5022
    %v5276 = vunpack.c.h.b16 %v5022
    %v5277 = vunpack.c.l.b16 %v5023
    %v5278 = vunpack.c.h.b16 %v5023
    %v5279 = vunpack.c.l.b16 %v5024
    %v5280 = vunpack.c.h.b16 %v5024
    %v5281 = vunpack.c.l.b16 %v5025
    %v5282 = vunpack.c.h.b16 %v5025
    %v5283 = vunpack.c.l.b16 %v5026
    %v5284 = vunpack.c.h.b16 %v5026
    %v5285 = vunpack.c.l.b16 %v5027
    %v5286 = vunpack.c.h.b16 %v5027
    %v5287 = vunpack.c.l.b16 %v5028
    %v5288 = vunpack.c.h.b16 %v5028
    %v5289 = vunpack.c.l.b16 %v5029
    %v5290 = vunpack.c.h.b16 %v5029
    %v5291 = vunpack.c.l.b16 %v5030
    %v5292 = vunpack.c.h.b16 %v5030
    %v5293 = vunpack.c.l.b16 %v5031
    %v5294 = vunpack.c.h.b16 %v5031
    %v5295 = vunpack.c.l.b16 %v5032
    %v5296 = vunpack.c.h.b16 %v5032
    %v5297 = vunpack.c.l.b16 %v5033
    %v5298 = vunpack.c.h.b16 %v5033
    %v5299 = vunpack.c.l.b16 %v5034
    %v5300 = vunpack.c.h.b16 %v5034
    %v5301 = vunpack.c.l.b16 %v5035
    %v5302 = vunpack.c.h.b16 %v5035
    %v5303 = vunpack.c.l.b16 %v5036
    %v5304 = vunpack.c.h.b16 %v5036
    %v5305 = vunpack.c.l.b16 %v5037
    %v5306 = vunpack.c.h.b16 %v5037
    %v5307 = vunpack.c.l.b16 %v5038
    %v5308 = vunpack.c.h.b16 %v5038
    %v5309 = vunpack.c.l.b16 %v5039
    %v5310 = vunpack.c.h.b16 %v5039
    %v5311 = vunpack.c.l.b16 %v5040
    %v5312 = vunpack.c.h.b16 %v5040
    %v5313 = vunpack.c.l.b16 %v5041
    %v5314 = vunpack.c.h.b16 %v5041
    %v5315 = vunpack.c.l.b16 %v5042
    %v5316 = vunpack.c.h.b16 %v5042
    %v5317 = vunpack.c.l.b16 %v5043
    %v5318 = vunpack.c.h.b16 %v5043
    %v5319 = vunpack.c.l.b16 %v5044
    %v5320 = vunpack.c.h.b16 %v5044
    %v5321 = vunpack.c.l.b16 %v5045
    %v5322 = vunpack.c.h.b16 %v5045
    %v5323 = vunpack.c.l.b16 %v5046
    %v5324 = vunpack.c.h.b16 %v5046
    %v5325 = vunpack.c.l.b16 %v5047
    %v5326 = vunpack.c.h.b16 %v5047
    %v5327 = vunpack.c.l.b16 %v5048
    %v5328 = vunpack.c.h.b16 %v5048
    %v5329 = vunpack.c.l.b16 %v5049
    %v5330 = vunpack.c.h.b16 %v5049
    %v5331 = vunpack.c.l.b16 %v5050
    %v5332 = vunpack.c.h.b16 %v5050
    %v5333 = vunpack.c.l.b16 %v5051
    %v5334 = vunpack.c.h.b16 %v5051
    %v5335 = vunpack.c.l.b16 %v5052
    %v5336 = vunpack.c.h.b16 %v5052
    %v5337 = vunpack.c.l.b16 %v5053
    %v5338 = vunpack.c.h.b16 %v5053
    %v5339 = vunpack.c.l.b16 %v5054
    %v5340 = vunpack.c.h.b16 %v5054
    %v5341 = vunpack.c.l.b16 %v5055
    %v5342 = vunpack.c.h.b16 %v5055
    %v5343 = vunpack.c.l.b16 %v5056
    %v5344 = vunpack.c.h.b16 %v5056
    %v5345 = vunpack.c.l.b16 %v5057
    %v5346 = vunpack.c.h.b16 %v5057
    %v5347 = vunpack.c.l.b16 %v5058
    %v5348 = vunpack.c.h.b16 %v5058
    %v5349 = vunpack.c.l.b16 %v5059
    %v5350 = vunpack.c.h.b16 %v5059
    %v5351 = vunpack.c.l.b16 %v5060
    %v5352 = vunpack.c.h.b16 %v5060
    %v5353 = vunpack.c.l.b16 %v5061
    %v5354 = vunpack.c.h.b16 %v5061
    %v5355 = vunpack.c.l.b16 %v5062
    %v5356 = vunpack.c.h.b16 %v5062
    %v5357 = vpack.c.b16 %v5171, %v5165
    %v5358 = vpack.c.b16 %v5172, %v5166
    %v5359 = vpack.c.b16 %v5173, %v5167
    %v5360 = vpack.c.b16 %v5174, %v5168
    %v5361 = vpack.c.b16 %v5175, %v5169
    %v5362 = vpack.c.b16 %v5176, %v5170
    %v5363 = vpack.c.b16 %v5183, %v5177
    %v5364 = vpack.c.b16 %v5184, %v5178
    %v5365 = vpack.c.b16 %v5185, %v5179
    %v5366 = vpack.c.b16 %v5186, %v5180
    %v5367 = vpack.c.b16 %v5187, %v5181
    %v5368 = vpack.c.b16 %v5188, %v5182
    %v5369 = vpack.c.b16 %v5195, %v5189
    %v5370 = vpack.c.b16 %v5196, %v5190
    %v5371 = vpack.c.b16 %v5197, %v5191
    %v5372 = vpack.c.b16 %v5198, %v5192
    %v5373 = vpack.c.b16 %v5199, %v5193
    %v5374 = vpack.c.b16 %v5200, %v5194
    %v5375 = vpack.c.b16 %v5207, %v5201
    %v5376 = vpack.c.b16 %v5208, %v5202
    %v5377 = vpack.c.b16 %v5209, %v5203
    %v5378 = vpack.c.b16 %v5210, %v5204
    %v5379 = vpack.c.b16 %v5211, %v5205
    %v5380 = vpack.c.b16 %v5212, %v5206
    %v5381 = vpack.c.b16 %v5219, %v5213
    %v5382 = vpack.c.b16 %v5220, %v5214
    %v5383 = vpack.c.b16 %v5221, %v5215
    %v5384 = vpack.c.b16 %v5222, %v5216
    %v5385 = vpack.c.b16 %v5223, %v5217
    %v5386 = vpack.c.b16 %v5224, %v5218
    %v5387 = vpack.c.b16 %v5231, %v5225
    %v5388 = vpack.c.b16 %v5232, %v5226
    %v5389 = vpack.c.b16 %v5233, %v5227
    %v5390 = vpack.c.b16 %v5234, %v5228
    %v5391 = vpack.c.b16 %v5235, %v5229
    %v5392 = vpack.c.b16 %v5236, %v5230
    %v5393 = vpack.c.b16 %v5243, %v5237
    %v5394 = vpack.c.b16 %v5244, %v5238
    %v5395 = vpack.c.b16 %v5245, %v5239
    %v5396 = vpack.c.b16 %v5246, %v5240
    %v5397 = vpack.c.b16 %v5247, %v5241
    %v5398 = vpack.c.b16 %v5248, %v5242
    %v5399 = vpack.c.b16 %v5255, %v5249
    %v5400 = vpack.c.b16 %v5256, %v5250
    %v5401 = vpack.c.b16 %v5257, %v5251
    %v5402 = vpack.c.b16 %v5258, %v5252
    %v5403 = vpack.c.b16 %v5259, %v5253
    %v5404 = vpack.c.b16 %v5260, %v5254
    %v5405 = vpack.c.b16 %v5267, %v5261
    %v5406 = vpack.c.b16 %v5268, %v5262
    %v5407 = vpack.c.b16 %v5269, %v5263
    %v5408 = vpack.c.b16 %v5270, %v5264
    %v5409 = vpack.c.b16 %v5271, %v5265
    %v5410 = vpack.c.b16 %v5272, %v5266
    %v5411 = vpack.c.b16 %v5279, %v5273
    %v5412 = vpack.c.b16 %v5280, %v5274
    %v5413 = vpack.c.b16 %v5281, %v5275
    %v5414 = vpack.c.b16 %v5282, %v5276
    %v5415 = vpack.c.b16 %v5283, %v5277
    %v5416 = vpack.c.b16 %v5284, %v5278
    %v5417 = vpack.c.b16 %v5291, %v5285
    %v5418 = vpack.c.b16 %v5292, %v5286
    %v5419 = vpack.c.b16 %v5293, %v5287
    %v5420 = vpack.c.b16 %v5294, %v5288
    %v5421 = vpack.c.b16 %v5295, %v5289
    %v5422 = vpack.c.b16 %v5296, %v5290
    %v5423 = vpack.c.b16 %v5303, %v5297
    %v5424 = vpack.c.b16 %v5304, %v5298
    %v5425 = vpack.c.b16 %v5305, %v5299
    %v5426 = vpack.c.b16 %v5306, %v5300
    %v5427 = vpack.c.b16 %v5307, %v5301
    %v5428 = vpack.c.b16 %v5308, %v5302
    %v5429 = vpack.c.b16 %v5315, %v5309
    %v5430 = vpack.c.b16 %v5316, %v5310
    %v5431 = vpack.c.b16 %v5317, %v5311
    %v5432 = vpack.c.b16 %v5318, %v5312
    %v5433 = vpack.c.b16 %v5319, %v5313
    %v5434 = vpack.c.b16 %v5320, %v5314
    %v5435 = vpack.c.b16 %v5327, %v5321
    %v5436 = vpack.c.b16 %v5328, %v5322
    %v5437 = vpack.c.b16 %v5329, %v5323
    %v5438 = vpack.c.b16 %v5330, %v5324
    %v5439 = vpack.c.b16 %v5331, %v5325
    %v5440 = vpack.c.b16 %v5332, %v5326
    %v5441 = vpack.c.b16 %v5339, %v5333
    %v5442 = vpack.c.b16 %v5340, %v5334
    %v5443 = vpack.c.b16 %v5341, %v5335
    %v5444 = vpack.c.b16 %v5342, %v5336
    %v5445 = vpack.c.b16 %v5343, %v5337
    %v5446 = vpack.c.b16 %v5344, %v5338
    %v5447 = vpack.c.b16 %v5351, %v5345
    %v5448 = vpack.c.b16 %v5352, %v5346
    %v5449 = vpack.c.b16 %v5353, %v5347
    %v5450 = vpack.c.b16 %v5354, %v5348
    %v5451 = vpack.c.b16 %v5355, %v5349
    %v5452 = vpack.c.b16 %v5356, %v5350
    %5549 = vmatprep.subr.bf16.mxu0 %v5400
    %5550 = vmatpush1.bf16.msra.mxu0 %v5399
    %5551 = vmatprep.subr.bf16.mxu0 %v5394
    %5552 = vmatpush1.bf16.msra.mxu0 %v5393
    %5553 = vmatprep.subr.bf16.mxu0 %v5388
    %5554 = vmatpush1.bf16.msra.mxu0 %v5387
    %5555 = vmatprep.subr.bf16.mxu0 %v5382
    %5556 = vmatpush1.bf16.msra.mxu0 %v5381
    %5557 = vmatprep.subr.bf16.mxu0 %v5376
    %5558 = vmatpush1.bf16.msra.mxu0 %v5375
    %5559 = vmatprep.subr.bf16.mxu0 %v5370
    %5560 = vmatpush1.bf16.msra.mxu0 %v5369
    %5561 = vmatprep.subr.bf16.mxu0 %v5364
    %5562 = vmatpush1.bf16.msra.mxu0 %v5363
    %5563 = vmatprep.subr.bf16.mxu0 %v5358
    %5564 = vmatpush1.bf16.msra.mxu0 %v5357
    %5565 = vmatprep.subr.bf16.mxu0 %v5448
    %5566 = vmatpush2.bf16.msra.mxu0 %v5447
    %5567 = vmatprep.subr.bf16.mxu0 %v5442
    %5568 = vmatpush2.bf16.msra.mxu0 %v5441
    %5569 = vmatprep.subr.bf16.mxu0 %v5436
    %5570 = vmatpush2.bf16.msra.mxu0 %v5435
    %5571 = vmatprep.subr.bf16.mxu0 %v5430
    %5572 = vmatpush2.bf16.msra.mxu0 %v5429
    %5573 = vmatprep.subr.bf16.mxu0 %v5424
    %5574 = vmatpush2.bf16.msra.mxu0 %v5423
    %5575 = vmatprep.subr.bf16.mxu0 %v5418
    %5576 = vmatpush2.bf16.msra.mxu0 %v5417
    %5577 = vmatprep.subr.bf16.mxu0 %v5412
    %5578 = vmatpush2.bf16.msra.mxu0 %v5411
    %5579 = vmatprep.subr.bf16.mxu0 %v5406
    %5580 = vmatpush2.bf16.msra.mxu0 %v5405
    %5581 = vmatprep.mubr.bf16.mxu0 %v5066
    %5582 = vmatmul.mubr.bf16.gmra.mxu0 %v5065
    %v5583 = vpop.f32.mrf.mxu0
    %v5584 = vadd.f32 0.0, %v5583
    %v5585 = vpop.f32.mrf.mxu0
    %v5586 = vadd.f32 0.0, %v5585
    %v5587 = vpop.f32.mrf.mxu0
    %v5588 = vpop.f32.mrf.mxu0
    %5589 = vdwg.mxu0
    %5590 = vmatprep.subr.bf16.mxu0 %v5402
    %5591 = vmatpush1.bf16.msra.mxu0 %v5401
    %5592 = vmatprep.subr.bf16.mxu0 %v5396
    %5593 = vmatpush1.bf16.msra.mxu0 %v5395
    %5594 = vmatprep.subr.bf16.mxu0 %v5390
    %5595 = vmatpush1.bf16.msra.mxu0 %v5389
    %5596 = vmatprep.subr.bf16.mxu0 %v5384
    %5597 = vmatpush1.bf16.msra.mxu0 %v5383
    %5598 = vmatprep.subr.bf16.mxu0 %v5378
    %5599 = vmatpush1.bf16.msra.mxu0 %v5377
    %5600 = vmatprep.subr.bf16.mxu0 %v5372
    %5601 = vmatpush1.bf16.msra.mxu0 %v5371
    %5602 = vmatprep.subr.bf16.mxu0 %v5366
    %5603 = vmatpush1.bf16.msra.mxu0 %v5365
    %5604 = vmatprep.subr.bf16.mxu0 %v5360
    %5605 = vmatpush1.bf16.msra.mxu0 %v5359
    %5606 = vmatprep.subr.bf16.mxu0 %v5450
    %5607 = vmatpush2.bf16.msra.mxu0 %v5449
    %5608 = vmatprep.subr.bf16.mxu0 %v5444
    %5609 = vmatpush2.bf16.msra.mxu0 %v5443
    %5610 = vmatprep.subr.bf16.mxu0 %v5438
    %5611 = vmatpush2.bf16.msra.mxu0 %v5437
    %5612 = vmatprep.subr.bf16.mxu0 %v5432
    %5613 = vmatpush2.bf16.msra.mxu0 %v5431
    %5614 = vmatprep.subr.bf16.mxu0 %v5426
    %5615 = vmatpush2.bf16.msra.mxu0 %v5425
    %5616 = vmatprep.subr.bf16.mxu0 %v5420
    %5617 = vmatpush2.bf16.msra.mxu0 %v5419
    %5618 = vmatprep.subr.bf16.mxu0 %v5414
    %5619 = vmatpush2.bf16.msra.mxu0 %v5413
    %5620 = vmatprep.subr.bf16.mxu0 %v5408
    %5621 = vmatpush2.bf16.msra.mxu0 %v5407
    %5622 = vmatprep.mubr.bf16.mxu0 %v5066
    %5623 = vmatmul.mubr.bf16.gmra.mxu0 %v5065
    %v5624 = vpop.f32.mrf.mxu0
    %v5625 = vadd.f32 0.0, %v5624
    %v5626 = vpop.f32.mrf.mxu0
    %v5627 = vadd.f32 0.0, %v5626
    %v5628 = vpop.f32.mrf.mxu0
    %v5629 = vpop.f32.mrf.mxu0
    %5630 = vdwg.mxu0
    %5631 = vmatprep.subr.bf16.mxu0 %v5404
    %5632 = vmatpush1.bf16.msra.mxu0 %v5403
    %5633 = vmatprep.subr.bf16.mxu0 %v5398
    %5634 = vmatpush1.bf16.msra.mxu0 %v5397
    %5635 = vmatprep.subr.bf16.mxu0 %v5392
    %5636 = vmatpush1.bf16.msra.mxu0 %v5391
    %5637 = vmatprep.subr.bf16.mxu0 %v5386
    %5638 = vmatpush1.bf16.msra.mxu0 %v5385
    %5639 = vmatprep.subr.bf16.mxu0 %v5380
    %5640 = vmatpush1.bf16.msra.mxu0 %v5379
    %5641 = vmatprep.subr.bf16.mxu0 %v5374
    %5642 = vmatpush1.bf16.msra.mxu0 %v5373
    %5643 = vmatprep.subr.bf16.mxu0 %v5368
    %5644 = vmatpush1.bf16.msra.mxu0 %v5367
    %5645 = vmatprep.subr.bf16.mxu0 %v5362
    %5646 = vmatpush1.bf16.msra.mxu0 %v5361
    %5647 = vmatprep.subr.bf16.mxu0 %v5452
    %5648 = vmatpush2.bf16.msra.mxu0 %v5451
    %5649 = vmatprep.subr.bf16.mxu0 %v5446
    %5650 = vmatpush2.bf16.msra.mxu0 %v5445
    %5651 = vmatprep.subr.bf16.mxu0 %v5440
    %5652 = vmatpush2.bf16.msra.mxu0 %v5439
    %5653 = vmatprep.subr.bf16.mxu0 %v5434
    %5654 = vmatpush2.bf16.msra.mxu0 %v5433
    %5655 = vmatprep.subr.bf16.mxu0 %v5428
    %5656 = vmatpush2.bf16.msra.mxu0 %v5427
    %5657 = vmatprep.subr.bf16.mxu0 %v5422
    %5658 = vmatpush2.bf16.msra.mxu0 %v5421
    %5659 = vmatprep.subr.bf16.mxu0 %v5416
    %5660 = vmatpush2.bf16.msra.mxu0 %v5415
    %5661 = vmatprep.subr.bf16.mxu0 %v5410
    %5662 = vmatpush2.bf16.msra.mxu0 %v5409
    %5663 = vmatprep.mubr.bf16.mxu0 %v5066
    %5664 = vmatmul.mubr.bf16.gmra.mxu0 %v5065
    %v5665 = vpop.f32.mrf.mxu0
    %v5666 = vadd.f32 0.0, %v5665
    %v5667 = vpop.f32.mrf.mxu0
    %v5668 = vadd.f32 0.0, %v5667
    %v5669 = vpop.f32.mrf.mxu0
    %v5670 = vpop.f32.mrf.mxu0
    %5671 = vdwg.mxu0
    %v5676 = vrot.slane %v5584, 3
    %v5677 = vrot.slane %v5586, 3
    %v5678 = vrot.slane %v5625, 3
    %v5679 = vrot.slane %v5627, 3
    %v5684 = vadd.f32 %v904, %v5676
    %v5685 = vadd.f32 %v906, %v5677
    %v5686 = vadd.f32 %v945, %v5678
    %v5687 = vadd.f32 %v947, %v5679
    %v5688 = vxor.u32 %v5684, 2147483648
    %v5689 = vxor.u32 %v5685, 2147483648
    %v5690 = vxor.u32 %v5686, 2147483648
    %v5691 = vxor.u32 %v5687, 2147483648
    %v5692 = vmul.f32 %v5688, 1.442695
    %v5693 = vpow.pop %v5692
    %v5694 = vmul.f32 %v5689, 1.442695
    %v5695 = vpow.pop %v5694
    %v5696 = vmul.f32 %v5690, 1.442695
    %v5697 = vpow.pop %v5696
    %v5698 = vmul.f32 %v5691, 1.442695
    %v5699 = vpow.pop %v5698
    %v5700 = vadd.f32 %v5693, 1.0
    %v5701 = vadd.f32 %v5695, 1.0
    %v5702 = vadd.f32 %v5697, 1.0
    %v5703 = vadd.f32 %v5699, 1.0
    %v5704 = vrcp.pop %v5700
    %v5705 = vmul.f32 1.0, %v5704
    %v5706 = vrcp.pop %v5701
    %v5707 = vmul.f32 1.0, %v5706
    %v5708 = vrcp.pop %v5702
    %v5709 = vmul.f32 1.0, %v5708
    %v5710 = vrcp.pop %v5703
    %v5711 = vmul.f32 1.0, %v5710
    %v5712 = vadd.f32 %v5666, %v1738
    %v5713 = vadd.f32 %v5668, %v1742
    %v5716 = vrot.slane %v5712, 3
    %v5717 = vrot.slane %v5713, 3
    %v5720 = vmul.f32 %v5705, %v5716
    %v5721 = vmul.f32 %v5707, %v5717
    %v5722 = vadd.f32 %v986, %v5720
    %v5723 = vadd.f32 %v988, %v5721
    %v5724 = vtanh.pop %v5722
    %v5725 = vtanh.pop %v5723
    %v5726 = vsub.f32 1.0, %v5709
    %v5727 = vsub.f32 1.0, %v5711
    %v5728 = vmul.f32 %v5726, %v5724
    %v5729 = vmul.f32 %v5727, %v5725
    %v5730 = vrot.slane %v4942, 7
    %v5731 = vrot.slane %v4943, 7
    %v5734 = vmul.f32 %v5709, %v5730
    %v5735 = vmul.f32 %v5711, %v5731
    %v5736 = vadd.f32 %v5728, %v5734
    %v5737 = vadd.f32 %v5729, %v5735
    %v5740 = vcombine.high %v5736, %v5737
    %v5742 = vunpack.c.l.s4 1966171168
    %v5743 = vunpack.c.0.s8 %v5742
    %v5744 = vlaneseq
    %v5745 = vshrl.u32 %v5744, 7
    %v5746 = vsub.s32 %v5743, %v5745
    %v5747 = vrot.slane %v5740, %v5746
    %v5748 = vcombine.high %v5747, %v5747
    %v5750 = vunpack.c.l.s4 1966171168
    %v5751 = vunpack.c.0.s8 %v5750
    %v5752 = vlaneseq
    %v5753 = vshrl.u32 %v5752, 7
    %v5754 = vsub.s32 %v5751, %v5753
    %v5755 = vrot.slane %v5748, %v5754
    %s5757 = scalar_lea.vmem [#allocation10], 5
    %5758 = vst.msk [vmem:[%s5757] ss:$8 sm:$0x3] %vm1782, %v5755
    %5759 = vst.msk [vmem:[%s5757] ss:$8 sm:$0x0] %vm1782, %v5755
    %v5760 = vpack.c.bf16 %v5736, %v5736
    %v5761 = vpack.c.bf16 %v5737, %v5737
    %v5762 = vld [vmem:[#allocation9] sm:$0xff]
    %v5763 = vld [vmem:[#allocation9 + $0x8] sm:$0xff]
    %v5764 = vld [vmem:[#allocation9 + $0x10] sm:$0xff]
    %v5765 = vld [vmem:[#allocation9 + $0x18] sm:$0xff]
    %v5766 = vld [vmem:[#allocation9 + $0x20] sm:$0xff]
    %v5767 = vld [vmem:[#allocation9 + $0x28] sm:$0xff]
    %v5768 = vld [vmem:[#allocation9 + $0x30] sm:$0xff]
    %v5769 = vld [vmem:[#allocation9 + $0x38] sm:$0xff]
    %v5770 = vld [vmem:[#allocation9 + $0x40] sm:$0xff]
    %v5771 = vld [vmem:[#allocation9 + $0x48] sm:$0xff]
    %v5772 = vld [vmem:[#allocation9 + $0x50] sm:$0xff]
    %v5773 = vld [vmem:[#allocation9 + $0x58] sm:$0xff]
    %v5774 = vld [vmem:[#allocation9 + $0x60] sm:$0xff]
    %v5775 = vld [vmem:[#allocation9 + $0x68] sm:$0xff]
    %v5776 = vld [vmem:[#allocation9 + $0x70] sm:$0xff]
    %v5777 = vld [vmem:[#allocation9 + $0x78] sm:$0xff]
    %v5778 = vld [vmem:[#allocation9 + $0x80] sm:$0xff]
    %v5779 = vld [vmem:[#allocation9 + $0x88] sm:$0xff]
    %v5780 = vld [vmem:[#allocation9 + $0x90] sm:$0xff]
    %v5781 = vld [vmem:[#allocation9 + $0x98] sm:$0xff]
    %v5782 = vld [vmem:[#allocation9 + $0xa0] sm:$0xff]
    %v5783 = vld [vmem:[#allocation9 + $0xa8] sm:$0xff]
    %v5784 = vld [vmem:[#allocation9 + $0xb0] sm:$0xff]
    %v5785 = vld [vmem:[#allocation9 + $0xb8] sm:$0xff]
    %v5786 = vld [vmem:[#allocation9 + $0xc0] sm:$0xff]
    %v5787 = vld [vmem:[#allocation9 + $0xc8] sm:$0xff]
    %v5788 = vld [vmem:[#allocation9 + $0xd0] sm:$0xff]
    %v5789 = vld [vmem:[#allocation9 + $0xd8] sm:$0xff]
    %v5790 = vld [vmem:[#allocation9 + $0xe0] sm:$0xff]
    %v5791 = vld [vmem:[#allocation9 + $0xe8] sm:$0xff]
    %v5792 = vld [vmem:[#allocation9 + $0xf0] sm:$0xff]
    %v5793 = vld [vmem:[#allocation9 + $0xf8] sm:$0xff]
    %v5794 = vld [vmem:[#allocation9 + $0x100] sm:$0xff]
    %v5795 = vld [vmem:[#allocation9 + $0x108] sm:$0xff]
    %v5796 = vld [vmem:[#allocation9 + $0x110] sm:$0xff]
    %v5797 = vld [vmem:[#allocation9 + $0x118] sm:$0xff]
    %v5798 = vld [vmem:[#allocation9 + $0x120] sm:$0xff]
    %v5799 = vld [vmem:[#allocation9 + $0x128] sm:$0xff]
    %v5800 = vld [vmem:[#allocation9 + $0x130] sm:$0xff]
    %v5801 = vld [vmem:[#allocation9 + $0x138] sm:$0xff]
    %v5802 = vld [vmem:[#allocation9 + $0x140] sm:$0xff]
    %v5803 = vld [vmem:[#allocation9 + $0x148] sm:$0xff]
    %v5804 = vld [vmem:[#allocation9 + $0x150] sm:$0xff]
    %v5805 = vld [vmem:[#allocation9 + $0x158] sm:$0xff]
    %v5806 = vld [vmem:[#allocation9 + $0x160] sm:$0xff]
    %v5807 = vld [vmem:[#allocation9 + $0x168] sm:$0xff]
    %v5808 = vld [vmem:[#allocation9 + $0x170] sm:$0xff]
    %v5809 = vld [vmem:[#allocation9 + $0x178] sm:$0xff]
    %v5810 = vld [vmem:[#allocation9 + $0x180] sm:$0xff]
    %v5811 = vld [vmem:[#allocation9 + $0x188] sm:$0xff]
    %v5812 = vld [vmem:[#allocation9 + $0x190] sm:$0xff]
    %v5813 = vld [vmem:[#allocation9 + $0x198] sm:$0xff]
    %v5814 = vld [vmem:[#allocation9 + $0x1a0] sm:$0xff]
    %v5815 = vld [vmem:[#allocation9 + $0x1a8] sm:$0xff]
    %v5816 = vld [vmem:[#allocation9 + $0x1b0] sm:$0xff]
    %v5817 = vld [vmem:[#allocation9 + $0x1b8] sm:$0xff]
    %v5818 = vld [vmem:[#allocation9 + $0x1c0] sm:$0xff]
    %v5819 = vld [vmem:[#allocation9 + $0x1c8] sm:$0xff]
    %v5820 = vld [vmem:[#allocation9 + $0x1d0] sm:$0xff]
    %v5821 = vld [vmem:[#allocation9 + $0x1d8] sm:$0xff]
    %v5822 = vld [vmem:[#allocation9 + $0x1e0] sm:$0xff]
    %v5823 = vld [vmem:[#allocation9 + $0x1e8] sm:$0xff]
    %v5824 = vld [vmem:[#allocation9 + $0x1f0] sm:$0xff]
    %v5825 = vld [vmem:[#allocation9 + $0x1f8] sm:$0xff]
    %v5826 = vld [vmem:[#allocation9 + $0x200] sm:$0xff]
    %v5827 = vld [vmem:[#allocation9 + $0x208] sm:$0xff]
    %v5828 = vld [vmem:[#allocation9 + $0x210] sm:$0xff]
    %v5829 = vld [vmem:[#allocation9 + $0x218] sm:$0xff]
    %v5830 = vld [vmem:[#allocation9 + $0x220] sm:$0xff]
    %v5831 = vld [vmem:[#allocation9 + $0x228] sm:$0xff]
    %v5832 = vld [vmem:[#allocation9 + $0x230] sm:$0xff]
    %v5833 = vld [vmem:[#allocation9 + $0x238] sm:$0xff]
    %v5834 = vld [vmem:[#allocation9 + $0x240] sm:$0xff]
    %v5835 = vld [vmem:[#allocation9 + $0x248] sm:$0xff]
    %v5836 = vld [vmem:[#allocation9 + $0x250] sm:$0xff]
    %v5837 = vld [vmem:[#allocation9 + $0x258] sm:$0xff]
    %v5838 = vld [vmem:[#allocation9 + $0x260] sm:$0xff]
    %v5839 = vld [vmem:[#allocation9 + $0x268] sm:$0xff]
    %v5840 = vld [vmem:[#allocation9 + $0x270] sm:$0xff]
    %v5841 = vld [vmem:[#allocation9 + $0x278] sm:$0xff]
    %v5842 = vld [vmem:[#allocation9 + $0x280] sm:$0xff]
    %v5843 = vld [vmem:[#allocation9 + $0x288] sm:$0xff]
    %v5844 = vld [vmem:[#allocation9 + $0x290] sm:$0xff]
    %v5845 = vld [vmem:[#allocation9 + $0x298] sm:$0xff]
    %v5846 = vld [vmem:[#allocation9 + $0x2a0] sm:$0xff]
    %v5847 = vld [vmem:[#allocation9 + $0x2a8] sm:$0xff]
    %v5848 = vld [vmem:[#allocation9 + $0x2b0] sm:$0xff]
    %v5849 = vld [vmem:[#allocation9 + $0x2b8] sm:$0xff]
    %v5850 = vld [vmem:[#allocation9 + $0x2c0] sm:$0xff]
    %v5851 = vld [vmem:[#allocation9 + $0x2c8] sm:$0xff]
    %v5852 = vld [vmem:[#allocation9 + $0x2d0] sm:$0xff]
    %v5853 = vld [vmem:[#allocation9 + $0x2d8] sm:$0xff]
    %v5854 = vld [vmem:[#allocation9 + $0x2e0] sm:$0xff]
    %v5855 = vld [vmem:[#allocation9 + $0x2e8] sm:$0xff]
    %v5856 = vld [vmem:[#allocation9 + $0x2f0] sm:$0xff]
    %v5857 = vld [vmem:[#allocation9 + $0x2f8] sm:$0xff]
    %v5859 = vshrl.u32 %v5760, 16
    %v5861 = vrot.slane %v5859, 2
    %v5863 = vshrl.u32 %v5761, 16
    %v5865 = vrot.slane %v5863, 2
    %v5964 = vunpack.c.l.b16 %v5762
    %v5965 = vunpack.c.h.b16 %v5762
    %v5966 = vunpack.c.l.b16 %v5763
    %v5967 = vunpack.c.h.b16 %v5763
    %v5968 = vunpack.c.l.b16 %v5764
    %v5969 = vunpack.c.h.b16 %v5764
    %v5970 = vunpack.c.l.b16 %v5765
    %v5971 = vunpack.c.h.b16 %v5765
    %v5972 = vunpack.c.l.b16 %v5766
    %v5973 = vunpack.c.h.b16 %v5766
    %v5974 = vunpack.c.l.b16 %v5767
    %v5975 = vunpack.c.h.b16 %v5767
    %v5976 = vunpack.c.l.b16 %v5768
    %v5977 = vunpack.c.h.b16 %v5768
    %v5978 = vunpack.c.l.b16 %v5769
    %v5979 = vunpack.c.h.b16 %v5769
    %v5980 = vunpack.c.l.b16 %v5770
    %v5981 = vunpack.c.h.b16 %v5770
    %v5982 = vunpack.c.l.b16 %v5771
    %v5983 = vunpack.c.h.b16 %v5771
    %v5984 = vunpack.c.l.b16 %v5772
    %v5985 = vunpack.c.h.b16 %v5772
    %v5986 = vunpack.c.l.b16 %v5773
    %v5987 = vunpack.c.h.b16 %v5773
    %v5988 = vunpack.c.l.b16 %v5774
    %v5989 = vunpack.c.h.b16 %v5774
    %v5990 = vunpack.c.l.b16 %v5775
    %v5991 = vunpack.c.h.b16 %v5775
    %v5992 = vunpack.c.l.b16 %v5776
    %v5993 = vunpack.c.h.b16 %v5776
    %v5994 = vunpack.c.l.b16 %v5777
    %v5995 = vunpack.c.h.b16 %v5777
    %v5996 = vunpack.c.l.b16 %v5778
    %v5997 = vunpack.c.h.b16 %v5778
    %v5998 = vunpack.c.l.b16 %v5779
    %v5999 = vunpack.c.h.b16 %v5779
    %v6000 = vunpack.c.l.b16 %v5780
    %v6001 = vunpack.c.h.b16 %v5780
    %v6002 = vunpack.c.l.b16 %v5781
    %v6003 = vunpack.c.h.b16 %v5781
    %v6004 = vunpack.c.l.b16 %v5782
    %v6005 = vunpack.c.h.b16 %v5782
    %v6006 = vunpack.c.l.b16 %v5783
    %v6007 = vunpack.c.h.b16 %v5783
    %v6008 = vunpack.c.l.b16 %v5784
    %v6009 = vunpack.c.h.b16 %v5784
    %v6010 = vunpack.c.l.b16 %v5785
    %v6011 = vunpack.c.h.b16 %v5785
    %v6012 = vunpack.c.l.b16 %v5786
    %v6013 = vunpack.c.h.b16 %v5786
    %v6014 = vunpack.c.l.b16 %v5787
    %v6015 = vunpack.c.h.b16 %v5787
    %v6016 = vunpack.c.l.b16 %v5788
    %v6017 = vunpack.c.h.b16 %v5788
    %v6018 = vunpack.c.l.b16 %v5789
    %v6019 = vunpack.c.h.b16 %v5789
    %v6020 = vunpack.c.l.b16 %v5790
    %v6021 = vunpack.c.h.b16 %v5790
    %v6022 = vunpack.c.l.b16 %v5791
    %v6023 = vunpack.c.h.b16 %v5791
    %v6024 = vunpack.c.l.b16 %v5792
    %v6025 = vunpack.c.h.b16 %v5792
    %v6026 = vunpack.c.l.b16 %v5793
    %v6027 = vunpack.c.h.b16 %v5793
    %v6028 = vunpack.c.l.b16 %v5794
    %v6029 = vunpack.c.h.b16 %v5794
    %v6030 = vunpack.c.l.b16 %v5795
    %v6031 = vunpack.c.h.b16 %v5795
    %v6032 = vunpack.c.l.b16 %v5796
    %v6033 = vunpack.c.h.b16 %v5796
    %v6034 = vunpack.c.l.b16 %v5797
    %v6035 = vunpack.c.h.b16 %v5797
    %v6036 = vunpack.c.l.b16 %v5798
    %v6037 = vunpack.c.h.b16 %v5798
    %v6038 = vunpack.c.l.b16 %v5799
    %v6039 = vunpack.c.h.b16 %v5799
    %v6040 = vunpack.c.l.b16 %v5800
    %v6041 = vunpack.c.h.b16 %v5800
    %v6042 = vunpack.c.l.b16 %v5801
    %v6043 = vunpack.c.h.b16 %v5801
    %v6044 = vunpack.c.l.b16 %v5802
    %v6045 = vunpack.c.h.b16 %v5802
    %v6046 = vunpack.c.l.b16 %v5803
    %v6047 = vunpack.c.h.b16 %v5803
    %v6048 = vunpack.c.l.b16 %v5804
    %v6049 = vunpack.c.h.b16 %v5804
    %v6050 = vunpack.c.l.b16 %v5805
    %v6051 = vunpack.c.h.b16 %v5805
    %v6052 = vunpack.c.l.b16 %v5806
    %v6053 = vunpack.c.h.b16 %v5806
    %v6054 = vunpack.c.l.b16 %v5807
    %v6055 = vunpack.c.h.b16 %v5807
    %v6056 = vunpack.c.l.b16 %v5808
    %v6057 = vunpack.c.h.b16 %v5808
    %v6058 = vunpack.c.l.b16 %v5809
    %v6059 = vunpack.c.h.b16 %v5809
    %v6060 = vunpack.c.l.b16 %v5810
    %v6061 = vunpack.c.h.b16 %v5810
    %v6062 = vunpack.c.l.b16 %v5811
    %v6063 = vunpack.c.h.b16 %v5811
    %v6064 = vunpack.c.l.b16 %v5812
    %v6065 = vunpack.c.h.b16 %v5812
    %v6066 = vunpack.c.l.b16 %v5813
    %v6067 = vunpack.c.h.b16 %v5813
    %v6068 = vunpack.c.l.b16 %v5814
    %v6069 = vunpack.c.h.b16 %v5814
    %v6070 = vunpack.c.l.b16 %v5815
    %v6071 = vunpack.c.h.b16 %v5815
    %v6072 = vunpack.c.l.b16 %v5816
    %v6073 = vunpack.c.h.b16 %v5816
    %v6074 = vunpack.c.l.b16 %v5817
    %v6075 = vunpack.c.h.b16 %v5817
    %v6076 = vunpack.c.l.b16 %v5818
    %v6077 = vunpack.c.h.b16 %v5818
    %v6078 = vunpack.c.l.b16 %v5819
    %v6079 = vunpack.c.h.b16 %v5819
    %v6080 = vunpack.c.l.b16 %v5820
    %v6081 = vunpack.c.h.b16 %v5820
    %v6082 = vunpack.c.l.b16 %v5821
    %v6083 = vunpack.c.h.b16 %v5821
    %v6084 = vunpack.c.l.b16 %v5822
    %v6085 = vunpack.c.h.b16 %v5822
    %v6086 = vunpack.c.l.b16 %v5823
    %v6087 = vunpack.c.h.b16 %v5823
    %v6088 = vunpack.c.l.b16 %v5824
    %v6089 = vunpack.c.h.b16 %v5824
    %v6090 = vunpack.c.l.b16 %v5825
    %v6091 = vunpack.c.h.b16 %v5825
    %v6092 = vunpack.c.l.b16 %v5826
    %v6093 = vunpack.c.h.b16 %v5826
    %v6094 = vunpack.c.l.b16 %v5827
    %v6095 = vunpack.c.h.b16 %v5827
    %v6096 = vunpack.c.l.b16 %v5828
    %v6097 = vunpack.c.h.b16 %v5828
    %v6098 = vunpack.c.l.b16 %v5829
    %v6099 = vunpack.c.h.b16 %v5829
    %v6100 = vunpack.c.l.b16 %v5830
    %v6101 = vunpack.c.h.b16 %v5830
    %v6102 = vunpack.c.l.b16 %v5831
    %v6103 = vunpack.c.h.b16 %v5831
    %v6104 = vunpack.c.l.b16 %v5832
    %v6105 = vunpack.c.h.b16 %v5832
    %v6106 = vunpack.c.l.b16 %v5833
    %v6107 = vunpack.c.h.b16 %v5833
    %v6108 = vunpack.c.l.b16 %v5834
    %v6109 = vunpack.c.h.b16 %v5834
    %v6110 = vunpack.c.l.b16 %v5835
    %v6111 = vunpack.c.h.b16 %v5835
    %v6112 = vunpack.c.l.b16 %v5836
    %v6113 = vunpack.c.h.b16 %v5836
    %v6114 = vunpack.c.l.b16 %v5837
    %v6115 = vunpack.c.h.b16 %v5837
    %v6116 = vunpack.c.l.b16 %v5838
    %v6117 = vunpack.c.h.b16 %v5838
    %v6118 = vunpack.c.l.b16 %v5839
    %v6119 = vunpack.c.h.b16 %v5839
    %v6120 = vunpack.c.l.b16 %v5840
    %v6121 = vunpack.c.h.b16 %v5840
    %v6122 = vunpack.c.l.b16 %v5841
    %v6123 = vunpack.c.h.b16 %v5841
    %v6124 = vunpack.c.l.b16 %v5842
    %v6125 = vunpack.c.h.b16 %v5842
    %v6126 = vunpack.c.l.b16 %v5843
    %v6127 = vunpack.c.h.b16 %v5843
    %v6128 = vunpack.c.l.b16 %v5844
    %v6129 = vunpack.c.h.b16 %v5844
    %v6130 = vunpack.c.l.b16 %v5845
    %v6131 = vunpack.c.h.b16 %v5845
    %v6132 = vunpack.c.l.b16 %v5846
    %v6133 = vunpack.c.h.b16 %v5846
    %v6134 = vunpack.c.l.b16 %v5847
    %v6135 = vunpack.c.h.b16 %v5847
    %v6136 = vunpack.c.l.b16 %v5848
    %v6137 = vunpack.c.h.b16 %v5848
    %v6138 = vunpack.c.l.b16 %v5849
    %v6139 = vunpack.c.h.b16 %v5849
    %v6140 = vunpack.c.l.b16 %v5850
    %v6141 = vunpack.c.h.b16 %v5850
    %v6142 = vunpack.c.l.b16 %v5851
    %v6143 = vunpack.c.h.b16 %v5851
    %v6144 = vunpack.c.l.b16 %v5852
    %v6145 = vunpack.c.h.b16 %v5852
    %v6146 = vunpack.c.l.b16 %v5853
    %v6147 = vunpack.c.h.b16 %v5853
    %v6148 = vunpack.c.l.b16 %v5854
    %v6149 = vunpack.c.h.b16 %v5854
    %v6150 = vunpack.c.l.b16 %v5855
    %v6151 = vunpack.c.h.b16 %v5855
    %v6152 = vunpack.c.l.b16 %v5856
    %v6153 = vunpack.c.h.b16 %v5856
    %v6154 = vunpack.c.l.b16 %v5857
    %v6155 = vunpack.c.h.b16 %v5857
    %v6156 = vpack.c.b16 %v5970, %v5964
    %v6157 = vpack.c.b16 %v5971, %v5965
    %v6158 = vpack.c.b16 %v5972, %v5966
    %v6159 = vpack.c.b16 %v5973, %v5967
    %v6160 = vpack.c.b16 %v5974, %v5968
    %v6161 = vpack.c.b16 %v5975, %v5969
    %v6162 = vpack.c.b16 %v5982, %v5976
    %v6163 = vpack.c.b16 %v5983, %v5977
    %v6164 = vpack.c.b16 %v5984, %v5978
    %v6165 = vpack.c.b16 %v5985, %v5979
    %v6166 = vpack.c.b16 %v5986, %v5980
    %v6167 = vpack.c.b16 %v5987, %v5981
    %v6168 = vpack.c.b16 %v5994, %v5988
    %v6169 = vpack.c.b16 %v5995, %v5989
    %v6170 = vpack.c.b16 %v5996, %v5990
    %v6171 = vpack.c.b16 %v5997, %v5991
    %v6172 = vpack.c.b16 %v5998, %v5992
    %v6173 = vpack.c.b16 %v5999, %v5993
    %v6174 = vpack.c.b16 %v6006, %v6000
    %v6175 = vpack.c.b16 %v6007, %v6001
    %v6176 = vpack.c.b16 %v6008, %v6002
    %v6177 = vpack.c.b16 %v6009, %v6003
    %v6178 = vpack.c.b16 %v6010, %v6004
    %v6179 = vpack.c.b16 %v6011, %v6005
    %v6180 = vpack.c.b16 %v6018, %v6012
    %v6181 = vpack.c.b16 %v6019, %v6013
    %v6182 = vpack.c.b16 %v6020, %v6014
    %v6183 = vpack.c.b16 %v6021, %v6015
    %v6184 = vpack.c.b16 %v6022, %v6016
    %v6185 = vpack.c.b16 %v6023, %v6017
    %v6186 = vpack.c.b16 %v6030, %v6024
    %v6187 = vpack.c.b16 %v6031, %v6025
    %v6188 = vpack.c.b16 %v6032, %v6026
    %v6189 = vpack.c.b16 %v6033, %v6027
    %v6190 = vpack.c.b16 %v6034, %v6028
    %v6191 = vpack.c.b16 %v6035, %v6029
    %v6192 = vpack.c.b16 %v6042, %v6036
    %v6193 = vpack.c.b16 %v6043, %v6037
    %v6194 = vpack.c.b16 %v6044, %v6038
    %v6195 = vpack.c.b16 %v6045, %v6039
    %v6196 = vpack.c.b16 %v6046, %v6040
    %v6197 = vpack.c.b16 %v6047, %v6041
    %v6198 = vpack.c.b16 %v6054, %v6048
    %v6199 = vpack.c.b16 %v6055, %v6049
    %v6200 = vpack.c.b16 %v6056, %v6050
    %v6201 = vpack.c.b16 %v6057, %v6051
    %v6202 = vpack.c.b16 %v6058, %v6052
    %v6203 = vpack.c.b16 %v6059, %v6053
    %v6204 = vpack.c.b16 %v6066, %v6060
    %v6205 = vpack.c.b16 %v6067, %v6061
    %v6206 = vpack.c.b16 %v6068, %v6062
    %v6207 = vpack.c.b16 %v6069, %v6063
    %v6208 = vpack.c.b16 %v6070, %v6064
    %v6209 = vpack.c.b16 %v6071, %v6065
    %v6210 = vpack.c.b16 %v6078, %v6072
    %v6211 = vpack.c.b16 %v6079, %v6073
    %v6212 = vpack.c.b16 %v6080, %v6074
    %v6213 = vpack.c.b16 %v6081, %v6075
    %v6214 = vpack.c.b16 %v6082, %v6076
    %v6215 = vpack.c.b16 %v6083, %v6077
    %v6216 = vpack.c.b16 %v6090, %v6084
    %v6217 = vpack.c.b16 %v6091, %v6085
    %v6218 = vpack.c.b16 %v6092, %v6086
    %v6219 = vpack.c.b16 %v6093, %v6087
    %v6220 = vpack.c.b16 %v6094, %v6088
    %v6221 = vpack.c.b16 %v6095, %v6089
    %v6222 = vpack.c.b16 %v6102, %v6096
    %v6223 = vpack.c.b16 %v6103, %v6097
    %v6224 = vpack.c.b16 %v6104, %v6098
    %v6225 = vpack.c.b16 %v6105, %v6099
    %v6226 = vpack.c.b16 %v6106, %v6100
    %v6227 = vpack.c.b16 %v6107, %v6101
    %v6228 = vpack.c.b16 %v6114, %v6108
    %v6229 = vpack.c.b16 %v6115, %v6109
    %v6230 = vpack.c.b16 %v6116, %v6110
    %v6231 = vpack.c.b16 %v6117, %v6111
    %v6232 = vpack.c.b16 %v6118, %v6112
    %v6233 = vpack.c.b16 %v6119, %v6113
    %v6234 = vpack.c.b16 %v6126, %v6120
    %v6235 = vpack.c.b16 %v6127, %v6121
    %v6236 = vpack.c.b16 %v6128, %v6122
    %v6237 = vpack.c.b16 %v6129, %v6123
    %v6238 = vpack.c.b16 %v6130, %v6124
    %v6239 = vpack.c.b16 %v6131, %v6125
    %v6240 = vpack.c.b16 %v6138, %v6132
    %v6241 = vpack.c.b16 %v6139, %v6133
    %v6242 = vpack.c.b16 %v6140, %v6134
    %v6243 = vpack.c.b16 %v6141, %v6135
    %v6244 = vpack.c.b16 %v6142, %v6136
    %v6245 = vpack.c.b16 %v6143, %v6137
    %v6246 = vpack.c.b16 %v6150, %v6144
    %v6247 = vpack.c.b16 %v6151, %v6145
    %v6248 = vpack.c.b16 %v6152, %v6146
    %v6249 = vpack.c.b16 %v6153, %v6147
    %v6250 = vpack.c.b16 %v6154, %v6148
    %v6251 = vpack.c.b16 %v6155, %v6149
    %6348 = vmatprep.subr.bf16.mxu0 %v6199
    %6349 = vmatpush1.bf16.msra.mxu0 %v6198
    %6350 = vmatprep.subr.bf16.mxu0 %v6193
    %6351 = vmatpush1.bf16.msra.mxu0 %v6192
    %6352 = vmatprep.subr.bf16.mxu0 %v6187
    %6353 = vmatpush1.bf16.msra.mxu0 %v6186
    %6354 = vmatprep.subr.bf16.mxu0 %v6181
    %6355 = vmatpush1.bf16.msra.mxu0 %v6180
    %6356 = vmatprep.subr.bf16.mxu0 %v6175
    %6357 = vmatpush1.bf16.msra.mxu0 %v6174
    %6358 = vmatprep.subr.bf16.mxu0 %v6169
    %6359 = vmatpush1.bf16.msra.mxu0 %v6168
    %6360 = vmatprep.subr.bf16.mxu0 %v6163
    %6361 = vmatpush1.bf16.msra.mxu0 %v6162
    %6362 = vmatprep.subr.bf16.mxu0 %v6157
    %6363 = vmatpush1.bf16.msra.mxu0 %v6156
    %6364 = vmatprep.subr.bf16.mxu0 %v6247
    %6365 = vmatpush2.bf16.msra.mxu0 %v6246
    %6366 = vmatprep.subr.bf16.mxu0 %v6241
    %6367 = vmatpush2.bf16.msra.mxu0 %v6240
    %6368 = vmatprep.subr.bf16.mxu0 %v6235
    %6369 = vmatpush2.bf16.msra.mxu0 %v6234
    %6370 = vmatprep.subr.bf16.mxu0 %v6229
    %6371 = vmatpush2.bf16.msra.mxu0 %v6228
    %6372 = vmatprep.subr.bf16.mxu0 %v6223
    %6373 = vmatpush2.bf16.msra.mxu0 %v6222
    %6374 = vmatprep.subr.bf16.mxu0 %v6217
    %6375 = vmatpush2.bf16.msra.mxu0 %v6216
    %6376 = vmatprep.subr.bf16.mxu0 %v6211
    %6377 = vmatpush2.bf16.msra.mxu0 %v6210
    %6378 = vmatprep.subr.bf16.mxu0 %v6205
    %6379 = vmatpush2.bf16.msra.mxu0 %v6204
    %6380 = vmatprep.mubr.bf16.mxu0 %v5865
    %6381 = vmatmul.mubr.bf16.gmra.mxu0 %v5861
    %v6382 = vpop.f32.mrf.mxu0
    %v6383 = vadd.f32 0.0, %v6382
    %v6384 = vpop.f32.mrf.mxu0
    %v6385 = vadd.f32 0.0, %v6384
    %v6386 = vpop.f32.mrf.mxu0
    %v6387 = vpop.f32.mrf.mxu0
    %6388 = vdwg.mxu0
    %6389 = vmatprep.subr.bf16.mxu0 %v6201
    %6390 = vmatpush1.bf16.msra.mxu0 %v6200
    %6391 = vmatprep.subr.bf16.mxu0 %v6195
    %6392 = vmatpush1.bf16.msra.mxu0 %v6194
    %6393 = vmatprep.subr.bf16.mxu0 %v6189
    %6394 = vmatpush1.bf16.msra.mxu0 %v6188
    %6395 = vmatprep.subr.bf16.mxu0 %v6183
    %6396 = vmatpush1.bf16.msra.mxu0 %v6182
    %6397 = vmatprep.subr.bf16.mxu0 %v6177
    %6398 = vmatpush1.bf16.msra.mxu0 %v6176
    %6399 = vmatprep.subr.bf16.mxu0 %v6171
    %6400 = vmatpush1.bf16.msra.mxu0 %v6170
    %6401 = vmatprep.subr.bf16.mxu0 %v6165
    %6402 = vmatpush1.bf16.msra.mxu0 %v6164
    %6403 = vmatprep.subr.bf16.mxu0 %v6159
    %6404 = vmatpush1.bf16.msra.mxu0 %v6158
    %6405 = vmatprep.subr.bf16.mxu0 %v6249
    %6406 = vmatpush2.bf16.msra.mxu0 %v6248
    %6407 = vmatprep.subr.bf16.mxu0 %v6243
    %6408 = vmatpush2.bf16.msra.mxu0 %v6242
    %6409 = vmatprep.subr.bf16.mxu0 %v6237
    %6410 = vmatpush2.bf16.msra.mxu0 %v6236
    %6411 = vmatprep.subr.bf16.mxu0 %v6231
    %6412 = vmatpush2.bf16.msra.mxu0 %v6230
    %6413 = vmatprep.subr.bf16.mxu0 %v6225
    %6414 = vmatpush2.bf16.msra.mxu0 %v6224
    %6415 = vmatprep.subr.bf16.mxu0 %v6219
    %6416 = vmatpush2.bf16.msra.mxu0 %v6218
    %6417 = vmatprep.subr.bf16.mxu0 %v6213
    %6418 = vmatpush2.bf16.msra.mxu0 %v6212
    %6419 = vmatprep.subr.bf16.mxu0 %v6207
    %6420 = vmatpush2.bf16.msra.mxu0 %v6206
    %6421 = vmatprep.mubr.bf16.mxu0 %v5865
    %6422 = vmatmul.mubr.bf16.gmra.mxu0 %v5861
    %v6423 = vpop.f32.mrf.mxu0
    %v6424 = vadd.f32 0.0, %v6423
    %v6425 = vpop.f32.mrf.mxu0
    %v6426 = vadd.f32 0.0, %v6425
    %v6427 = vpop.f32.mrf.mxu0
    %v6428 = vpop.f32.mrf.mxu0
    %6429 = vdwg.mxu0
    %6430 = vmatprep.subr.bf16.mxu0 %v6203
    %6431 = vmatpush1.bf16.msra.mxu0 %v6202
    %6432 = vmatprep.subr.bf16.mxu0 %v6197
    %6433 = vmatpush1.bf16.msra.mxu0 %v6196
    %6434 = vmatprep.subr.bf16.mxu0 %v6191
    %6435 = vmatpush1.bf16.msra.mxu0 %v6190
    %6436 = vmatprep.subr.bf16.mxu0 %v6185
    %6437 = vmatpush1.bf16.msra.mxu0 %v6184
    %6438 = vmatprep.subr.bf16.mxu0 %v6179
    %6439 = vmatpush1.bf16.msra.mxu0 %v6178
    %6440 = vmatprep.subr.bf16.mxu0 %v6173
    %6441 = vmatpush1.bf16.msra.mxu0 %v6172
    %6442 = vmatprep.subr.bf16.mxu0 %v6167
    %6443 = vmatpush1.bf16.msra.mxu0 %v6166
    %6444 = vmatprep.subr.bf16.mxu0 %v6161
    %6445 = vmatpush1.bf16.msra.mxu0 %v6160
    %6446 = vmatprep.subr.bf16.mxu0 %v6251
    %6447 = vmatpush2.bf16.msra.mxu0 %v6250
    %6448 = vmatprep.subr.bf16.mxu0 %v6245
    %6449 = vmatpush2.bf16.msra.mxu0 %v6244
    %6450 = vmatprep.subr.bf16.mxu0 %v6239
    %6451 = vmatpush2.bf16.msra.mxu0 %v6238
    %6452 = vmatprep.subr.bf16.mxu0 %v6233
    %6453 = vmatpush2.bf16.msra.mxu0 %v6232
    %6454 = vmatprep.subr.bf16.mxu0 %v6227
    %6455 = vmatpush2.bf16.msra.mxu0 %v6226
    %6456 = vmatprep.subr.bf16.mxu0 %v6221
    %6457 = vmatpush2.bf16.msra.mxu0 %v6220
    %6458 = vmatprep.subr.bf16.mxu0 %v6215
    %6459 = vmatpush2.bf16.msra.mxu0 %v6214
    %6460 = vmatprep.subr.bf16.mxu0 %v6209
    %6461 = vmatpush2.bf16.msra.mxu0 %v6208
    %6462 = vmatprep.mubr.bf16.mxu0 %v5865
    %6463 = vmatmul.mubr.bf16.gmra.mxu0 %v5861
    %v6464 = vpop.f32.mrf.mxu0
    %v6465 = vadd.f32 0.0, %v6464
    %v6466 = vpop.f32.mrf.mxu0
    %v6467 = vadd.f32 0.0, %v6466
    %v6468 = vpop.f32.mrf.mxu0
    %v6469 = vpop.f32.mrf.mxu0
    %6470 = vdwg.mxu0
    %v6475 = vrot.slane %v6383, 2
    %v6476 = vrot.slane %v6385, 2
    %v6477 = vrot.slane %v6424, 2
    %v6478 = vrot.slane %v6426, 2
    %v6483 = vadd.f32 %v904, %v6475
    %v6484 = vadd.f32 %v906, %v6476
    %v6485 = vadd.f32 %v945, %v6477
    %v6486 = vadd.f32 %v947, %v6478
    %v6487 = vxor.u32 %v6483, 2147483648
    %v6488 = vxor.u32 %v6484, 2147483648
    %v6489 = vxor.u32 %v6485, 2147483648
    %v6490 = vxor.u32 %v6486, 2147483648
    %v6491 = vmul.f32 %v6487, 1.442695
    %v6492 = vpow.pop %v6491
    %v6493 = vmul.f32 %v6488, 1.442695
    %v6494 = vpow.pop %v6493
    %v6495 = vmul.f32 %v6489, 1.442695
    %v6496 = vpow.pop %v6495
    %v6497 = vmul.f32 %v6490, 1.442695
    %v6498 = vpow.pop %v6497
    %v6499 = vadd.f32 %v6492, 1.0
    %v6500 = vadd.f32 %v6494, 1.0
    %v6501 = vadd.f32 %v6496, 1.0
    %v6502 = vadd.f32 %v6498, 1.0
    %v6503 = vrcp.pop %v6499
    %v6504 = vmul.f32 1.0, %v6503
    %v6505 = vrcp.pop %v6500
    %v6506 = vmul.f32 1.0, %v6505
    %v6507 = vrcp.pop %v6501
    %v6508 = vmul.f32 1.0, %v6507
    %v6509 = vrcp.pop %v6502
    %v6510 = vmul.f32 1.0, %v6509
    %v6511 = vadd.f32 %v6465, %v1738
    %v6512 = vadd.f32 %v6467, %v1742
    %v6515 = vrot.slane %v6511, 2
    %v6516 = vrot.slane %v6512, 2
    %v6519 = vmul.f32 %v6504, %v6515
    %v6520 = vmul.f32 %v6506, %v6516
    %v6521 = vadd.f32 %v986, %v6519
    %v6522 = vadd.f32 %v988, %v6520
    %v6523 = vtanh.pop %v6521
    %v6524 = vtanh.pop %v6522
    %v6525 = vsub.f32 1.0, %v6508
    %v6526 = vsub.f32 1.0, %v6510
    %v6527 = vmul.f32 %v6525, %v6523
    %v6528 = vmul.f32 %v6526, %v6524
    %v6529 = vrot.slane %v5736, 7
    %v6530 = vrot.slane %v5737, 7
    %v6533 = vmul.f32 %v6508, %v6529
    %v6534 = vmul.f32 %v6510, %v6530
    %v6535 = vadd.f32 %v6527, %v6533
    %v6536 = vadd.f32 %v6528, %v6534
    %v6539 = vcombine.high %v6535, %v6536
    %v6541 = vunpack.c.l.s4 1966171168
    %v6542 = vunpack.c.0.s8 %v6541
    %v6543 = vlaneseq
    %v6544 = vshrl.u32 %v6543, 7
    %v6545 = vsub.s32 %v6542, %v6544
    %v6546 = vrot.slane %v6539, %v6545
    %v6548 = vunpack.c.l.s4 1966171168
    %v6549 = vunpack.c.0.s8 %v6548
    %v6550 = vlaneseq
    %v6551 = vshrl.u32 %v6550, 7
    %v6552 = vsub.s32 %v6549, %v6551
    %v6553 = vrot.slane %v6546, %v6552
    %v6554 = vcombine.high %v6553, %v6553
    %s6556 = scalar_lea.vmem [#allocation10], 6
    %6557 = vst.msk [vmem:[%s6556] ss:$8 sm:$0x3] %vm1782, %v6554
    %6558 = vst.msk [vmem:[%s6556] ss:$8 sm:$0x0] %vm1782, %v6554
    %v6559 = vpack.c.bf16 %v6535, %v6535
    %v6560 = vpack.c.bf16 %v6536, %v6536
    %v6561 = vld [vmem:[#allocation9] sm:$0xff]
    %v6562 = vld [vmem:[#allocation9 + $0x8] sm:$0xff]
    %v6563 = vld [vmem:[#allocation9 + $0x10] sm:$0xff]
    %v6564 = vld [vmem:[#allocation9 + $0x18] sm:$0xff]
    %v6565 = vld [vmem:[#allocation9 + $0x20] sm:$0xff]
    %v6566 = vld [vmem:[#allocation9 + $0x28] sm:$0xff]
    %v6567 = vld [vmem:[#allocation9 + $0x30] sm:$0xff]
    %v6568 = vld [vmem:[#allocation9 + $0x38] sm:$0xff]
    %v6569 = vld [vmem:[#allocation9 + $0x40] sm:$0xff]
    %v6570 = vld [vmem:[#allocation9 + $0x48] sm:$0xff]
    %v6571 = vld [vmem:[#allocation9 + $0x50] sm:$0xff]
    %v6572 = vld [vmem:[#allocation9 + $0x58] sm:$0xff]
    %v6573 = vld [vmem:[#allocation9 + $0x60] sm:$0xff]
    %v6574 = vld [vmem:[#allocation9 + $0x68] sm:$0xff]
    %v6575 = vld [vmem:[#allocation9 + $0x70] sm:$0xff]
    %v6576 = vld [vmem:[#allocation9 + $0x78] sm:$0xff]
    %v6577 = vld [vmem:[#allocation9 + $0x80] sm:$0xff]
    %v6578 = vld [vmem:[#allocation9 + $0x88] sm:$0xff]
    %v6579 = vld [vmem:[#allocation9 + $0x90] sm:$0xff]
    %v6580 = vld [vmem:[#allocation9 + $0x98] sm:$0xff]
    %v6581 = vld [vmem:[#allocation9 + $0xa0] sm:$0xff]
    %v6582 = vld [vmem:[#allocation9 + $0xa8] sm:$0xff]
    %v6583 = vld [vmem:[#allocation9 + $0xb0] sm:$0xff]
    %v6584 = vld [vmem:[#allocation9 + $0xb8] sm:$0xff]
    %v6585 = vld [vmem:[#allocation9 + $0xc0] sm:$0xff]
    %v6586 = vld [vmem:[#allocation9 + $0xc8] sm:$0xff]
    %v6587 = vld [vmem:[#allocation9 + $0xd0] sm:$0xff]
    %v6588 = vld [vmem:[#allocation9 + $0xd8] sm:$0xff]
    %v6589 = vld [vmem:[#allocation9 + $0xe0] sm:$0xff]
    %v6590 = vld [vmem:[#allocation9 + $0xe8] sm:$0xff]
    %v6591 = vld [vmem:[#allocation9 + $0xf0] sm:$0xff]
    %v6592 = vld [vmem:[#allocation9 + $0xf8] sm:$0xff]
    %v6593 = vld [vmem:[#allocation9 + $0x100] sm:$0xff]
    %v6594 = vld [vmem:[#allocation9 + $0x108] sm:$0xff]
    %v6595 = vld [vmem:[#allocation9 + $0x110] sm:$0xff]
    %v6596 = vld [vmem:[#allocation9 + $0x118] sm:$0xff]
    %v6597 = vld [vmem:[#allocation9 + $0x120] sm:$0xff]
    %v6598 = vld [vmem:[#allocation9 + $0x128] sm:$0xff]
    %v6599 = vld [vmem:[#allocation9 + $0x130] sm:$0xff]
    %v6600 = vld [vmem:[#allocation9 + $0x138] sm:$0xff]
    %v6601 = vld [vmem:[#allocation9 + $0x140] sm:$0xff]
    %v6602 = vld [vmem:[#allocation9 + $0x148] sm:$0xff]
    %v6603 = vld [vmem:[#allocation9 + $0x150] sm:$0xff]
    %v6604 = vld [vmem:[#allocation9 + $0x158] sm:$0xff]
    %v6605 = vld [vmem:[#allocation9 + $0x160] sm:$0xff]
    %v6606 = vld [vmem:[#allocation9 + $0x168] sm:$0xff]
    %v6607 = vld [vmem:[#allocation9 + $0x170] sm:$0xff]
    %v6608 = vld [vmem:[#allocation9 + $0x178] sm:$0xff]
    %v6609 = vld [vmem:[#allocation9 + $0x180] sm:$0xff]
    %v6610 = vld [vmem:[#allocation9 + $0x188] sm:$0xff]
    %v6611 = vld [vmem:[#allocation9 + $0x190] sm:$0xff]
    %v6612 = vld [vmem:[#allocation9 + $0x198] sm:$0xff]
    %v6613 = vld [vmem:[#allocation9 + $0x1a0] sm:$0xff]
    %v6614 = vld [vmem:[#allocation9 + $0x1a8] sm:$0xff]
    %v6615 = vld [vmem:[#allocation9 + $0x1b0] sm:$0xff]
    %v6616 = vld [vmem:[#allocation9 + $0x1b8] sm:$0xff]
    %v6617 = vld [vmem:[#allocation9 + $0x1c0] sm:$0xff]
    %v6618 = vld [vmem:[#allocation9 + $0x1c8] sm:$0xff]
    %v6619 = vld [vmem:[#allocation9 + $0x1d0] sm:$0xff]
    %v6620 = vld [vmem:[#allocation9 + $0x1d8] sm:$0xff]
    %v6621 = vld [vmem:[#allocation9 + $0x1e0] sm:$0xff]
    %v6622 = vld [vmem:[#allocation9 + $0x1e8] sm:$0xff]
    %v6623 = vld [vmem:[#allocation9 + $0x1f0] sm:$0xff]
    %v6624 = vld [vmem:[#allocation9 + $0x1f8] sm:$0xff]
    %v6625 = vld [vmem:[#allocation9 + $0x200] sm:$0xff]
    %v6626 = vld [vmem:[#allocation9 + $0x208] sm:$0xff]
    %v6627 = vld [vmem:[#allocation9 + $0x210] sm:$0xff]
    %v6628 = vld [vmem:[#allocation9 + $0x218] sm:$0xff]
    %v6629 = vld [vmem:[#allocation9 + $0x220] sm:$0xff]
    %v6630 = vld [vmem:[#allocation9 + $0x228] sm:$0xff]
    %v6631 = vld [vmem:[#allocation9 + $0x230] sm:$0xff]
    %v6632 = vld [vmem:[#allocation9 + $0x238] sm:$0xff]
    %v6633 = vld [vmem:[#allocation9 + $0x240] sm:$0xff]
    %v6634 = vld [vmem:[#allocation9 + $0x248] sm:$0xff]
    %v6635 = vld [vmem:[#allocation9 + $0x250] sm:$0xff]
    %v6636 = vld [vmem:[#allocation9 + $0x258] sm:$0xff]
    %v6637 = vld [vmem:[#allocation9 + $0x260] sm:$0xff]
    %v6638 = vld [vmem:[#allocation9 + $0x268] sm:$0xff]
    %v6639 = vld [vmem:[#allocation9 + $0x270] sm:$0xff]
    %v6640 = vld [vmem:[#allocation9 + $0x278] sm:$0xff]
    %v6641 = vld [vmem:[#allocation9 + $0x280] sm:$0xff]
    %v6642 = vld [vmem:[#allocation9 + $0x288] sm:$0xff]
    %v6643 = vld [vmem:[#allocation9 + $0x290] sm:$0xff]
    %v6644 = vld [vmem:[#allocation9 + $0x298] sm:$0xff]
    %v6645 = vld [vmem:[#allocation9 + $0x2a0] sm:$0xff]
    %v6646 = vld [vmem:[#allocation9 + $0x2a8] sm:$0xff]
    %v6647 = vld [vmem:[#allocation9 + $0x2b0] sm:$0xff]
    %v6648 = vld [vmem:[#allocation9 + $0x2b8] sm:$0xff]
    %v6649 = vld [vmem:[#allocation9 + $0x2c0] sm:$0xff]
    %v6650 = vld [vmem:[#allocation9 + $0x2c8] sm:$0xff]
    %v6651 = vld [vmem:[#allocation9 + $0x2d0] sm:$0xff]
    %v6652 = vld [vmem:[#allocation9 + $0x2d8] sm:$0xff]
    %v6653 = vld [vmem:[#allocation9 + $0x2e0] sm:$0xff]
    %v6654 = vld [vmem:[#allocation9 + $0x2e8] sm:$0xff]
    %v6655 = vld [vmem:[#allocation9 + $0x2f0] sm:$0xff]
    %v6656 = vld [vmem:[#allocation9 + $0x2f8] sm:$0xff]
    %v6659 = vrot.slane %v6559, 3
    %v6660 = vrot.slane %v6560, 3
    %v6759 = vunpack.c.l.b16 %v6561
    %v6760 = vunpack.c.h.b16 %v6561
    %v6761 = vunpack.c.l.b16 %v6562
    %v6762 = vunpack.c.h.b16 %v6562
    %v6763 = vunpack.c.l.b16 %v6563
    %v6764 = vunpack.c.h.b16 %v6563
    %v6765 = vunpack.c.l.b16 %v6564
    %v6766 = vunpack.c.h.b16 %v6564
    %v6767 = vunpack.c.l.b16 %v6565
    %v6768 = vunpack.c.h.b16 %v6565
    %v6769 = vunpack.c.l.b16 %v6566
    %v6770 = vunpack.c.h.b16 %v6566
    %v6771 = vunpack.c.l.b16 %v6567
    %v6772 = vunpack.c.h.b16 %v6567
    %v6773 = vunpack.c.l.b16 %v6568
    %v6774 = vunpack.c.h.b16 %v6568
    %v6775 = vunpack.c.l.b16 %v6569
    %v6776 = vunpack.c.h.b16 %v6569
    %v6777 = vunpack.c.l.b16 %v6570
    %v6778 = vunpack.c.h.b16 %v6570
    %v6779 = vunpack.c.l.b16 %v6571
    %v6780 = vunpack.c.h.b16 %v6571
    %v6781 = vunpack.c.l.b16 %v6572
    %v6782 = vunpack.c.h.b16 %v6572
    %v6783 = vunpack.c.l.b16 %v6573
    %v6784 = vunpack.c.h.b16 %v6573
    %v6785 = vunpack.c.l.b16 %v6574
    %v6786 = vunpack.c.h.b16 %v6574
    %v6787 = vunpack.c.l.b16 %v6575
    %v6788 = vunpack.c.h.b16 %v6575
    %v6789 = vunpack.c.l.b16 %v6576
    %v6790 = vunpack.c.h.b16 %v6576
    %v6791 = vunpack.c.l.b16 %v6577
    %v6792 = vunpack.c.h.b16 %v6577
    %v6793 = vunpack.c.l.b16 %v6578
    %v6794 = vunpack.c.h.b16 %v6578
    %v6795 = vunpack.c.l.b16 %v6579
    %v6796 = vunpack.c.h.b16 %v6579
    %v6797 = vunpack.c.l.b16 %v6580
    %v6798 = vunpack.c.h.b16 %v6580
    %v6799 = vunpack.c.l.b16 %v6581
    %v6800 = vunpack.c.h.b16 %v6581
    %v6801 = vunpack.c.l.b16 %v6582
    %v6802 = vunpack.c.h.b16 %v6582
    %v6803 = vunpack.c.l.b16 %v6583
    %v6804 = vunpack.c.h.b16 %v6583
    %v6805 = vunpack.c.l.b16 %v6584
    %v6806 = vunpack.c.h.b16 %v6584
    %v6807 = vunpack.c.l.b16 %v6585
    %v6808 = vunpack.c.h.b16 %v6585
    %v6809 = vunpack.c.l.b16 %v6586
    %v6810 = vunpack.c.h.b16 %v6586
    %v6811 = vunpack.c.l.b16 %v6587
    %v6812 = vunpack.c.h.b16 %v6587
    %v6813 = vunpack.c.l.b16 %v6588
    %v6814 = vunpack.c.h.b16 %v6588
    %v6815 = vunpack.c.l.b16 %v6589
    %v6816 = vunpack.c.h.b16 %v6589
    %v6817 = vunpack.c.l.b16 %v6590
    %v6818 = vunpack.c.h.b16 %v6590
    %v6819 = vunpack.c.l.b16 %v6591
    %v6820 = vunpack.c.h.b16 %v6591
    %v6821 = vunpack.c.l.b16 %v6592
    %v6822 = vunpack.c.h.b16 %v6592
    %v6823 = vunpack.c.l.b16 %v6593
    %v6824 = vunpack.c.h.b16 %v6593
    %v6825 = vunpack.c.l.b16 %v6594
    %v6826 = vunpack.c.h.b16 %v6594
    %v6827 = vunpack.c.l.b16 %v6595
    %v6828 = vunpack.c.h.b16 %v6595
    %v6829 = vunpack.c.l.b16 %v6596
    %v6830 = vunpack.c.h.b16 %v6596
    %v6831 = vunpack.c.l.b16 %v6597
    %v6832 = vunpack.c.h.b16 %v6597
    %v6833 = vunpack.c.l.b16 %v6598
    %v6834 = vunpack.c.h.b16 %v6598
    %v6835 = vunpack.c.l.b16 %v6599
    %v6836 = vunpack.c.h.b16 %v6599
    %v6837 = vunpack.c.l.b16 %v6600
    %v6838 = vunpack.c.h.b16 %v6600
    %v6839 = vunpack.c.l.b16 %v6601
    %v6840 = vunpack.c.h.b16 %v6601
    %v6841 = vunpack.c.l.b16 %v6602
    %v6842 = vunpack.c.h.b16 %v6602
    %v6843 = vunpack.c.l.b16 %v6603
    %v6844 = vunpack.c.h.b16 %v6603
    %v6845 = vunpack.c.l.b16 %v6604
    %v6846 = vunpack.c.h.b16 %v6604
    %v6847 = vunpack.c.l.b16 %v6605
    %v6848 = vunpack.c.h.b16 %v6605
    %v6849 = vunpack.c.l.b16 %v6606
    %v6850 = vunpack.c.h.b16 %v6606
    %v6851 = vunpack.c.l.b16 %v6607
    %v6852 = vunpack.c.h.b16 %v6607
    %v6853 = vunpack.c.l.b16 %v6608
    %v6854 = vunpack.c.h.b16 %v6608
    %v6855 = vunpack.c.l.b16 %v6609
    %v6856 = vunpack.c.h.b16 %v6609
    %v6857 = vunpack.c.l.b16 %v6610
    %v6858 = vunpack.c.h.b16 %v6610
    %v6859 = vunpack.c.l.b16 %v6611
    %v6860 = vunpack.c.h.b16 %v6611
    %v6861 = vunpack.c.l.b16 %v6612
    %v6862 = vunpack.c.h.b16 %v6612
    %v6863 = vunpack.c.l.b16 %v6613
    %v6864 = vunpack.c.h.b16 %v6613
    %v6865 = vunpack.c.l.b16 %v6614
    %v6866 = vunpack.c.h.b16 %v6614
    %v6867 = vunpack.c.l.b16 %v6615
    %v6868 = vunpack.c.h.b16 %v6615
    %v6869 = vunpack.c.l.b16 %v6616
    %v6870 = vunpack.c.h.b16 %v6616
    %v6871 = vunpack.c.l.b16 %v6617
    %v6872 = vunpack.c.h.b16 %v6617
    %v6873 = vunpack.c.l.b16 %v6618
    %v6874 = vunpack.c.h.b16 %v6618
    %v6875 = vunpack.c.l.b16 %v6619
    %v6876 = vunpack.c.h.b16 %v6619
    %v6877 = vunpack.c.l.b16 %v6620
    %v6878 = vunpack.c.h.b16 %v6620
    %v6879 = vunpack.c.l.b16 %v6621
    %v6880 = vunpack.c.h.b16 %v6621
    %v6881 = vunpack.c.l.b16 %v6622
    %v6882 = vunpack.c.h.b16 %v6622
    %v6883 = vunpack.c.l.b16 %v6623
    %v6884 = vunpack.c.h.b16 %v6623
    %v6885 = vunpack.c.l.b16 %v6624
    %v6886 = vunpack.c.h.b16 %v6624
    %v6887 = vunpack.c.l.b16 %v6625
    %v6888 = vunpack.c.h.b16 %v6625
    %v6889 = vunpack.c.l.b16 %v6626
    %v6890 = vunpack.c.h.b16 %v6626
    %v6891 = vunpack.c.l.b16 %v6627
    %v6892 = vunpack.c.h.b16 %v6627
    %v6893 = vunpack.c.l.b16 %v6628
    %v6894 = vunpack.c.h.b16 %v6628
    %v6895 = vunpack.c.l.b16 %v6629
    %v6896 = vunpack.c.h.b16 %v6629
    %v6897 = vunpack.c.l.b16 %v6630
    %v6898 = vunpack.c.h.b16 %v6630
    %v6899 = vunpack.c.l.b16 %v6631
    %v6900 = vunpack.c.h.b16 %v6631
    %v6901 = vunpack.c.l.b16 %v6632
    %v6902 = vunpack.c.h.b16 %v6632
    %v6903 = vunpack.c.l.b16 %v6633
    %v6904 = vunpack.c.h.b16 %v6633
    %v6905 = vunpack.c.l.b16 %v6634
    %v6906 = vunpack.c.h.b16 %v6634
    %v6907 = vunpack.c.l.b16 %v6635
    %v6908 = vunpack.c.h.b16 %v6635
    %v6909 = vunpack.c.l.b16 %v6636
    %v6910 = vunpack.c.h.b16 %v6636
    %v6911 = vunpack.c.l.b16 %v6637
    %v6912 = vunpack.c.h.b16 %v6637
    %v6913 = vunpack.c.l.b16 %v6638
    %v6914 = vunpack.c.h.b16 %v6638
    %v6915 = vunpack.c.l.b16 %v6639
    %v6916 = vunpack.c.h.b16 %v6639
    %v6917 = vunpack.c.l.b16 %v6640
    %v6918 = vunpack.c.h.b16 %v6640
    %v6919 = vunpack.c.l.b16 %v6641
    %v6920 = vunpack.c.h.b16 %v6641
    %v6921 = vunpack.c.l.b16 %v6642
    %v6922 = vunpack.c.h.b16 %v6642
    %v6923 = vunpack.c.l.b16 %v6643
    %v6924 = vunpack.c.h.b16 %v6643
    %v6925 = vunpack.c.l.b16 %v6644
    %v6926 = vunpack.c.h.b16 %v6644
    %v6927 = vunpack.c.l.b16 %v6645
    %v6928 = vunpack.c.h.b16 %v6645
    %v6929 = vunpack.c.l.b16 %v6646
    %v6930 = vunpack.c.h.b16 %v6646
    %v6931 = vunpack.c.l.b16 %v6647
    %v6932 = vunpack.c.h.b16 %v6647
    %v6933 = vunpack.c.l.b16 %v6648
    %v6934 = vunpack.c.h.b16 %v6648
    %v6935 = vunpack.c.l.b16 %v6649
    %v6936 = vunpack.c.h.b16 %v6649
    %v6937 = vunpack.c.l.b16 %v6650
    %v6938 = vunpack.c.h.b16 %v6650
    %v6939 = vunpack.c.l.b16 %v6651
    %v6940 = vunpack.c.h.b16 %v6651
    %v6941 = vunpack.c.l.b16 %v6652
    %v6942 = vunpack.c.h.b16 %v6652
    %v6943 = vunpack.c.l.b16 %v6653
    %v6944 = vunpack.c.h.b16 %v6653
    %v6945 = vunpack.c.l.b16 %v6654
    %v6946 = vunpack.c.h.b16 %v6654
    %v6947 = vunpack.c.l.b16 %v6655
    %v6948 = vunpack.c.h.b16 %v6655
    %v6949 = vunpack.c.l.b16 %v6656
    %v6950 = vunpack.c.h.b16 %v6656
    %v6951 = vpack.c.b16 %v6765, %v6759
    %v6952 = vpack.c.b16 %v6766, %v6760
    %v6953 = vpack.c.b16 %v6767, %v6761
    %v6954 = vpack.c.b16 %v6768, %v6762
    %v6955 = vpack.c.b16 %v6769, %v6763
    %v6956 = vpack.c.b16 %v6770, %v6764
    %v6957 = vpack.c.b16 %v6777, %v6771
    %v6958 = vpack.c.b16 %v6778, %v6772
    %v6959 = vpack.c.b16 %v6779, %v6773
    %v6960 = vpack.c.b16 %v6780, %v6774
    %v6961 = vpack.c.b16 %v6781, %v6775
    %v6962 = vpack.c.b16 %v6782, %v6776
    %v6963 = vpack.c.b16 %v6789, %v6783
    %v6964 = vpack.c.b16 %v6790, %v6784
    %v6965 = vpack.c.b16 %v6791, %v6785
    %v6966 = vpack.c.b16 %v6792, %v6786
    %v6967 = vpack.c.b16 %v6793, %v6787
    %v6968 = vpack.c.b16 %v6794, %v6788
    %v6969 = vpack.c.b16 %v6801, %v6795
    %v6970 = vpack.c.b16 %v6802, %v6796
    %v6971 = vpack.c.b16 %v6803, %v6797
    %v6972 = vpack.c.b16 %v6804, %v6798
    %v6973 = vpack.c.b16 %v6805, %v6799
    %v6974 = vpack.c.b16 %v6806, %v6800
    %v6975 = vpack.c.b16 %v6813, %v6807
    %v6976 = vpack.c.b16 %v6814, %v6808
    %v6977 = vpack.c.b16 %v6815, %v6809
    %v6978 = vpack.c.b16 %v6816, %v6810
    %v6979 = vpack.c.b16 %v6817, %v6811
    %v6980 = vpack.c.b16 %v6818, %v6812
    %v6981 = vpack.c.b16 %v6825, %v6819
    %v6982 = vpack.c.b16 %v6826, %v6820
    %v6983 = vpack.c.b16 %v6827, %v6821
    %v6984 = vpack.c.b16 %v6828, %v6822
    %v6985 = vpack.c.b16 %v6829, %v6823
    %v6986 = vpack.c.b16 %v6830, %v6824
    %v6987 = vpack.c.b16 %v6837, %v6831
    %v6988 = vpack.c.b16 %v6838, %v6832
    %v6989 = vpack.c.b16 %v6839, %v6833
    %v6990 = vpack.c.b16 %v6840, %v6834
    %v6991 = vpack.c.b16 %v6841, %v6835
    %v6992 = vpack.c.b16 %v6842, %v6836
    %v6993 = vpack.c.b16 %v6849, %v6843
    %v6994 = vpack.c.b16 %v6850, %v6844
    %v6995 = vpack.c.b16 %v6851, %v6845
    %v6996 = vpack.c.b16 %v6852, %v6846
    %v6997 = vpack.c.b16 %v6853, %v6847
    %v6998 = vpack.c.b16 %v6854, %v6848
    %v6999 = vpack.c.b16 %v6861, %v6855
    %v7000 = vpack.c.b16 %v6862, %v6856
    %v7001 = vpack.c.b16 %v6863, %v6857
    %v7002 = vpack.c.b16 %v6864, %v6858
    %v7003 = vpack.c.b16 %v6865, %v6859
    %v7004 = vpack.c.b16 %v6866, %v6860
    %v7005 = vpack.c.b16 %v6873, %v6867
    %v7006 = vpack.c.b16 %v6874, %v6868
    %v7007 = vpack.c.b16 %v6875, %v6869
    %v7008 = vpack.c.b16 %v6876, %v6870
    %v7009 = vpack.c.b16 %v6877, %v6871
    %v7010 = vpack.c.b16 %v6878, %v6872
    %v7011 = vpack.c.b16 %v6885, %v6879
    %v7012 = vpack.c.b16 %v6886, %v6880
    %v7013 = vpack.c.b16 %v6887, %v6881
    %v7014 = vpack.c.b16 %v6888, %v6882
    %v7015 = vpack.c.b16 %v6889, %v6883
    %v7016 = vpack.c.b16 %v6890, %v6884
    %v7017 = vpack.c.b16 %v6897, %v6891
    %v7018 = vpack.c.b16 %v6898, %v6892
    %v7019 = vpack.c.b16 %v6899, %v6893
    %v7020 = vpack.c.b16 %v6900, %v6894
    %v7021 = vpack.c.b16 %v6901, %v6895
    %v7022 = vpack.c.b16 %v6902, %v6896
    %v7023 = vpack.c.b16 %v6909, %v6903
    %v7024 = vpack.c.b16 %v6910, %v6904
    %v7025 = vpack.c.b16 %v6911, %v6905
    %v7026 = vpack.c.b16 %v6912, %v6906
    %v7027 = vpack.c.b16 %v6913, %v6907
    %v7028 = vpack.c.b16 %v6914, %v6908
    %v7029 = vpack.c.b16 %v6921, %v6915
    %v7030 = vpack.c.b16 %v6922, %v6916
    %v7031 = vpack.c.b16 %v6923, %v6917
    %v7032 = vpack.c.b16 %v6924, %v6918
    %v7033 = vpack.c.b16 %v6925, %v6919
    %v7034 = vpack.c.b16 %v6926, %v6920
    %v7035 = vpack.c.b16 %v6933, %v6927
    %v7036 = vpack.c.b16 %v6934, %v6928
    %v7037 = vpack.c.b16 %v6935, %v6929
    %v7038 = vpack.c.b16 %v6936, %v6930
    %v7039 = vpack.c.b16 %v6937, %v6931
    %v7040 = vpack.c.b16 %v6938, %v6932
    %v7041 = vpack.c.b16 %v6945, %v6939
    %v7042 = vpack.c.b16 %v6946, %v6940
    %v7043 = vpack.c.b16 %v6947, %v6941
    %v7044 = vpack.c.b16 %v6948, %v6942
    %v7045 = vpack.c.b16 %v6949, %v6943
    %v7046 = vpack.c.b16 %v6950, %v6944
    %7143 = vmatprep.subr.bf16.mxu0 %v6994
    %7144 = vmatpush1.bf16.msra.mxu0 %v6993
    %7145 = vmatprep.subr.bf16.mxu0 %v6988
    %7146 = vmatpush1.bf16.msra.mxu0 %v6987
    %7147 = vmatprep.subr.bf16.mxu0 %v6982
    %7148 = vmatpush1.bf16.msra.mxu0 %v6981
    %7149 = vmatprep.subr.bf16.mxu0 %v6976
    %7150 = vmatpush1.bf16.msra.mxu0 %v6975
    %7151 = vmatprep.subr.bf16.mxu0 %v6970
    %7152 = vmatpush1.bf16.msra.mxu0 %v6969
    %7153 = vmatprep.subr.bf16.mxu0 %v6964
    %7154 = vmatpush1.bf16.msra.mxu0 %v6963
    %7155 = vmatprep.subr.bf16.mxu0 %v6958
    %7156 = vmatpush1.bf16.msra.mxu0 %v6957
    %7157 = vmatprep.subr.bf16.mxu0 %v6952
    %7158 = vmatpush1.bf16.msra.mxu0 %v6951
    %7159 = vmatprep.subr.bf16.mxu0 %v7042
    %7160 = vmatpush2.bf16.msra.mxu0 %v7041
    %7161 = vmatprep.subr.bf16.mxu0 %v7036
    %7162 = vmatpush2.bf16.msra.mxu0 %v7035
    %7163 = vmatprep.subr.bf16.mxu0 %v7030
    %7164 = vmatpush2.bf16.msra.mxu0 %v7029
    %7165 = vmatprep.subr.bf16.mxu0 %v7024
    %7166 = vmatpush2.bf16.msra.mxu0 %v7023
    %7167 = vmatprep.subr.bf16.mxu0 %v7018
    %7168 = vmatpush2.bf16.msra.mxu0 %v7017
    %7169 = vmatprep.subr.bf16.mxu0 %v7012
    %7170 = vmatpush2.bf16.msra.mxu0 %v7011
    %7171 = vmatprep.subr.bf16.mxu0 %v7006
    %7172 = vmatpush2.bf16.msra.mxu0 %v7005
    %7173 = vmatprep.subr.bf16.mxu0 %v7000
    %7174 = vmatpush2.bf16.msra.mxu0 %v6999
    %7175 = vmatprep.mubr.bf16.mxu0 %v6660
    %7176 = vmatmul.mubr.bf16.gmra.mxu0 %v6659
    %v7177 = vpop.f32.mrf.mxu0
    %v7178 = vadd.f32 0.0, %v7177
    %v7179 = vpop.f32.mrf.mxu0
    %v7180 = vadd.f32 0.0, %v7179
    %v7181 = vpop.f32.mrf.mxu0
    %v7182 = vpop.f32.mrf.mxu0
    %7183 = vdwg.mxu0
    %7184 = vmatprep.subr.bf16.mxu0 %v6996
    %7185 = vmatpush1.bf16.msra.mxu0 %v6995
    %7186 = vmatprep.subr.bf16.mxu0 %v6990
    %7187 = vmatpush1.bf16.msra.mxu0 %v6989
    %7188 = vmatprep.subr.bf16.mxu0 %v6984
    %7189 = vmatpush1.bf16.msra.mxu0 %v6983
    %7190 = vmatprep.subr.bf16.mxu0 %v6978
    %7191 = vmatpush1.bf16.msra.mxu0 %v6977
    %7192 = vmatprep.subr.bf16.mxu0 %v6972
    %7193 = vmatpush1.bf16.msra.mxu0 %v6971
    %7194 = vmatprep.subr.bf16.mxu0 %v6966
    %7195 = vmatpush1.bf16.msra.mxu0 %v6965
    %7196 = vmatprep.subr.bf16.mxu0 %v6960
    %7197 = vmatpush1.bf16.msra.mxu0 %v6959
    %7198 = vmatprep.subr.bf16.mxu0 %v6954
    %7199 = vmatpush1.bf16.msra.mxu0 %v6953
    %7200 = vmatprep.subr.bf16.mxu0 %v7044
    %7201 = vmatpush2.bf16.msra.mxu0 %v7043
    %7202 = vmatprep.subr.bf16.mxu0 %v7038
    %7203 = vmatpush2.bf16.msra.mxu0 %v7037
    %7204 = vmatprep.subr.bf16.mxu0 %v7032
    %7205 = vmatpush2.bf16.msra.mxu0 %v7031
    %7206 = vmatprep.subr.bf16.mxu0 %v7026
    %7207 = vmatpush2.bf16.msra.mxu0 %v7025
    %7208 = vmatprep.subr.bf16.mxu0 %v7020
    %7209 = vmatpush2.bf16.msra.mxu0 %v7019
    %7210 = vmatprep.subr.bf16.mxu0 %v7014
    %7211 = vmatpush2.bf16.msra.mxu0 %v7013
    %7212 = vmatprep.subr.bf16.mxu0 %v7008
    %7213 = vmatpush2.bf16.msra.mxu0 %v7007
    %7214 = vmatprep.subr.bf16.mxu0 %v7002
    %7215 = vmatpush2.bf16.msra.mxu0 %v7001
    %7216 = vmatprep.mubr.bf16.mxu0 %v6660
    %7217 = vmatmul.mubr.bf16.gmra.mxu0 %v6659
    %v7218 = vpop.f32.mrf.mxu0
    %v7219 = vadd.f32 0.0, %v7218
    %v7220 = vpop.f32.mrf.mxu0
    %v7221 = vadd.f32 0.0, %v7220
    %v7222 = vpop.f32.mrf.mxu0
    %v7223 = vpop.f32.mrf.mxu0
    %7224 = vdwg.mxu0
    %7225 = vmatprep.subr.bf16.mxu0 %v6998
    %7226 = vmatpush1.bf16.msra.mxu0 %v6997
    %7227 = vmatprep.subr.bf16.mxu0 %v6992
    %7228 = vmatpush1.bf16.msra.mxu0 %v6991
    %7229 = vmatprep.subr.bf16.mxu0 %v6986
    %7230 = vmatpush1.bf16.msra.mxu0 %v6985
    %7231 = vmatprep.subr.bf16.mxu0 %v6980
    %7232 = vmatpush1.bf16.msra.mxu0 %v6979
    %7233 = vmatprep.subr.bf16.mxu0 %v6974
    %7234 = vmatpush1.bf16.msra.mxu0 %v6973
    %7235 = vmatprep.subr.bf16.mxu0 %v6968
    %7236 = vmatpush1.bf16.msra.mxu0 %v6967
    %7237 = vmatprep.subr.bf16.mxu0 %v6962
    %7238 = vmatpush1.bf16.msra.mxu0 %v6961
    %7239 = vmatprep.subr.bf16.mxu0 %v6956
    %7240 = vmatpush1.bf16.msra.mxu0 %v6955
    %7241 = vmatprep.subr.bf16.mxu0 %v7046
    %7242 = vmatpush2.bf16.msra.mxu0 %v7045
    %7243 = vmatprep.subr.bf16.mxu0 %v7040
    %7244 = vmatpush2.bf16.msra.mxu0 %v7039
    %7245 = vmatprep.subr.bf16.mxu0 %v7034
    %7246 = vmatpush2.bf16.msra.mxu0 %v7033
    %7247 = vmatprep.subr.bf16.mxu0 %v7028
    %7248 = vmatpush2.bf16.msra.mxu0 %v7027
    %7249 = vmatprep.subr.bf16.mxu0 %v7022
    %7250 = vmatpush2.bf16.msra.mxu0 %v7021
    %7251 = vmatprep.subr.bf16.mxu0 %v7016
    %7252 = vmatpush2.bf16.msra.mxu0 %v7015
    %7253 = vmatprep.subr.bf16.mxu0 %v7010
    %7254 = vmatpush2.bf16.msra.mxu0 %v7009
    %7255 = vmatprep.subr.bf16.mxu0 %v7004
    %7256 = vmatpush2.bf16.msra.mxu0 %v7003
    %7257 = vmatprep.mubr.bf16.mxu0 %v6660
    %7258 = vmatmul.mubr.bf16.gmra.mxu0 %v6659
    %v7259 = vpop.f32.mrf.mxu0
    %v7260 = vadd.f32 0.0, %v7259
    %v7261 = vpop.f32.mrf.mxu0
    %v7262 = vadd.f32 0.0, %v7261
    %v7263 = vpop.f32.mrf.mxu0
    %v7264 = vpop.f32.mrf.mxu0
    %7265 = vdwg.mxu0
    %v7270 = vrot.slane %v7178, 1
    %v7271 = vrot.slane %v7180, 1
    %v7272 = vrot.slane %v7219, 1
    %v7273 = vrot.slane %v7221, 1
    %v7278 = vadd.f32 %v904, %v7270
    %v7279 = vadd.f32 %v906, %v7271
    %v7280 = vadd.f32 %v945, %v7272
    %v7281 = vadd.f32 %v947, %v7273
    %v7282 = vxor.u32 %v7278, 2147483648
    %v7283 = vxor.u32 %v7279, 2147483648
    %v7284 = vxor.u32 %v7280, 2147483648
    %v7285 = vxor.u32 %v7281, 2147483648
    %v7286 = vmul.f32 %v7282, 1.442695
    %v7287 = vpow.pop %v7286
    %v7288 = vmul.f32 %v7283, 1.442695
    %v7289 = vpow.pop %v7288
    %v7290 = vmul.f32 %v7284, 1.442695
    %v7291 = vpow.pop %v7290
    %v7292 = vmul.f32 %v7285, 1.442695
    %v7293 = vpow.pop %v7292
    %v7294 = vadd.f32 %v7287, 1.0
    %v7295 = vadd.f32 %v7289, 1.0
    %v7296 = vadd.f32 %v7291, 1.0
    %v7297 = vadd.f32 %v7293, 1.0
    %v7298 = vrcp.pop %v7294
    %v7299 = vmul.f32 1.0, %v7298
    %v7300 = vrcp.pop %v7295
    %v7301 = vmul.f32 1.0, %v7300
    %v7302 = vrcp.pop %v7296
    %v7303 = vmul.f32 1.0, %v7302
    %v7304 = vrcp.pop %v7297
    %v7305 = vmul.f32 1.0, %v7304
    %v7306 = vadd.f32 %v7260, %v1738
    %v7307 = vadd.f32 %v7262, %v1742
    %v7310 = vrot.slane %v7306, 1
    %v7311 = vrot.slane %v7307, 1
    %v7314 = vmul.f32 %v7299, %v7310
    %v7315 = vmul.f32 %v7301, %v7311
    %v7316 = vadd.f32 %v986, %v7314
    %v7317 = vadd.f32 %v988, %v7315
    %v7318 = vtanh.pop %v7316
    %v7319 = vtanh.pop %v7317
    %v7320 = vsub.f32 1.0, %v7303
    %v7321 = vsub.f32 1.0, %v7305
    %v7322 = vmul.f32 %v7320, %v7318
    %v7323 = vmul.f32 %v7321, %v7319
    %v7324 = vrot.slane %v6535, 7
    %v7325 = vrot.slane %v6536, 7
    %v7328 = vmul.f32 %v7303, %v7324
    %v7329 = vmul.f32 %v7305, %v7325
    %v7330 = vadd.f32 %v7322, %v7328
    %v7331 = vadd.f32 %v7323, %v7329
    %v7334 = vcombine.high %v7330, %v7331
    %v7336 = vunpack.c.l.s4 1966171168
    %v7337 = vunpack.c.0.s8 %v7336
    %v7338 = vlaneseq
    %v7339 = vshrl.u32 %v7338, 7
    %v7340 = vsub.s32 %v7337, %v7339
    %v7341 = vrot.slane %v7334, %v7340
    %v7342 = vcombine.high %v7341, %v7341
    %v7344 = vunpack.c.l.s4 1966171168
    %v7345 = vunpack.c.0.s8 %v7344
    %v7346 = vlaneseq
    %v7347 = vshrl.u32 %v7346, 7
    %v7348 = vsub.s32 %v7345, %v7347
    %v7349 = vrot.slane %v7342, %v7348
    %v7350 = vcombine.high %v7349, %v7349
    %s7352 = scalar_lea.vmem [#allocation10], 7
    %7353 = vst.msk [vmem:[%s7352] ss:$8 sm:$0x3] %vm1782, %v7350
    %7354 = vst.msk [vmem:[%s7352] ss:$8 sm:$0x0] %vm1782, %v7350
    // Predicated region
    $region38: #{tpu_custom_call.1} parent=1 // pred_check
      _
    $region39: #{tpu_custom_call.1} parent=1 // pred_check_branch
      %7356 = sbr.rel (0) target = $region41
    $region40: #{tpu_custom_call.1} parent=1 // pred_region
      %s7358 = ssub.s32 256, 256
      %7359 = vsyncadd [#allocation6], %s7358
      %s7361 = sshll.u32 [#allocation10], 4
      %s7362 = int_to_ptr.vmem [resolvable:$true] %s7361
      %7364 = dma.vmem_to_hbm [thread:$0]  %s7362, 256, %s7, [#allocation6]
    $region41: #{tpu_custom_call.1} parent=1 // pred_fallthru
      _
    // Predicated region
    $region42: #{tpu_custom_call.1} parent=1 // pred_check
      _
    $region43: #{tpu_custom_call.1} parent=1 // pred_check_branch
      %7366 = sbr.rel (0) target = $region45
    $region44: #{tpu_custom_call.1} parent=1 // pred_region
      %7367 = dma.done [#allocation6], 256
    $region45: #{tpu_custom_call.1} parent=1 // pred_fallthru
      _
    %7368 = vsyncpa [#allocation5], 1
    %7369 = vsyncpa [#allocation8], 1
    %7370 = vsyncpa [#allocation6], 1

</llo_original>
